<compile_context>
chip_gen: v6e
topology: v6e:2x2x1
jax: 0.10.0
libtpu: 0.0.40
codegen_flags: <defaults>
</compile_context>

<pallas_src>
import jax
import jax.numpy as jnp
from jax.experimental import pallas as pl
from jax.experimental.pallas import tpu as pltpu


def _linear_t_kernel(x_ref, w_ref, b_ref, o_ref):
    # x_ref: VMEM (K, S)    f32 — x1[0]
    # w_ref: VMEM (O, K)    f32 — PyTorch Linear weight, as stored
    # b_ref: VMEM (O, 1)    f32 — bias as a column
    # o_ref: VMEM (1, O, S) f32 — final x2 layout, written directly
    K, _ = x_ref.shape
    # Bias folded into the accumulator init; each term is a broadcast
    # (O, 1) * (1, S) VPU FMA — no MXU, no in-kernel transpose, no concat.
    acc = b_ref[...] + w_ref[:, 0:1] * x_ref[0:1, :]
    for k in range(1, K):                      # K == 4, fully unrolled
        acc = acc + w_ref[:, k:k + 1] * x_ref[k:k + 1, :]
    o_ref[0] = acc.astype(o_ref.dtype)


@jax.jit
def model_forward(x1, weight, bias):
    """x1: (1, K, S), weight: (O, K), bias: (O,) -> (1, O, S) (PyTorch x2)."""
    B, K, S = x1.shape
    O = weight.shape[0]
    if B != 1:
        # Module spec fixes batch == 1; a batch axis would become a
        # "parallel" grid axis (useful on v7x megacore) only when B >= 2.
        raise NotImplementedError("module spec fixes batch == 1")

    vmem = pl.BlockSpec(memory_space=pltpu.MemorySpace.VMEM)
    return pl.pallas_call(
        _linear_t_kernel,
        out_shape=jax.ShapeDtypeStruct((B, O, S), x1.dtype),
        in_specs=[vmem, vmem, vmem],
        out_specs=vmem,
    )(x1.reshape(K, S), weight, bias.reshape(O, 1))


if __name__ == "__main__":
    key = jax.random.PRNGKey(0)
    k_x, k_w, k_b = jax.random.split(key, 3)

    B, K, S, O = 1, 4, 2, 1025          # x1 = randn(1, 4, 2), Linear(4, 1025)

    x1 = jax.random.normal(k_x, (B, K, S), dtype=jnp.float32)

    # Deterministic parameter init (PyTorch Linear default: U(-1/sqrt(K), 1/sqrt(K)))
    bound = 1.0 / (K ** 0.5)
    weight = jax.random.uniform(k_w, (O, K), jnp.float32, -bound, bound)
    bias = jax.random.uniform(k_b, (O,), jnp.float32, -bound, bound)

    out = jax.block_until_ready(model_forward(x1, weight, bias))

    # Pure-JAX reference of the PyTorch forward (the returned x2)
    ref = jnp.einsum("ok,bks->bos", weight, x1) + bias[None, :, None]

    assert out.shape == (B, O, S), out.shape
    assert jnp.allclose(out, ref, atol=1e-5, rtol=1e-5), "mismatch vs reference"
    print("KERNEL_OK")
</pallas_src>

<mosaic_0001>
module attributes {stable_mosaic.version = 11 : i64} {
  func.func @_linear_t_kernel(%arg0: memref<4x2xf32, #tpu.memory_space<vmem>>, %arg1: memref<1025x4xf32, #tpu.memory_space<vmem>>, %arg2: memref<1025x1xf32, #tpu.memory_space<vmem>>, %arg3: memref<1x1025x2xf32, #tpu.memory_space<vmem>>) attributes {dimension_semantics = [], scalar_prefetch = 0 : i64, scratch_operands = 0 : i64, tpu.core_type = #tpu.core_type<tc>} {
    %c0 = arith.constant 0 : index
    %c0_0 = arith.constant 0 : index
    %0 = vector.load %arg2[%c0, %c0_0] : memref<1025x1xf32, #tpu.memory_space<vmem>>, vector<1025x1xf32>
    %c0_1 = arith.constant 0 : index
    %c0_2 = arith.constant 0 : index
    %1 = vector.load %arg1[%c0_1, %c0_2] : memref<1025x4xf32, #tpu.memory_space<vmem>>, vector<1025x1xf32>
    %c0_3 = arith.constant 0 : index
    %c0_4 = arith.constant 0 : index
    %2 = vector.load %arg0[%c0_3, %c0_4] : memref<4x2xf32, #tpu.memory_space<vmem>>, vector<1x2xf32>
    %3 = vector.broadcast %1 : vector<1025x1xf32> to vector<1025x2xf32>
    %4 = vector.broadcast %2 : vector<1x2xf32> to vector<1025x2xf32>
    %5 = arith.mulf %3, %4 : vector<1025x2xf32>
    %6 = vector.broadcast %0 : vector<1025x1xf32> to vector<1025x2xf32>
    %7 = arith.addf %6, %5 : vector<1025x2xf32>
    %c0_5 = arith.constant 0 : index
    %c1 = arith.constant 1 : index
    %8 = vector.load %arg1[%c0_5, %c1] : memref<1025x4xf32, #tpu.memory_space<vmem>>, vector<1025x1xf32>
    %c1_6 = arith.constant 1 : index
    %c0_7 = arith.constant 0 : index
    %9 = vector.load %arg0[%c1_6, %c0_7] : memref<4x2xf32, #tpu.memory_space<vmem>>, vector<1x2xf32>
    %10 = vector.broadcast %8 : vector<1025x1xf32> to vector<1025x2xf32>
    %11 = vector.broadcast %9 : vector<1x2xf32> to vector<1025x2xf32>
    %12 = arith.mulf %10, %11 : vector<1025x2xf32>
    %13 = arith.addf %7, %12 : vector<1025x2xf32>
    %c0_8 = arith.constant 0 : index
    %c2 = arith.constant 2 : index
    %14 = vector.load %arg1[%c0_8, %c2] : memref<1025x4xf32, #tpu.memory_space<vmem>>, vector<1025x1xf32>
    %c2_9 = arith.constant 2 : index
    %c0_10 = arith.constant 0 : index
    %15 = vector.load %arg0[%c2_9, %c0_10] : memref<4x2xf32, #tpu.memory_space<vmem>>, vector<1x2xf32>
    %16 = vector.broadcast %14 : vector<1025x1xf32> to vector<1025x2xf32>
    %17 = vector.broadcast %15 : vector<1x2xf32> to vector<1025x2xf32>
    %18 = arith.mulf %16, %17 : vector<1025x2xf32>
    %19 = arith.addf %13, %18 : vector<1025x2xf32>
    %c0_11 = arith.constant 0 : index
    %c3 = arith.constant 3 : index
    %20 = vector.load %arg1[%c0_11, %c3] : memref<1025x4xf32, #tpu.memory_space<vmem>>, vector<1025x1xf32>
    %c3_12 = arith.constant 3 : index
    %c0_13 = arith.constant 0 : index
    %21 = vector.load %arg0[%c3_12, %c0_13] : memref<4x2xf32, #tpu.memory_space<vmem>>, vector<1x2xf32>
    %22 = vector.broadcast %20 : vector<1025x1xf32> to vector<1025x2xf32>
    %23 = vector.broadcast %21 : vector<1x2xf32> to vector<1025x2xf32>
    %24 = arith.mulf %22, %23 : vector<1025x2xf32>
    %25 = arith.addf %19, %24 : vector<1025x2xf32>
    %c0_14 = arith.constant 0 : index
    %c0_15 = arith.constant 0 : index
    %c0_16 = arith.constant 0 : index
    %26 = vector.load %arg3[%c0_14, %c0_15, %c0_16] : memref<1x1025x2xf32, #tpu.memory_space<vmem>>, vector<1x1025x2xf32>
    %27 = vector.shape_cast %26 : vector<1x1025x2xf32> to vector<1025x2xf32>
    %28 = vector.shape_cast %25 : vector<1025x2xf32> to vector<1x1025x2xf32>
    tpu.vector_store %arg3[%c0_14, %c0_15, %c0_16], %28 {strides = array<i32>} : memref<1x1025x2xf32, #tpu.memory_space<vmem>>, vector<1x1025x2xf32>,
    return
  }
}

</mosaic_0001>

<llo_original>
// kernel: model_forward.1
$region0: #{model_forward.1}
  #allocation0 [shape = 'u32[]', space=smem, size = 0x4, offset = 0x4, fixed_abs, tag = 'smem constant byte address 0x4 - core index']
  #allocation1 [shape = 'u32[144,128]{1,0:T(1,128)}', space=vmem, size = 0x12000, scoped, tag = 'internal scratch']
  %s0 = inlined_call_operand.vmem [shape: f32[4,2], index: 0, kind: input, shape index: {}]
  %s1 = inlined_call_operand.vmem [shape: f32[1025,4], index: 1, kind: input, shape index: {}]
  %s2 = inlined_call_operand.vmem [shape: f32[1025,1], index: 2, kind: input, shape index: {}]
  %s3 = inlined_call_operand.vmem [shape: f32[1,1025,2], index: 3, kind: output, shape index: {}]
  %s4 = sld [smem:[#allocation0]]
  $region22: #{model_forward.1} parent=0
    _
  %s6 = ssub.s32 1, %s4
  %s7 = scalar_select 0, %s6, %s4
  // Predicated region
  $region2: #{model_forward.1} parent=0 // pred_check
    _
  $region3: #{model_forward.1} parent=0 // pred_check_branch
    %9 = sbr.rel (0) target = $region5
  $region4: #{model_forward.1} parent=0 // pred_region
    _
  $region5: #{model_forward.1} parent=0 // pred_fallthru
    _
  // Predicated region
  $region6: #{model_forward.1} parent=0 // pred_check
    _
  $region7: #{model_forward.1} parent=0 // pred_check_branch
    %11 = sbr.rel (0) target = $region9
  $region8: #{model_forward.1} parent=0 // pred_region
    _
  $region9: #{model_forward.1} parent=0 // pred_fallthru
    _
  // Predicated region
  $region10: #{model_forward.1} parent=0 // pred_check
    _
  $region11: #{model_forward.1} parent=0 // pred_check_branch
    %13 = sbr.rel (0) target = $region13
  $region12: #{model_forward.1} parent=0 // pred_region
    _
  $region13: #{model_forward.1} parent=0 // pred_fallthru
    _
  %v14 = vld [vmem:[%s2] sm:$0xff]
  %v15 = vld [vmem:[%s2 + $0x8] sm:$0xff]
  %v16 = vld [vmem:[%s2 + $0x10] sm:$0xff]
  %v17 = vld [vmem:[%s2 + $0x18] sm:$0xff]
  %v18 = vld [vmem:[%s2 + $0x20] sm:$0xff]
  %v19 = vld [vmem:[%s2 + $0x28] sm:$0xff]
  %v20 = vld [vmem:[%s2 + $0x30] sm:$0xff]
  %v21 = vld [vmem:[%s2 + $0x38] sm:$0xff]
  %v22 = vld [vmem:[%s2 + $0x40] sm:$0xff]
  %v23 = vld [vmem:[%s2 + $0x48] sm:$0xff]
  %v24 = vld [vmem:[%s2 + $0x50] sm:$0xff]
  %v25 = vld [vmem:[%s2 + $0x58] sm:$0xff]
  %v26 = vld [vmem:[%s2 + $0x60] sm:$0xff]
  %v27 = vld [vmem:[%s2 + $0x68] sm:$0xff]
  %v28 = vld [vmem:[%s2 + $0x70] sm:$0xff]
  %v29 = vld [vmem:[%s2 + $0x78] sm:$0xff]
  %v30 = vld [vmem:[%s2 + $0x80] sm:$0xff]
  %v31 = vld [vmem:[%s2 + $0x88] sm:$0xff]
  %v32 = vld [vmem:[%s2 + $0x90] sm:$0xff]
  %v33 = vld [vmem:[%s2 + $0x98] sm:$0xff]
  %v34 = vld [vmem:[%s2 + $0xa0] sm:$0xff]
  %v35 = vld [vmem:[%s2 + $0xa8] sm:$0xff]
  %v36 = vld [vmem:[%s2 + $0xb0] sm:$0xff]
  %v37 = vld [vmem:[%s2 + $0xb8] sm:$0xff]
  %v38 = vld [vmem:[%s2 + $0xc0] sm:$0xff]
  %v39 = vld [vmem:[%s2 + $0xc8] sm:$0xff]
  %v40 = vld [vmem:[%s2 + $0xd0] sm:$0xff]
  %v41 = vld [vmem:[%s2 + $0xd8] sm:$0xff]
  %v42 = vld [vmem:[%s2 + $0xe0] sm:$0xff]
  %v43 = vld [vmem:[%s2 + $0xe8] sm:$0xff]
  %v44 = vld [vmem:[%s2 + $0xf0] sm:$0xff]
  %v45 = vld [vmem:[%s2 + $0xf8] sm:$0xff]
  %v46 = vld [vmem:[%s2 + $0x100] sm:$0xff]
  %v47 = vld [vmem:[%s2 + $0x108] sm:$0xff]
  %v48 = vld [vmem:[%s2 + $0x110] sm:$0xff]
  %v49 = vld [vmem:[%s2 + $0x118] sm:$0xff]
  %v50 = vld [vmem:[%s2 + $0x120] sm:$0xff]
  %v51 = vld [vmem:[%s2 + $0x128] sm:$0xff]
  %v52 = vld [vmem:[%s2 + $0x130] sm:$0xff]
  %v53 = vld [vmem:[%s2 + $0x138] sm:$0xff]
  %v54 = vld [vmem:[%s2 + $0x140] sm:$0xff]
  %v55 = vld [vmem:[%s2 + $0x148] sm:$0xff]
  %v56 = vld [vmem:[%s2 + $0x150] sm:$0xff]
  %v57 = vld [vmem:[%s2 + $0x158] sm:$0xff]
  %v58 = vld [vmem:[%s2 + $0x160] sm:$0xff]
  %v59 = vld [vmem:[%s2 + $0x168] sm:$0xff]
  %v60 = vld [vmem:[%s2 + $0x170] sm:$0xff]
  %v61 = vld [vmem:[%s2 + $0x178] sm:$0xff]
  %v62 = vld [vmem:[%s2 + $0x180] sm:$0xff]
  %v63 = vld [vmem:[%s2 + $0x188] sm:$0xff]
  %v64 = vld [vmem:[%s2 + $0x190] sm:$0xff]
  %v65 = vld [vmem:[%s2 + $0x198] sm:$0xff]
  %v66 = vld [vmem:[%s2 + $0x1a0] sm:$0xff]
  %v67 = vld [vmem:[%s2 + $0x1a8] sm:$0xff]
  %v68 = vld [vmem:[%s2 + $0x1b0] sm:$0xff]
  %v69 = vld [vmem:[%s2 + $0x1b8] sm:$0xff]
  %v70 = vld [vmem:[%s2 + $0x1c0] sm:$0xff]
  %v71 = vld [vmem:[%s2 + $0x1c8] sm:$0xff]
  %v72 = vld [vmem:[%s2 + $0x1d0] sm:$0xff]
  %v73 = vld [vmem:[%s2 + $0x1d8] sm:$0xff]
  %v74 = vld [vmem:[%s2 + $0x1e0] sm:$0xff]
  %v75 = vld [vmem:[%s2 + $0x1e8] sm:$0xff]
  %v76 = vld [vmem:[%s2 + $0x1f0] sm:$0xff]
  %v77 = vld [vmem:[%s2 + $0x1f8] sm:$0xff]
  %v78 = vld [vmem:[%s2 + $0x200] sm:$0xff]
  %v79 = vld [vmem:[%s2 + $0x208] sm:$0xff]
  %v80 = vld [vmem:[%s2 + $0x210] sm:$0xff]
  %v81 = vld [vmem:[%s2 + $0x218] sm:$0xff]
  %v82 = vld [vmem:[%s2 + $0x220] sm:$0xff]
  %v83 = vld [vmem:[%s2 + $0x228] sm:$0xff]
  %v84 = vld [vmem:[%s2 + $0x230] sm:$0xff]
  %v85 = vld [vmem:[%s2 + $0x238] sm:$0xff]
  %v86 = vld [vmem:[%s2 + $0x240] sm:$0xff]
  %v87 = vld [vmem:[%s2 + $0x248] sm:$0xff]
  %v88 = vld [vmem:[%s2 + $0x250] sm:$0xff]
  %v89 = vld [vmem:[%s2 + $0x258] sm:$0xff]
  %v90 = vld [vmem:[%s2 + $0x260] sm:$0xff]
  %v91 = vld [vmem:[%s2 + $0x268] sm:$0xff]
  %v92 = vld [vmem:[%s2 + $0x270] sm:$0xff]
  %v93 = vld [vmem:[%s2 + $0x278] sm:$0xff]
  %v94 = vld [vmem:[%s2 + $0x280] sm:$0xff]
  %v95 = vld [vmem:[%s2 + $0x288] sm:$0xff]
  %v96 = vld [vmem:[%s2 + $0x290] sm:$0xff]
  %v97 = vld [vmem:[%s2 + $0x298] sm:$0xff]
  %v98 = vld [vmem:[%s2 + $0x2a0] sm:$0xff]
  %v99 = vld [vmem:[%s2 + $0x2a8] sm:$0xff]
  %v100 = vld [vmem:[%s2 + $0x2b0] sm:$0xff]
  %v101 = vld [vmem:[%s2 + $0x2b8] sm:$0xff]
  %v102 = vld [vmem:[%s2 + $0x2c0] sm:$0xff]
  %v103 = vld [vmem:[%s2 + $0x2c8] sm:$0xff]
  %v104 = vld [vmem:[%s2 + $0x2d0] sm:$0xff]
  %v105 = vld [vmem:[%s2 + $0x2d8] sm:$0xff]
  %v106 = vld [vmem:[%s2 + $0x2e0] sm:$0xff]
  %v107 = vld [vmem:[%s2 + $0x2e8] sm:$0xff]
  %v108 = vld [vmem:[%s2 + $0x2f0] sm:$0xff]
  %v109 = vld [vmem:[%s2 + $0x2f8] sm:$0xff]
  %v110 = vld [vmem:[%s2 + $0x300] sm:$0xff]
  %v111 = vld [vmem:[%s2 + $0x308] sm:$0xff]
  %v112 = vld [vmem:[%s2 + $0x310] sm:$0xff]
  %v113 = vld [vmem:[%s2 + $0x318] sm:$0xff]
  %v114 = vld [vmem:[%s2 + $0x320] sm:$0xff]
  %v115 = vld [vmem:[%s2 + $0x328] sm:$0xff]
  %v116 = vld [vmem:[%s2 + $0x330] sm:$0xff]
  %v117 = vld [vmem:[%s2 + $0x338] sm:$0xff]
  %v118 = vld [vmem:[%s2 + $0x340] sm:$0xff]
  %v119 = vld [vmem:[%s2 + $0x348] sm:$0xff]
  %v120 = vld [vmem:[%s2 + $0x350] sm:$0xff]
  %v121 = vld [vmem:[%s2 + $0x358] sm:$0xff]
  %v122 = vld [vmem:[%s2 + $0x360] sm:$0xff]
  %v123 = vld [vmem:[%s2 + $0x368] sm:$0xff]
  %v124 = vld [vmem:[%s2 + $0x370] sm:$0xff]
  %v125 = vld [vmem:[%s2 + $0x378] sm:$0xff]
  %v126 = vld [vmem:[%s2 + $0x380] sm:$0xff]
  %v127 = vld [vmem:[%s2 + $0x388] sm:$0xff]
  %v128 = vld [vmem:[%s2 + $0x390] sm:$0xff]
  %v129 = vld [vmem:[%s2 + $0x398] sm:$0xff]
  %v130 = vld [vmem:[%s2 + $0x3a0] sm:$0xff]
  %v131 = vld [vmem:[%s2 + $0x3a8] sm:$0xff]
  %v132 = vld [vmem:[%s2 + $0x3b0] sm:$0xff]
  %v133 = vld [vmem:[%s2 + $0x3b8] sm:$0xff]
  %v134 = vld [vmem:[%s2 + $0x3c0] sm:$0xff]
  %v135 = vld [vmem:[%s2 + $0x3c8] sm:$0xff]
  %v136 = vld [vmem:[%s2 + $0x3d0] sm:$0xff]
  %v137 = vld [vmem:[%s2 + $0x3d8] sm:$0xff]
  %v138 = vld [vmem:[%s2 + $0x3e0] sm:$0xff]
  %v139 = vld [vmem:[%s2 + $0x3e8] sm:$0xff]
  %v140 = vld [vmem:[%s2 + $0x3f0] sm:$0xff]
  %v141 = vld [vmem:[%s2 + $0x3f8] sm:$0xff]
  %v142 = vld [vmem:[%s2 + $0x400] sm:$0x1]
  %v143 = vld [vmem:[%s1] sm:$0xff]
  %v144 = vld [vmem:[%s1 + $0x8] sm:$0xff]
  %v145 = vld [vmem:[%s1 + $0x10] sm:$0xff]
  %v146 = vld [vmem:[%s1 + $0x18] sm:$0xff]
  %v147 = vld [vmem:[%s1 + $0x20] sm:$0xff]
  %v148 = vld [vmem:[%s1 + $0x28] sm:$0xff]
  %v149 = vld [vmem:[%s1 + $0x30] sm:$0xff]
  %v150 = vld [vmem:[%s1 + $0x38] sm:$0xff]
  %v151 = vld [vmem:[%s1 + $0x40] sm:$0xff]
  %v152 = vld [vmem:[%s1 + $0x48] sm:$0xff]
  %v153 = vld [vmem:[%s1 + $0x50] sm:$0xff]
  %v154 = vld [vmem:[%s1 + $0x58] sm:$0xff]
  %v155 = vld [vmem:[%s1 + $0x60] sm:$0xff]
  %v156 = vld [vmem:[%s1 + $0x68] sm:$0xff]
  %v157 = vld [vmem:[%s1 + $0x70] sm:$0xff]
  %v158 = vld [vmem:[%s1 + $0x78] sm:$0xff]
  %v159 = vld [vmem:[%s1 + $0x80] sm:$0xff]
  %v160 = vld [vmem:[%s1 + $0x88] sm:$0xff]
  %v161 = vld [vmem:[%s1 + $0x90] sm:$0xff]
  %v162 = vld [vmem:[%s1 + $0x98] sm:$0xff]
  %v163 = vld [vmem:[%s1 + $0xa0] sm:$0xff]
  %v164 = vld [vmem:[%s1 + $0xa8] sm:$0xff]
  %v165 = vld [vmem:[%s1 + $0xb0] sm:$0xff]
  %v166 = vld [vmem:[%s1 + $0xb8] sm:$0xff]
  %v167 = vld [vmem:[%s1 + $0xc0] sm:$0xff]
  %v168 = vld [vmem:[%s1 + $0xc8] sm:$0xff]
  %v169 = vld [vmem:[%s1 + $0xd0] sm:$0xff]
  %v170 = vld [vmem:[%s1 + $0xd8] sm:$0xff]
  %v171 = vld [vmem:[%s1 + $0xe0] sm:$0xff]
  %v172 = vld [vmem:[%s1 + $0xe8] sm:$0xff]
  %v173 = vld [vmem:[%s1 + $0xf0] sm:$0xff]
  %v174 = vld [vmem:[%s1 + $0xf8] sm:$0xff]
  %v175 = vld [vmem:[%s1 + $0x100] sm:$0xff]
  %v176 = vld [vmem:[%s1 + $0x108] sm:$0xff]
  %v177 = vld [vmem:[%s1 + $0x110] sm:$0xff]
  %v178 = vld [vmem:[%s1 + $0x118] sm:$0xff]
  %v179 = vld [vmem:[%s1 + $0x120] sm:$0xff]
  %v180 = vld [vmem:[%s1 + $0x128] sm:$0xff]
  %v181 = vld [vmem:[%s1 + $0x130] sm:$0xff]
  %v182 = vld [vmem:[%s1 + $0x138] sm:$0xff]
  %v183 = vld [vmem:[%s1 + $0x140] sm:$0xff]
  %v184 = vld [vmem:[%s1 + $0x148] sm:$0xff]
  %v185 = vld [vmem:[%s1 + $0x150] sm:$0xff]
  %v186 = vld [vmem:[%s1 + $0x158] sm:$0xff]
  %v187 = vld [vmem:[%s1 + $0x160] sm:$0xff]
  %v188 = vld [vmem:[%s1 + $0x168] sm:$0xff]
  %v189 = vld [vmem:[%s1 + $0x170] sm:$0xff]
  %v190 = vld [vmem:[%s1 + $0x178] sm:$0xff]
  %v191 = vld [vmem:[%s1 + $0x180] sm:$0xff]
  %v192 = vld [vmem:[%s1 + $0x188] sm:$0xff]
  %v193 = vld [vmem:[%s1 + $0x190] sm:$0xff]
  %v194 = vld [vmem:[%s1 + $0x198] sm:$0xff]
  %v195 = vld [vmem:[%s1 + $0x1a0] sm:$0xff]
  %v196 = vld [vmem:[%s1 + $0x1a8] sm:$0xff]
  %v197 = vld [vmem:[%s1 + $0x1b0] sm:$0xff]
  %v198 = vld [vmem:[%s1 + $0x1b8] sm:$0xff]
  %v199 = vld [vmem:[%s1 + $0x1c0] sm:$0xff]
  %v200 = vld [vmem:[%s1 + $0x1c8] sm:$0xff]
  %v201 = vld [vmem:[%s1 + $0x1d0] sm:$0xff]
  %v202 = vld [vmem:[%s1 + $0x1d8] sm:$0xff]
  %v203 = vld [vmem:[%s1 + $0x1e0] sm:$0xff]
  %v204 = vld [vmem:[%s1 + $0x1e8] sm:$0xff]
  %v205 = vld [vmem:[%s1 + $0x1f0] sm:$0xff]
  %v206 = vld [vmem:[%s1 + $0x1f8] sm:$0xff]
  %v207 = vld [vmem:[%s1 + $0x200] sm:$0xff]
  %v208 = vld [vmem:[%s1 + $0x208] sm:$0xff]
  %v209 = vld [vmem:[%s1 + $0x210] sm:$0xff]
  %v210 = vld [vmem:[%s1 + $0x218] sm:$0xff]
  %v211 = vld [vmem:[%s1 + $0x220] sm:$0xff]
  %v212 = vld [vmem:[%s1 + $0x228] sm:$0xff]
  %v213 = vld [vmem:[%s1 + $0x230] sm:$0xff]
  %v214 = vld [vmem:[%s1 + $0x238] sm:$0xff]
  %v215 = vld [vmem:[%s1 + $0x240] sm:$0xff]
  %v216 = vld [vmem:[%s1 + $0x248] sm:$0xff]
  %v217 = vld [vmem:[%s1 + $0x250] sm:$0xff]
  %v218 = vld [vmem:[%s1 + $0x258] sm:$0xff]
  %v219 = vld [vmem:[%s1 + $0x260] sm:$0xff]
  %v220 = vld [vmem:[%s1 + $0x268] sm:$0xff]
  %v221 = vld [vmem:[%s1 + $0x270] sm:$0xff]
  %v222 = vld [vmem:[%s1 + $0x278] sm:$0xff]
  %v223 = vld [vmem:[%s1 + $0x280] sm:$0xff]
  %v224 = vld [vmem:[%s1 + $0x288] sm:$0xff]
  %v225 = vld [vmem:[%s1 + $0x290] sm:$0xff]
  %v226 = vld [vmem:[%s1 + $0x298] sm:$0xff]
  %v227 = vld [vmem:[%s1 + $0x2a0] sm:$0xff]
  %v228 = vld [vmem:[%s1 + $0x2a8] sm:$0xff]
  %v229 = vld [vmem:[%s1 + $0x2b0] sm:$0xff]
  %v230 = vld [vmem:[%s1 + $0x2b8] sm:$0xff]
  %v231 = vld [vmem:[%s1 + $0x2c0] sm:$0xff]
  %v232 = vld [vmem:[%s1 + $0x2c8] sm:$0xff]
  %v233 = vld [vmem:[%s1 + $0x2d0] sm:$0xff]
  %v234 = vld [vmem:[%s1 + $0x2d8] sm:$0xff]
  %v235 = vld [vmem:[%s1 + $0x2e0] sm:$0xff]
  %v236 = vld [vmem:[%s1 + $0x2e8] sm:$0xff]
  %v237 = vld [vmem:[%s1 + $0x2f0] sm:$0xff]
  %v238 = vld [vmem:[%s1 + $0x2f8] sm:$0xff]
  %v239 = vld [vmem:[%s1 + $0x300] sm:$0xff]
  %v240 = vld [vmem:[%s1 + $0x308] sm:$0xff]
  %v241 = vld [vmem:[%s1 + $0x310] sm:$0xff]
  %v242 = vld [vmem:[%s1 + $0x318] sm:$0xff]
  %v243 = vld [vmem:[%s1 + $0x320] sm:$0xff]
  %v244 = vld [vmem:[%s1 + $0x328] sm:$0xff]
  %v245 = vld [vmem:[%s1 + $0x330] sm:$0xff]
  %v246 = vld [vmem:[%s1 + $0x338] sm:$0xff]
  %v247 = vld [vmem:[%s1 + $0x340] sm:$0xff]
  %v248 = vld [vmem:[%s1 + $0x348] sm:$0xff]
  %v249 = vld [vmem:[%s1 + $0x350] sm:$0xff]
  %v250 = vld [vmem:[%s1 + $0x358] sm:$0xff]
  %v251 = vld [vmem:[%s1 + $0x360] sm:$0xff]
  %v252 = vld [vmem:[%s1 + $0x368] sm:$0xff]
  %v253 = vld [vmem:[%s1 + $0x370] sm:$0xff]
  %v254 = vld [vmem:[%s1 + $0x378] sm:$0xff]
  %v255 = vld [vmem:[%s1 + $0x380] sm:$0xff]
  %v256 = vld [vmem:[%s1 + $0x388] sm:$0xff]
  %v257 = vld [vmem:[%s1 + $0x390] sm:$0xff]
  %v258 = vld [vmem:[%s1 + $0x398] sm:$0xff]
  %v259 = vld [vmem:[%s1 + $0x3a0] sm:$0xff]
  %v260 = vld [vmem:[%s1 + $0x3a8] sm:$0xff]
  %v261 = vld [vmem:[%s1 + $0x3b0] sm:$0xff]
  %v262 = vld [vmem:[%s1 + $0x3b8] sm:$0xff]
  %v263 = vld [vmem:[%s1 + $0x3c0] sm:$0xff]
  %v264 = vld [vmem:[%s1 + $0x3c8] sm:$0xff]
  %v265 = vld [vmem:[%s1 + $0x3d0] sm:$0xff]
  %v266 = vld [vmem:[%s1 + $0x3d8] sm:$0xff]
  %v267 = vld [vmem:[%s1 + $0x3e0] sm:$0xff]
  %v268 = vld [vmem:[%s1 + $0x3e8] sm:$0xff]
  %v269 = vld [vmem:[%s1 + $0x3f0] sm:$0xff]
  %v270 = vld [vmem:[%s1 + $0x3f8] sm:$0xff]
  %v271 = vld [vmem:[%s1 + $0x400] sm:$0x1]
  %v272 = vld [vmem:[%s0] sm:$0x1]
  %274 = vset.pattern.permute.xlu0 0
  %275 = vperm.xlu0 %274, %v143
  %v276 = vpop.permute.xlu0 %275
  %279 = vset.pattern.permute.xlu0 0
  %280 = vperm.xlu0 %279, %v144
  %v281 = vpop.permute.xlu0 %280
  %284 = vset.pattern.permute.xlu0 0
  %285 = vperm.xlu0 %284, %v145
  %v286 = vpop.permute.xlu0 %285
  %289 = vset.pattern.permute.xlu0 0
  %290 = vperm.xlu0 %289, %v146
  %v291 = vpop.permute.xlu0 %290
  %294 = vset.pattern.permute.xlu0 0
  %295 = vperm.xlu0 %294, %v147
  %v296 = vpop.permute.xlu0 %295
  %299 = vset.pattern.permute.xlu0 0
  %300 = vperm.xlu0 %299, %v148
  %v301 = vpop.permute.xlu0 %300
  %304 = vset.pattern.permute.xlu0 0
  %305 = vperm.xlu0 %304, %v149
  %v306 = vpop.permute.xlu0 %305
  %309 = vset.pattern.permute.xlu0 0
  %310 = vperm.xlu0 %309, %v150
  %v311 = vpop.permute.xlu0 %310
  %314 = vset.pattern.permute.xlu0 0
  %315 = vperm.xlu0 %314, %v151
  %v316 = vpop.permute.xlu0 %315
  %319 = vset.pattern.permute.xlu0 0
  %320 = vperm.xlu0 %319, %v152
  %v321 = vpop.permute.xlu0 %320
  %324 = vset.pattern.permute.xlu0 0
  %325 = vperm.xlu0 %324, %v153
  %v326 = vpop.permute.xlu0 %325
  %329 = vset.pattern.permute.xlu0 0
  %330 = vperm.xlu0 %329, %v154
  %v331 = vpop.permute.xlu0 %330
  %334 = vset.pattern.permute.xlu0 0
  %335 = vperm.xlu0 %334, %v155
  %v336 = vpop.permute.xlu0 %335
  %339 = vset.pattern.permute.xlu0 0
  %340 = vperm.xlu0 %339, %v156
  %v341 = vpop.permute.xlu0 %340
  %344 = vset.pattern.permute.xlu0 0
  %345 = vperm.xlu0 %344, %v157
  %v346 = vpop.permute.xlu0 %345
  %349 = vset.pattern.permute.xlu0 0
  %350 = vperm.xlu0 %349, %v158
  %v351 = vpop.permute.xlu0 %350
  %354 = vset.pattern.permute.xlu0 0
  %355 = vperm.xlu0 %354, %v159
  %v356 = vpop.permute.xlu0 %355
  %359 = vset.pattern.permute.xlu0 0
  %360 = vperm.xlu0 %359, %v160
  %v361 = vpop.permute.xlu0 %360
  %364 = vset.pattern.permute.xlu0 0
  %365 = vperm.xlu0 %364, %v161
  %v366 = vpop.permute.xlu0 %365
  %369 = vset.pattern.permute.xlu0 0
  %370 = vperm.xlu0 %369, %v162
  %v371 = vpop.permute.xlu0 %370
  %374 = vset.pattern.permute.xlu0 0
  %375 = vperm.xlu0 %374, %v163
  %v376 = vpop.permute.xlu0 %375
  %379 = vset.pattern.permute.xlu0 0
  %380 = vperm.xlu0 %379, %v164
  %v381 = vpop.permute.xlu0 %380
  %384 = vset.pattern.permute.xlu0 0
  %385 = vperm.xlu0 %384, %v165
  %v386 = vpop.permute.xlu0 %385
  %389 = vset.pattern.permute.xlu0 0
  %390 = vperm.xlu0 %389, %v166
  %v391 = vpop.permute.xlu0 %390
  %394 = vset.pattern.permute.xlu0 0
  %395 = vperm.xlu0 %394, %v167
  %v396 = vpop.permute.xlu0 %395
  %399 = vset.pattern.permute.xlu0 0
  %400 = vperm.xlu0 %399, %v168
  %v401 = vpop.permute.xlu0 %400
  %404 = vset.pattern.permute.xlu0 0
  %405 = vperm.xlu0 %404, %v169
  %v406 = vpop.permute.xlu0 %405
  %409 = vset.pattern.permute.xlu0 0
  %410 = vperm.xlu0 %409, %v170
  %v411 = vpop.permute.xlu0 %410
  %414 = vset.pattern.permute.xlu0 0
  %415 = vperm.xlu0 %414, %v171
  %v416 = vpop.permute.xlu0 %415
  %419 = vset.pattern.permute.xlu0 0
  %420 = vperm.xlu0 %419, %v172
  %v421 = vpop.permute.xlu0 %420
  %424 = vset.pattern.permute.xlu0 0
  %425 = vperm.xlu0 %424, %v173
  %v426 = vpop.permute.xlu0 %425
  %429 = vset.pattern.permute.xlu0 0
  %430 = vperm.xlu0 %429, %v174
  %v431 = vpop.permute.xlu0 %430
  %434 = vset.pattern.permute.xlu0 0
  %435 = vperm.xlu0 %434, %v175
  %v436 = vpop.permute.xlu0 %435
  %439 = vset.pattern.permute.xlu0 0
  %440 = vperm.xlu0 %439, %v176
  %v441 = vpop.permute.xlu0 %440
  %444 = vset.pattern.permute.xlu0 0
  %445 = vperm.xlu0 %444, %v177
  %v446 = vpop.permute.xlu0 %445
  %449 = vset.pattern.permute.xlu0 0
  %450 = vperm.xlu0 %449, %v178
  %v451 = vpop.permute.xlu0 %450
  %454 = vset.pattern.permute.xlu0 0
  %455 = vperm.xlu0 %454, %v179
  %v456 = vpop.permute.xlu0 %455
  %459 = vset.pattern.permute.xlu0 0
  %460 = vperm.xlu0 %459, %v180
  %v461 = vpop.permute.xlu0 %460
  %464 = vset.pattern.permute.xlu0 0
  %465 = vperm.xlu0 %464, %v181
  %v466 = vpop.permute.xlu0 %465
  %469 = vset.pattern.permute.xlu0 0
  %470 = vperm.xlu0 %469, %v182
  %v471 = vpop.permute.xlu0 %470
  %474 = vset.pattern.permute.xlu0 0
  %475 = vperm.xlu0 %474, %v183
  %v476 = vpop.permute.xlu0 %475
  %479 = vset.pattern.permute.xlu0 0
  %480 = vperm.xlu0 %479, %v184
  %v481 = vpop.permute.xlu0 %480
  %484 = vset.pattern.permute.xlu0 0
  %485 = vperm.xlu0 %484, %v185
  %v486 = vpop.permute.xlu0 %485
  %489 = vset.pattern.permute.xlu0 0
  %490 = vperm.xlu0 %489, %v186
  %v491 = vpop.permute.xlu0 %490
  %494 = vset.pattern.permute.xlu0 0
  %495 = vperm.xlu0 %494, %v187
  %v496 = vpop.permute.xlu0 %495
  %499 = vset.pattern.permute.xlu0 0
  %500 = vperm.xlu0 %499, %v188
  %v501 = vpop.permute.xlu0 %500
  %504 = vset.pattern.permute.xlu0 0
  %505 = vperm.xlu0 %504, %v189
  %v506 = vpop.permute.xlu0 %505
  %509 = vset.pattern.permute.xlu0 0
  %510 = vperm.xlu0 %509, %v190
  %v511 = vpop.permute.xlu0 %510
  %514 = vset.pattern.permute.xlu0 0
  %515 = vperm.xlu0 %514, %v191
  %v516 = vpop.permute.xlu0 %515
  %519 = vset.pattern.permute.xlu0 0
  %520 = vperm.xlu0 %519, %v192
  %v521 = vpop.permute.xlu0 %520
  %524 = vset.pattern.permute.xlu0 0
  %525 = vperm.xlu0 %524, %v193
  %v526 = vpop.permute.xlu0 %525
  %529 = vset.pattern.permute.xlu0 0
  %530 = vperm.xlu0 %529, %v194
  %v531 = vpop.permute.xlu0 %530
  %534 = vset.pattern.permute.xlu0 0
  %535 = vperm.xlu0 %534, %v195
  %v536 = vpop.permute.xlu0 %535
  %539 = vset.pattern.permute.xlu0 0
  %540 = vperm.xlu0 %539, %v196
  %v541 = vpop.permute.xlu0 %540
  %544 = vset.pattern.permute.xlu0 0
  %545 = vperm.xlu0 %544, %v197
  %v546 = vpop.permute.xlu0 %545
  %549 = vset.pattern.permute.xlu0 0
  %550 = vperm.xlu0 %549, %v198
  %v551 = vpop.permute.xlu0 %550
  %554 = vset.pattern.permute.xlu0 0
  %555 = vperm.xlu0 %554, %v199
  %v556 = vpop.permute.xlu0 %555
  %559 = vset.pattern.permute.xlu0 0
  %560 = vperm.xlu0 %559, %v200
  %v561 = vpop.permute.xlu0 %560
  %564 = vset.pattern.permute.xlu0 0
  %565 = vperm.xlu0 %564, %v201
  %v566 = vpop.permute.xlu0 %565
  %569 = vset.pattern.permute.xlu0 0
  %570 = vperm.xlu0 %569, %v202
  %v571 = vpop.permute.xlu0 %570
  %574 = vset.pattern.permute.xlu0 0
  %575 = vperm.xlu0 %574, %v203
  %v576 = vpop.permute.xlu0 %575
  %579 = vset.pattern.permute.xlu0 0
  %580 = vperm.xlu0 %579, %v204
  %v581 = vpop.permute.xlu0 %580
  %584 = vset.pattern.permute.xlu0 0
  %585 = vperm.xlu0 %584, %v205
  %v586 = vpop.permute.xlu0 %585
  %589 = vset.pattern.permute.xlu0 0
  %590 = vperm.xlu0 %589, %v206
  %v591 = vpop.permute.xlu0 %590
  %594 = vset.pattern.permute.xlu0 0
  %595 = vperm.xlu0 %594, %v207
  %v596 = vpop.permute.xlu0 %595
  %599 = vset.pattern.permute.xlu0 0
  %600 = vperm.xlu0 %599, %v208
  %v601 = vpop.permute.xlu0 %600
  %604 = vset.pattern.permute.xlu0 0
  %605 = vperm.xlu0 %604, %v209
  %v606 = vpop.permute.xlu0 %605
  %609 = vset.pattern.permute.xlu0 0
  %610 = vperm.xlu0 %609, %v210
  %v611 = vpop.permute.xlu0 %610
  %614 = vset.pattern.permute.xlu0 0
  %615 = vperm.xlu0 %614, %v211
  %v616 = vpop.permute.xlu0 %615
  %619 = vset.pattern.permute.xlu0 0
  %620 = vperm.xlu0 %619, %v212
  %v621 = vpop.permute.xlu0 %620
  %624 = vset.pattern.permute.xlu0 0
  %625 = vperm.xlu0 %624, %v213
  %v626 = vpop.permute.xlu0 %625
  %629 = vset.pattern.permute.xlu0 0
  %630 = vperm.xlu0 %629, %v214
  %v631 = vpop.permute.xlu0 %630
  %634 = vset.pattern.permute.xlu0 0
  %635 = vperm.xlu0 %634, %v215
  %v636 = vpop.permute.xlu0 %635
  %639 = vset.pattern.permute.xlu0 0
  %640 = vperm.xlu0 %639, %v216
  %v641 = vpop.permute.xlu0 %640
  %644 = vset.pattern.permute.xlu0 0
  %645 = vperm.xlu0 %644, %v217
  %v646 = vpop.permute.xlu0 %645
  %649 = vset.pattern.permute.xlu0 0
  %650 = vperm.xlu0 %649, %v218
  %v651 = vpop.permute.xlu0 %650
  %654 = vset.pattern.permute.xlu0 0
  %655 = vperm.xlu0 %654, %v219
  %v656 = vpop.permute.xlu0 %655
  %659 = vset.pattern.permute.xlu0 0
  %660 = vperm.xlu0 %659, %v220
  %v661 = vpop.permute.xlu0 %660
  %664 = vset.pattern.permute.xlu0 0
  %665 = vperm.xlu0 %664, %v221
  %v666 = vpop.permute.xlu0 %665
  %669 = vset.pattern.permute.xlu0 0
  %670 = vperm.xlu0 %669, %v222
  %v671 = vpop.permute.xlu0 %670
  %674 = vset.pattern.permute.xlu0 0
  %675 = vperm.xlu0 %674, %v223
  %v676 = vpop.permute.xlu0 %675
  %679 = vset.pattern.permute.xlu0 0
  %680 = vperm.xlu0 %679, %v224
  %v681 = vpop.permute.xlu0 %680
  %684 = vset.pattern.permute.xlu0 0
  %685 = vperm.xlu0 %684, %v225
  %v686 = vpop.permute.xlu0 %685
  %689 = vset.pattern.permute.xlu0 0
  %690 = vperm.xlu0 %689, %v226
  %v691 = vpop.permute.xlu0 %690
  %694 = vset.pattern.permute.xlu0 0
  %695 = vperm.xlu0 %694, %v227
  %v696 = vpop.permute.xlu0 %695
  %699 = vset.pattern.permute.xlu0 0
  %700 = vperm.xlu0 %699, %v228
  %v701 = vpop.permute.xlu0 %700
  %704 = vset.pattern.permute.xlu0 0
  %705 = vperm.xlu0 %704, %v229
  %v706 = vpop.permute.xlu0 %705
  %709 = vset.pattern.permute.xlu0 0
  %710 = vperm.xlu0 %709, %v230
  %v711 = vpop.permute.xlu0 %710
  %714 = vset.pattern.permute.xlu0 0
  %715 = vperm.xlu0 %714, %v231
  %v716 = vpop.permute.xlu0 %715
  %719 = vset.pattern.permute.xlu0 0
  %720 = vperm.xlu0 %719, %v232
  %v721 = vpop.permute.xlu0 %720
  %724 = vset.pattern.permute.xlu0 0
  %725 = vperm.xlu0 %724, %v233
  %v726 = vpop.permute.xlu0 %725
  %729 = vset.pattern.permute.xlu0 0
  %730 = vperm.xlu0 %729, %v234
  %v731 = vpop.permute.xlu0 %730
  %734 = vset.pattern.permute.xlu0 0
  %735 = vperm.xlu0 %734, %v235
  %v736 = vpop.permute.xlu0 %735
  %739 = vset.pattern.permute.xlu0 0
  %740 = vperm.xlu0 %739, %v236
  %v741 = vpop.permute.xlu0 %740
  %744 = vset.pattern.permute.xlu0 0
  %745 = vperm.xlu0 %744, %v237
  %v746 = vpop.permute.xlu0 %745
  %749 = vset.pattern.permute.xlu0 0
  %750 = vperm.xlu0 %749, %v238
  %v751 = vpop.permute.xlu0 %750
  %754 = vset.pattern.permute.xlu0 0
  %755 = vperm.xlu0 %754, %v239
  %v756 = vpop.permute.xlu0 %755
  %759 = vset.pattern.permute.xlu0 0
  %760 = vperm.xlu0 %759, %v240
  %v761 = vpop.permute.xlu0 %760
  %764 = vset.pattern.permute.xlu0 0
  %765 = vperm.xlu0 %764, %v241
  %v766 = vpop.permute.xlu0 %765
  %769 = vset.pattern.permute.xlu0 0
  %770 = vperm.xlu0 %769, %v242
  %v771 = vpop.permute.xlu0 %770
  %774 = vset.pattern.permute.xlu0 0
  %775 = vperm.xlu0 %774, %v243
  %v776 = vpop.permute.xlu0 %775
  %779 = vset.pattern.permute.xlu0 0
  %780 = vperm.xlu0 %779, %v244
  %v781 = vpop.permute.xlu0 %780
  %784 = vset.pattern.permute.xlu0 0
  %785 = vperm.xlu0 %784, %v245
  %v786 = vpop.permute.xlu0 %785
  %789 = vset.pattern.permute.xlu0 0
  %790 = vperm.xlu0 %789, %v246
  %v791 = vpop.permute.xlu0 %790
  %794 = vset.pattern.permute.xlu0 0
  %795 = vperm.xlu0 %794, %v247
  %v796 = vpop.permute.xlu0 %795
  %799 = vset.pattern.permute.xlu0 0
  %800 = vperm.xlu0 %799, %v248
  %v801 = vpop.permute.xlu0 %800
  %804 = vset.pattern.permute.xlu0 0
  %805 = vperm.xlu0 %804, %v249
  %v806 = vpop.permute.xlu0 %805
  %809 = vset.pattern.permute.xlu0 0
  %810 = vperm.xlu0 %809, %v250
  %v811 = vpop.permute.xlu0 %810
  %814 = vset.pattern.permute.xlu0 0
  %815 = vperm.xlu0 %814, %v251
  %v816 = vpop.permute.xlu0 %815
  %819 = vset.pattern.permute.xlu0 0
  %820 = vperm.xlu0 %819, %v252
  %v821 = vpop.permute.xlu0 %820
  %824 = vset.pattern.permute.xlu0 0
  %825 = vperm.xlu0 %824, %v253
  %v826 = vpop.permute.xlu0 %825
  %829 = vset.pattern.permute.xlu0 0
  %830 = vperm.xlu0 %829, %v254
  %v831 = vpop.permute.xlu0 %830
  %834 = vset.pattern.permute.xlu0 0
  %835 = vperm.xlu0 %834, %v255
  %v836 = vpop.permute.xlu0 %835
  %839 = vset.pattern.permute.xlu0 0
  %840 = vperm.xlu0 %839, %v256
  %v841 = vpop.permute.xlu0 %840
  %844 = vset.pattern.permute.xlu0 0
  %845 = vperm.xlu0 %844, %v257
  %v846 = vpop.permute.xlu0 %845
  %849 = vset.pattern.permute.xlu0 0
  %850 = vperm.xlu0 %849, %v258
  %v851 = vpop.permute.xlu0 %850
  %854 = vset.pattern.permute.xlu0 0
  %855 = vperm.xlu0 %854, %v259
  %v856 = vpop.permute.xlu0 %855
  %859 = vset.pattern.permute.xlu0 0
  %860 = vperm.xlu0 %859, %v260
  %v861 = vpop.permute.xlu0 %860
  %864 = vset.pattern.permute.xlu0 0
  %865 = vperm.xlu0 %864, %v261
  %v866 = vpop.permute.xlu0 %865
  %869 = vset.pattern.permute.xlu0 0
  %870 = vperm.xlu0 %869, %v262
  %v871 = vpop.permute.xlu0 %870
  %874 = vset.pattern.permute.xlu0 0
  %875 = vperm.xlu0 %874, %v263
  %v876 = vpop.permute.xlu0 %875
  %879 = vset.pattern.permute.xlu0 0
  %880 = vperm.xlu0 %879, %v264
  %v881 = vpop.permute.xlu0 %880
  %884 = vset.pattern.permute.xlu0 0
  %885 = vperm.xlu0 %884, %v265
  %v886 = vpop.permute.xlu0 %885
  %889 = vset.pattern.permute.xlu0 0
  %890 = vperm.xlu0 %889, %v266
  %v891 = vpop.permute.xlu0 %890
  %894 = vset.pattern.permute.xlu0 0
  %895 = vperm.xlu0 %894, %v267
  %v896 = vpop.permute.xlu0 %895
  %899 = vset.pattern.permute.xlu0 0
  %900 = vperm.xlu0 %899, %v268
  %v901 = vpop.permute.xlu0 %900
  %904 = vset.pattern.permute.xlu0 0
  %905 = vperm.xlu0 %904, %v269
  %v906 = vpop.permute.xlu0 %905
  %909 = vset.pattern.permute.xlu0 0
  %910 = vperm.xlu0 %909, %v270
  %v911 = vpop.permute.xlu0 %910
  %914 = vset.pattern.permute.xlu0 0
  %915 = vperm.xlu0 %914, %v271
  %v916 = vpop.permute.xlu0 %915
  %v918 = vlaneseq
  %v919 = vshrl.u32 %v918, 7
  %v920 = vsub.s32 0, %v919
  %v921 = vrot.slane %v272, %v920
  %v922 = vmul.f32 %v276, %v921
  %v923 = vmul.f32 %v281, %v921
  %v924 = vmul.f32 %v286, %v921
  %v925 = vmul.f32 %v291, %v921
  %v926 = vmul.f32 %v296, %v921
  %v927 = vmul.f32 %v301, %v921
  %v928 = vmul.f32 %v306, %v921
  %v929 = vmul.f32 %v311, %v921
  %v930 = vmul.f32 %v316, %v921
  %v931 = vmul.f32 %v321, %v921
  %v932 = vmul.f32 %v326, %v921
  %v933 = vmul.f32 %v331, %v921
  %v934 = vmul.f32 %v336, %v921
  %v935 = vmul.f32 %v341, %v921
  %v936 = vmul.f32 %v346, %v921
  %v937 = vmul.f32 %v351, %v921
  %v938 = vmul.f32 %v356, %v921
  %v939 = vmul.f32 %v361, %v921
  %v940 = vmul.f32 %v366, %v921
  %v941 = vmul.f32 %v371, %v921
  %v942 = vmul.f32 %v376, %v921
  %v943 = vmul.f32 %v381, %v921
  %v944 = vmul.f32 %v386, %v921
  %v945 = vmul.f32 %v391, %v921
  %v946 = vmul.f32 %v396, %v921
  %v947 = vmul.f32 %v401, %v921
  %v948 = vmul.f32 %v406, %v921
  %v949 = vmul.f32 %v411, %v921
  %v950 = vmul.f32 %v416, %v921
  %v951 = vmul.f32 %v421, %v921
  %v952 = vmul.f32 %v426, %v921
  %v953 = vmul.f32 %v431, %v921
  %v954 = vmul.f32 %v436, %v921
  %v955 = vmul.f32 %v441, %v921
  %v956 = vmul.f32 %v446, %v921
  %v957 = vmul.f32 %v451, %v921
  %v958 = vmul.f32 %v456, %v921
  %v959 = vmul.f32 %v461, %v921
  %v960 = vmul.f32 %v466, %v921
  %v961 = vmul.f32 %v471, %v921
  %v962 = vmul.f32 %v476, %v921
  %v963 = vmul.f32 %v481, %v921
  %v964 = vmul.f32 %v486, %v921
  %v965 = vmul.f32 %v491, %v921
  %v966 = vmul.f32 %v496, %v921
  %v967 = vmul.f32 %v501, %v921
  %v968 = vmul.f32 %v506, %v921
  %v969 = vmul.f32 %v511, %v921
  %v970 = vmul.f32 %v516, %v921
  %v971 = vmul.f32 %v521, %v921
  %v972 = vmul.f32 %v526, %v921
  %v973 = vmul.f32 %v531, %v921
  %v974 = vmul.f32 %v536, %v921
  %v975 = vmul.f32 %v541, %v921
  %v976 = vmul.f32 %v546, %v921
  %v977 = vmul.f32 %v551, %v921
  %v978 = vmul.f32 %v556, %v921
  %v979 = vmul.f32 %v561, %v921
  %v980 = vmul.f32 %v566, %v921
  %v981 = vmul.f32 %v571, %v921
  %v982 = vmul.f32 %v576, %v921
  %v983 = vmul.f32 %v581, %v921
  %v984 = vmul.f32 %v586, %v921
  %v985 = vmul.f32 %v591, %v921
  %v986 = vmul.f32 %v596, %v921
  %v987 = vmul.f32 %v601, %v921
  %v988 = vmul.f32 %v606, %v921
  %v989 = vmul.f32 %v611, %v921
  %v990 = vmul.f32 %v616, %v921
  %v991 = vmul.f32 %v621, %v921
  %v992 = vmul.f32 %v626, %v921
  %v993 = vmul.f32 %v631, %v921
  %v994 = vmul.f32 %v636, %v921
  %v995 = vmul.f32 %v641, %v921
  %v996 = vmul.f32 %v646, %v921
  %v997 = vmul.f32 %v651, %v921
  %v998 = vmul.f32 %v656, %v921
  %v999 = vmul.f32 %v661, %v921
  %v1000 = vmul.f32 %v666, %v921
  %v1001 = vmul.f32 %v671, %v921
  %v1002 = vmul.f32 %v676, %v921
  %v1003 = vmul.f32 %v681, %v921
  %v1004 = vmul.f32 %v686, %v921
  %v1005 = vmul.f32 %v691, %v921
  %v1006 = vmul.f32 %v696, %v921
  %v1007 = vmul.f32 %v701, %v921
  %v1008 = vmul.f32 %v706, %v921
  %v1009 = vmul.f32 %v711, %v921
  %v1010 = vmul.f32 %v716, %v921
  %v1011 = vmul.f32 %v721, %v921
  %v1012 = vmul.f32 %v726, %v921
  %v1013 = vmul.f32 %v731, %v921
  %v1014 = vmul.f32 %v736, %v921
  %v1015 = vmul.f32 %v741, %v921
  %v1016 = vmul.f32 %v746, %v921
  %v1017 = vmul.f32 %v751, %v921
  %v1018 = vmul.f32 %v756, %v921
  %v1019 = vmul.f32 %v761, %v921
  %v1020 = vmul.f32 %v766, %v921
  %v1021 = vmul.f32 %v771, %v921
  %v1022 = vmul.f32 %v776, %v921
  %v1023 = vmul.f32 %v781, %v921
  %v1024 = vmul.f32 %v786, %v921
  %v1025 = vmul.f32 %v791, %v921
  %v1026 = vmul.f32 %v796, %v921
  %v1027 = vmul.f32 %v801, %v921
  %v1028 = vmul.f32 %v806, %v921
  %v1029 = vmul.f32 %v811, %v921
  %v1030 = vmul.f32 %v816, %v921
  %v1031 = vmul.f32 %v821, %v921
  %v1032 = vmul.f32 %v826, %v921
  %v1033 = vmul.f32 %v831, %v921
  %v1034 = vmul.f32 %v836, %v921
  %v1035 = vmul.f32 %v841, %v921
  %v1036 = vmul.f32 %v846, %v921
  %v1037 = vmul.f32 %v851, %v921
  %v1038 = vmul.f32 %v856, %v921
  %v1039 = vmul.f32 %v861, %v921
  %v1040 = vmul.f32 %v866, %v921
  %v1041 = vmul.f32 %v871, %v921
  %v1042 = vmul.f32 %v876, %v921
  %v1043 = vmul.f32 %v881, %v921
  %v1044 = vmul.f32 %v886, %v921
  %v1045 = vmul.f32 %v891, %v921
  %v1046 = vmul.f32 %v896, %v921
  %v1047 = vmul.f32 %v901, %v921
  %v1048 = vmul.f32 %v906, %v921
  %v1049 = vmul.f32 %v911, %v921
  %v1050 = vmul.f32 %v916, %v921
  %1052 = vset.pattern.permute.xlu0 0
  %1053 = vperm.xlu0 %1052, %v14
  %v1054 = vpop.permute.xlu0 %1053
  %1057 = vset.pattern.permute.xlu0 0
  %1058 = vperm.xlu0 %1057, %v15
  %v1059 = vpop.permute.xlu0 %1058
  %1062 = vset.pattern.permute.xlu0 0
  %1063 = vperm.xlu0 %1062, %v16
  %v1064 = vpop.permute.xlu0 %1063
  %1067 = vset.pattern.permute.xlu0 0
  %1068 = vperm.xlu0 %1067, %v17
  %v1069 = vpop.permute.xlu0 %1068
  %1072 = vset.pattern.permute.xlu0 0
  %1073 = vperm.xlu0 %1072, %v18
  %v1074 = vpop.permute.xlu0 %1073
  %1077 = vset.pattern.permute.xlu0 0
  %1078 = vperm.xlu0 %1077, %v19
  %v1079 = vpop.permute.xlu0 %1078
  %1082 = vset.pattern.permute.xlu0 0
  %1083 = vperm.xlu0 %1082, %v20
  %v1084 = vpop.permute.xlu0 %1083
  %1087 = vset.pattern.permute.xlu0 0
  %1088 = vperm.xlu0 %1087, %v21
  %v1089 = vpop.permute.xlu0 %1088
  %1092 = vset.pattern.permute.xlu0 0
  %1093 = vperm.xlu0 %1092, %v22
  %v1094 = vpop.permute.xlu0 %1093
  %1097 = vset.pattern.permute.xlu0 0
  %1098 = vperm.xlu0 %1097, %v23
  %v1099 = vpop.permute.xlu0 %1098
  %1102 = vset.pattern.permute.xlu0 0
  %1103 = vperm.xlu0 %1102, %v24
  %v1104 = vpop.permute.xlu0 %1103
  %1107 = vset.pattern.permute.xlu0 0
  %1108 = vperm.xlu0 %1107, %v25
  %v1109 = vpop.permute.xlu0 %1108
  %1112 = vset.pattern.permute.xlu0 0
  %1113 = vperm.xlu0 %1112, %v26
  %v1114 = vpop.permute.xlu0 %1113
  %1117 = vset.pattern.permute.xlu0 0
  %1118 = vperm.xlu0 %1117, %v27
  %v1119 = vpop.permute.xlu0 %1118
  %1122 = vset.pattern.permute.xlu0 0
  %1123 = vperm.xlu0 %1122, %v28
  %v1124 = vpop.permute.xlu0 %1123
  %1127 = vset.pattern.permute.xlu0 0
  %1128 = vperm.xlu0 %1127, %v29
  %v1129 = vpop.permute.xlu0 %1128
  %1132 = vset.pattern.permute.xlu0 0
  %1133 = vperm.xlu0 %1132, %v30
  %v1134 = vpop.permute.xlu0 %1133
  %1137 = vset.pattern.permute.xlu0 0
  %1138 = vperm.xlu0 %1137, %v31
  %v1139 = vpop.permute.xlu0 %1138
  %1142 = vset.pattern.permute.xlu0 0
  %1143 = vperm.xlu0 %1142, %v32
  %v1144 = vpop.permute.xlu0 %1143
  %1147 = vset.pattern.permute.xlu0 0
  %1148 = vperm.xlu0 %1147, %v33
  %v1149 = vpop.permute.xlu0 %1148
  %1152 = vset.pattern.permute.xlu0 0
  %1153 = vperm.xlu0 %1152, %v34
  %v1154 = vpop.permute.xlu0 %1153
  %1157 = vset.pattern.permute.xlu0 0
  %1158 = vperm.xlu0 %1157, %v35
  %v1159 = vpop.permute.xlu0 %1158
  %1162 = vset.pattern.permute.xlu0 0
  %1163 = vperm.xlu0 %1162, %v36
  %v1164 = vpop.permute.xlu0 %1163
  %1167 = vset.pattern.permute.xlu0 0
  %1168 = vperm.xlu0 %1167, %v37
  %v1169 = vpop.permute.xlu0 %1168
  %1172 = vset.pattern.permute.xlu0 0
  %1173 = vperm.xlu0 %1172, %v38
  %v1174 = vpop.permute.xlu0 %1173
  %1177 = vset.pattern.permute.xlu0 0
  %1178 = vperm.xlu0 %1177, %v39
  %v1179 = vpop.permute.xlu0 %1178
  %1182 = vset.pattern.permute.xlu0 0
  %1183 = vperm.xlu0 %1182, %v40
  %v1184 = vpop.permute.xlu0 %1183
  %1187 = vset.pattern.permute.xlu0 0
  %1188 = vperm.xlu0 %1187, %v41
  %v1189 = vpop.permute.xlu0 %1188
  %1192 = vset.pattern.permute.xlu0 0
  %1193 = vperm.xlu0 %1192, %v42
  %v1194 = vpop.permute.xlu0 %1193
  %1197 = vset.pattern.permute.xlu0 0
  %1198 = vperm.xlu0 %1197, %v43
  %v1199 = vpop.permute.xlu0 %1198
  %1202 = vset.pattern.permute.xlu0 0
  %1203 = vperm.xlu0 %1202, %v44
  %v1204 = vpop.permute.xlu0 %1203
  %1207 = vset.pattern.permute.xlu0 0
  %1208 = vperm.xlu0 %1207, %v45
  %v1209 = vpop.permute.xlu0 %1208
  %1212 = vset.pattern.permute.xlu0 0
  %1213 = vperm.xlu0 %1212, %v46
  %v1214 = vpop.permute.xlu0 %1213
  %1217 = vset.pattern.permute.xlu0 0
  %1218 = vperm.xlu0 %1217, %v47
  %v1219 = vpop.permute.xlu0 %1218
  %1222 = vset.pattern.permute.xlu0 0
  %1223 = vperm.xlu0 %1222, %v48
  %v1224 = vpop.permute.xlu0 %1223
  %1227 = vset.pattern.permute.xlu0 0
  %1228 = vperm.xlu0 %1227, %v49
  %v1229 = vpop.permute.xlu0 %1228
  %1232 = vset.pattern.permute.xlu0 0
  %1233 = vperm.xlu0 %1232, %v50
  %v1234 = vpop.permute.xlu0 %1233
  %1237 = vset.pattern.permute.xlu0 0
  %1238 = vperm.xlu0 %1237, %v51
  %v1239 = vpop.permute.xlu0 %1238
  %1242 = vset.pattern.permute.xlu0 0
  %1243 = vperm.xlu0 %1242, %v52
  %v1244 = vpop.permute.xlu0 %1243
  %1247 = vset.pattern.permute.xlu0 0
  %1248 = vperm.xlu0 %1247, %v53
  %v1249 = vpop.permute.xlu0 %1248
  %1252 = vset.pattern.permute.xlu0 0
  %1253 = vperm.xlu0 %1252, %v54
  %v1254 = vpop.permute.xlu0 %1253
  %1257 = vset.pattern.permute.xlu0 0
  %1258 = vperm.xlu0 %1257, %v55
  %v1259 = vpop.permute.xlu0 %1258
  %1262 = vset.pattern.permute.xlu0 0
  %1263 = vperm.xlu0 %1262, %v56
  %v1264 = vpop.permute.xlu0 %1263
  %1267 = vset.pattern.permute.xlu0 0
  %1268 = vperm.xlu0 %1267, %v57
  %v1269 = vpop.permute.xlu0 %1268
  %1272 = vset.pattern.permute.xlu0 0
  %1273 = vperm.xlu0 %1272, %v58
  %v1274 = vpop.permute.xlu0 %1273
  %1277 = vset.pattern.permute.xlu0 0
  %1278 = vperm.xlu0 %1277, %v59
  %v1279 = vpop.permute.xlu0 %1278
  %1282 = vset.pattern.permute.xlu0 0
  %1283 = vperm.xlu0 %1282, %v60
  %v1284 = vpop.permute.xlu0 %1283
  %1287 = vset.pattern.permute.xlu0 0
  %1288 = vperm.xlu0 %1287, %v61
  %v1289 = vpop.permute.xlu0 %1288
  %1292 = vset.pattern.permute.xlu0 0
  %1293 = vperm.xlu0 %1292, %v62
  %v1294 = vpop.permute.xlu0 %1293
  %1297 = vset.pattern.permute.xlu0 0
  %1298 = vperm.xlu0 %1297, %v63
  %v1299 = vpop.permute.xlu0 %1298
  %1302 = vset.pattern.permute.xlu0 0
  %1303 = vperm.xlu0 %1302, %v64
  %v1304 = vpop.permute.xlu0 %1303
  %1307 = vset.pattern.permute.xlu0 0
  %1308 = vperm.xlu0 %1307, %v65
  %v1309 = vpop.permute.xlu0 %1308
  %1312 = vset.pattern.permute.xlu0 0
  %1313 = vperm.xlu0 %1312, %v66
  %v1314 = vpop.permute.xlu0 %1313
  %1317 = vset.pattern.permute.xlu0 0
  %1318 = vperm.xlu0 %1317, %v67
  %v1319 = vpop.permute.xlu0 %1318
  %1322 = vset.pattern.permute.xlu0 0
  %1323 = vperm.xlu0 %1322, %v68
  %v1324 = vpop.permute.xlu0 %1323
  %1327 = vset.pattern.permute.xlu0 0
  %1328 = vperm.xlu0 %1327, %v69
  %v1329 = vpop.permute.xlu0 %1328
  %1332 = vset.pattern.permute.xlu0 0
  %1333 = vperm.xlu0 %1332, %v70
  %v1334 = vpop.permute.xlu0 %1333
  %1337 = vset.pattern.permute.xlu0 0
  %1338 = vperm.xlu0 %1337, %v71
  %v1339 = vpop.permute.xlu0 %1338
  %1342 = vset.pattern.permute.xlu0 0
  %1343 = vperm.xlu0 %1342, %v72
  %v1344 = vpop.permute.xlu0 %1343
  %1347 = vset.pattern.permute.xlu0 0
  %1348 = vperm.xlu0 %1347, %v73
  %v1349 = vpop.permute.xlu0 %1348
  %1352 = vset.pattern.permute.xlu0 0
  %1353 = vperm.xlu0 %1352, %v74
  %v1354 = vpop.permute.xlu0 %1353
  %1357 = vset.pattern.permute.xlu0 0
  %1358 = vperm.xlu0 %1357, %v75
  %v1359 = vpop.permute.xlu0 %1358
  %1362 = vset.pattern.permute.xlu0 0
  %1363 = vperm.xlu0 %1362, %v76
  %v1364 = vpop.permute.xlu0 %1363
  %1367 = vset.pattern.permute.xlu0 0
  %1368 = vperm.xlu0 %1367, %v77
  %v1369 = vpop.permute.xlu0 %1368
  %1372 = vset.pattern.permute.xlu0 0
  %1373 = vperm.xlu0 %1372, %v78
  %v1374 = vpop.permute.xlu0 %1373
  %1377 = vset.pattern.permute.xlu0 0
  %1378 = vperm.xlu0 %1377, %v79
  %v1379 = vpop.permute.xlu0 %1378
  %1382 = vset.pattern.permute.xlu0 0
  %1383 = vperm.xlu0 %1382, %v80
  %v1384 = vpop.permute.xlu0 %1383
  %1387 = vset.pattern.permute.xlu0 0
  %1388 = vperm.xlu0 %1387, %v81
  %v1389 = vpop.permute.xlu0 %1388
  %1392 = vset.pattern.permute.xlu0 0
  %1393 = vperm.xlu0 %1392, %v82
  %v1394 = vpop.permute.xlu0 %1393
  %1397 = vset.pattern.permute.xlu0 0
  %1398 = vperm.xlu0 %1397, %v83
  %v1399 = vpop.permute.xlu0 %1398
  %1402 = vset.pattern.permute.xlu0 0
  %1403 = vperm.xlu0 %1402, %v84
  %v1404 = vpop.permute.xlu0 %1403
  %1407 = vset.pattern.permute.xlu0 0
  %1408 = vperm.xlu0 %1407, %v85
  %v1409 = vpop.permute.xlu0 %1408
  %1412 = vset.pattern.permute.xlu0 0
  %1413 = vperm.xlu0 %1412, %v86
  %v1414 = vpop.permute.xlu0 %1413
  %1417 = vset.pattern.permute.xlu0 0
  %1418 = vperm.xlu0 %1417, %v87
  %v1419 = vpop.permute.xlu0 %1418
  %1422 = vset.pattern.permute.xlu0 0
  %1423 = vperm.xlu0 %1422, %v88
  %v1424 = vpop.permute.xlu0 %1423
  %1427 = vset.pattern.permute.xlu0 0
  %1428 = vperm.xlu0 %1427, %v89
  %v1429 = vpop.permute.xlu0 %1428
  %1432 = vset.pattern.permute.xlu0 0
  %1433 = vperm.xlu0 %1432, %v90
  %v1434 = vpop.permute.xlu0 %1433
  %1437 = vset.pattern.permute.xlu0 0
  %1438 = vperm.xlu0 %1437, %v91
  %v1439 = vpop.permute.xlu0 %1438
  %1442 = vset.pattern.permute.xlu0 0
  %1443 = vperm.xlu0 %1442, %v92
  %v1444 = vpop.permute.xlu0 %1443
  %1447 = vset.pattern.permute.xlu0 0
  %1448 = vperm.xlu0 %1447, %v93
  %v1449 = vpop.permute.xlu0 %1448
  %1452 = vset.pattern.permute.xlu0 0
  %1453 = vperm.xlu0 %1452, %v94
  %v1454 = vpop.permute.xlu0 %1453
  %1457 = vset.pattern.permute.xlu0 0
  %1458 = vperm.xlu0 %1457, %v95
  %v1459 = vpop.permute.xlu0 %1458
  %1462 = vset.pattern.permute.xlu0 0
  %1463 = vperm.xlu0 %1462, %v96
  %v1464 = vpop.permute.xlu0 %1463
  %1467 = vset.pattern.permute.xlu0 0
  %1468 = vperm.xlu0 %1467, %v97
  %v1469 = vpop.permute.xlu0 %1468
  %1472 = vset.pattern.permute.xlu0 0
  %1473 = vperm.xlu0 %1472, %v98
  %v1474 = vpop.permute.xlu0 %1473
  %1477 = vset.pattern.permute.xlu0 0
  %1478 = vperm.xlu0 %1477, %v99
  %v1479 = vpop.permute.xlu0 %1478
  %1482 = vset.pattern.permute.xlu0 0
  %1483 = vperm.xlu0 %1482, %v100
  %v1484 = vpop.permute.xlu0 %1483
  %1487 = vset.pattern.permute.xlu0 0
  %1488 = vperm.xlu0 %1487, %v101
  %v1489 = vpop.permute.xlu0 %1488
  %1492 = vset.pattern.permute.xlu0 0
  %1493 = vperm.xlu0 %1492, %v102
  %v1494 = vpop.permute.xlu0 %1493
  %1497 = vset.pattern.permute.xlu0 0
  %1498 = vperm.xlu0 %1497, %v103
  %v1499 = vpop.permute.xlu0 %1498
  %1502 = vset.pattern.permute.xlu0 0
  %1503 = vperm.xlu0 %1502, %v104
  %v1504 = vpop.permute.xlu0 %1503
  %1507 = vset.pattern.permute.xlu0 0
  %1508 = vperm.xlu0 %1507, %v105
  %v1509 = vpop.permute.xlu0 %1508
  %1512 = vset.pattern.permute.xlu0 0
  %1513 = vperm.xlu0 %1512, %v106
  %v1514 = vpop.permute.xlu0 %1513
  %1517 = vset.pattern.permute.xlu0 0
  %1518 = vperm.xlu0 %1517, %v107
  %v1519 = vpop.permute.xlu0 %1518
  %1522 = vset.pattern.permute.xlu0 0
  %1523 = vperm.xlu0 %1522, %v108
  %v1524 = vpop.permute.xlu0 %1523
  %1527 = vset.pattern.permute.xlu0 0
  %1528 = vperm.xlu0 %1527, %v109
  %v1529 = vpop.permute.xlu0 %1528
  %1532 = vset.pattern.permute.xlu0 0
  %1533 = vperm.xlu0 %1532, %v110
  %v1534 = vpop.permute.xlu0 %1533
  %1537 = vset.pattern.permute.xlu0 0
  %1538 = vperm.xlu0 %1537, %v111
  %v1539 = vpop.permute.xlu0 %1538
  %1542 = vset.pattern.permute.xlu0 0
  %1543 = vperm.xlu0 %1542, %v112
  %v1544 = vpop.permute.xlu0 %1543
  %1547 = vset.pattern.permute.xlu0 0
  %1548 = vperm.xlu0 %1547, %v113
  %v1549 = vpop.permute.xlu0 %1548
  %1552 = vset.pattern.permute.xlu0 0
  %1553 = vperm.xlu0 %1552, %v114
  %v1554 = vpop.permute.xlu0 %1553
  %1557 = vset.pattern.permute.xlu0 0
  %1558 = vperm.xlu0 %1557, %v115
  %v1559 = vpop.permute.xlu0 %1558
  %1562 = vset.pattern.permute.xlu0 0
  %1563 = vperm.xlu0 %1562, %v116
  %v1564 = vpop.permute.xlu0 %1563
  %1567 = vset.pattern.permute.xlu0 0
  %1568 = vperm.xlu0 %1567, %v117
  %v1569 = vpop.permute.xlu0 %1568
  %1572 = vset.pattern.permute.xlu0 0
  %1573 = vperm.xlu0 %1572, %v118
  %v1574 = vpop.permute.xlu0 %1573
  %1577 = vset.pattern.permute.xlu0 0
  %1578 = vperm.xlu0 %1577, %v119
  %v1579 = vpop.permute.xlu0 %1578
  %1582 = vset.pattern.permute.xlu0 0
  %1583 = vperm.xlu0 %1582, %v120
  %v1584 = vpop.permute.xlu0 %1583
  %1587 = vset.pattern.permute.xlu0 0
  %1588 = vperm.xlu0 %1587, %v121
  %v1589 = vpop.permute.xlu0 %1588
  %1592 = vset.pattern.permute.xlu0 0
  %1593 = vperm.xlu0 %1592, %v122
  %v1594 = vpop.permute.xlu0 %1593
  %1597 = vset.pattern.permute.xlu0 0
  %1598 = vperm.xlu0 %1597, %v123
  %v1599 = vpop.permute.xlu0 %1598
  %1602 = vset.pattern.permute.xlu0 0
  %1603 = vperm.xlu0 %1602, %v124
  %v1604 = vpop.permute.xlu0 %1603
  %1607 = vset.pattern.permute.xlu0 0
  %1608 = vperm.xlu0 %1607, %v125
  %v1609 = vpop.permute.xlu0 %1608
  %1612 = vset.pattern.permute.xlu0 0
  %1613 = vperm.xlu0 %1612, %v126
  %v1614 = vpop.permute.xlu0 %1613
  %1617 = vset.pattern.permute.xlu0 0
  %1618 = vperm.xlu0 %1617, %v127
  %v1619 = vpop.permute.xlu0 %1618
  %1622 = vset.pattern.permute.xlu0 0
  %1623 = vperm.xlu0 %1622, %v128
  %v1624 = vpop.permute.xlu0 %1623
  %1627 = vset.pattern.permute.xlu0 0
  %1628 = vperm.xlu0 %1627, %v129
  %v1629 = vpop.permute.xlu0 %1628
  %1632 = vset.pattern.permute.xlu0 0
  %1633 = vperm.xlu0 %1632, %v130
  %v1634 = vpop.permute.xlu0 %1633
  %1637 = vset.pattern.permute.xlu0 0
  %1638 = vperm.xlu0 %1637, %v131
  %v1639 = vpop.permute.xlu0 %1638
  %1642 = vset.pattern.permute.xlu0 0
  %1643 = vperm.xlu0 %1642, %v132
  %v1644 = vpop.permute.xlu0 %1643
  %1647 = vset.pattern.permute.xlu0 0
  %1648 = vperm.xlu0 %1647, %v133
  %v1649 = vpop.permute.xlu0 %1648
  %1652 = vset.pattern.permute.xlu0 0
  %1653 = vperm.xlu0 %1652, %v134
  %v1654 = vpop.permute.xlu0 %1653
  %1657 = vset.pattern.permute.xlu0 0
  %1658 = vperm.xlu0 %1657, %v135
  %v1659 = vpop.permute.xlu0 %1658
  %1662 = vset.pattern.permute.xlu0 0
  %1663 = vperm.xlu0 %1662, %v136
  %v1664 = vpop.permute.xlu0 %1663
  %1667 = vset.pattern.permute.xlu0 0
  %1668 = vperm.xlu0 %1667, %v137
  %v1669 = vpop.permute.xlu0 %1668
  %1672 = vset.pattern.permute.xlu0 0
  %1673 = vperm.xlu0 %1672, %v138
  %v1674 = vpop.permute.xlu0 %1673
  %1677 = vset.pattern.permute.xlu0 0
  %1678 = vperm.xlu0 %1677, %v139
  %v1679 = vpop.permute.xlu0 %1678
  %1682 = vset.pattern.permute.xlu0 0
  %1683 = vperm.xlu0 %1682, %v140
  %v1684 = vpop.permute.xlu0 %1683
  %1687 = vset.pattern.permute.xlu0 0
  %1688 = vperm.xlu0 %1687, %v141
  %v1689 = vpop.permute.xlu0 %1688
  %1692 = vset.pattern.permute.xlu0 0
  %1693 = vperm.xlu0 %1692, %v142
  %v1694 = vpop.permute.xlu0 %1693
  %v1696 = vadd.f32 %v1054, %v922
  %v1697 = vadd.f32 %v1059, %v923
  %v1698 = vadd.f32 %v1064, %v924
  %v1699 = vadd.f32 %v1069, %v925
  %v1700 = vadd.f32 %v1074, %v926
  %v1701 = vadd.f32 %v1079, %v927
  %v1702 = vadd.f32 %v1084, %v928
  %v1703 = vadd.f32 %v1089, %v929
  %v1704 = vadd.f32 %v1094, %v930
  %v1705 = vadd.f32 %v1099, %v931
  %v1706 = vadd.f32 %v1104, %v932
  %v1707 = vadd.f32 %v1109, %v933
  %v1708 = vadd.f32 %v1114, %v934
  %v1709 = vadd.f32 %v1119, %v935
  %v1710 = vadd.f32 %v1124, %v936
  %v1711 = vadd.f32 %v1129, %v937
  %v1712 = vadd.f32 %v1134, %v938
  %v1713 = vadd.f32 %v1139, %v939
  %v1714 = vadd.f32 %v1144, %v940
  %v1715 = vadd.f32 %v1149, %v941
  %v1716 = vadd.f32 %v1154, %v942
  %v1717 = vadd.f32 %v1159, %v943
  %v1718 = vadd.f32 %v1164, %v944
  %v1719 = vadd.f32 %v1169, %v945
  %v1720 = vadd.f32 %v1174, %v946
  %v1721 = vadd.f32 %v1179, %v947
  %v1722 = vadd.f32 %v1184, %v948
  %v1723 = vadd.f32 %v1189, %v949
  %v1724 = vadd.f32 %v1194, %v950
  %v1725 = vadd.f32 %v1199, %v951
  %v1726 = vadd.f32 %v1204, %v952
  %v1727 = vadd.f32 %v1209, %v953
  %v1728 = vadd.f32 %v1214, %v954
  %v1729 = vadd.f32 %v1219, %v955
  %v1730 = vadd.f32 %v1224, %v956
  %v1731 = vadd.f32 %v1229, %v957
  %v1732 = vadd.f32 %v1234, %v958
  %v1733 = vadd.f32 %v1239, %v959
  %v1734 = vadd.f32 %v1244, %v960
  %v1735 = vadd.f32 %v1249, %v961
  %v1736 = vadd.f32 %v1254, %v962
  %v1737 = vadd.f32 %v1259, %v963
  %v1738 = vadd.f32 %v1264, %v964
  %v1739 = vadd.f32 %v1269, %v965
  %v1740 = vadd.f32 %v1274, %v966
  %v1741 = vadd.f32 %v1279, %v967
  %v1742 = vadd.f32 %v1284, %v968
  %v1743 = vadd.f32 %v1289, %v969
  %v1744 = vadd.f32 %v1294, %v970
  %v1745 = vadd.f32 %v1299, %v971
  %v1746 = vadd.f32 %v1304, %v972
  %v1747 = vadd.f32 %v1309, %v973
  %v1748 = vadd.f32 %v1314, %v974
  %v1749 = vadd.f32 %v1319, %v975
  %v1750 = vadd.f32 %v1324, %v976
  %v1751 = vadd.f32 %v1329, %v977
  %v1752 = vadd.f32 %v1334, %v978
  %v1753 = vadd.f32 %v1339, %v979
  %v1754 = vadd.f32 %v1344, %v980
  %v1755 = vadd.f32 %v1349, %v981
  %v1756 = vadd.f32 %v1354, %v982
  %v1757 = vadd.f32 %v1359, %v983
  %v1758 = vadd.f32 %v1364, %v984
  %v1759 = vadd.f32 %v1369, %v985
  %v1760 = vadd.f32 %v1374, %v986
  %v1761 = vadd.f32 %v1379, %v987
  %v1762 = vadd.f32 %v1384, %v988
  %v1763 = vadd.f32 %v1389, %v989
  %v1764 = vadd.f32 %v1394, %v990
  %v1765 = vadd.f32 %v1399, %v991
  %v1766 = vadd.f32 %v1404, %v992
  %v1767 = vadd.f32 %v1409, %v993
  %v1768 = vadd.f32 %v1414, %v994
  %v1769 = vadd.f32 %v1419, %v995
  %v1770 = vadd.f32 %v1424, %v996
  %v1771 = vadd.f32 %v1429, %v997
  %v1772 = vadd.f32 %v1434, %v998
  %v1773 = vadd.f32 %v1439, %v999
  %v1774 = vadd.f32 %v1444, %v1000
  %v1775 = vadd.f32 %v1449, %v1001
  %v1776 = vadd.f32 %v1454, %v1002
  %v1777 = vadd.f32 %v1459, %v1003
  %v1778 = vadd.f32 %v1464, %v1004
  %v1779 = vadd.f32 %v1469, %v1005
  %v1780 = vadd.f32 %v1474, %v1006
  %v1781 = vadd.f32 %v1479, %v1007
  %v1782 = vadd.f32 %v1484, %v1008
  %v1783 = vadd.f32 %v1489, %v1009
  %v1784 = vadd.f32 %v1494, %v1010
  %v1785 = vadd.f32 %v1499, %v1011
  %v1786 = vadd.f32 %v1504, %v1012
  %v1787 = vadd.f32 %v1509, %v1013
  %v1788 = vadd.f32 %v1514, %v1014
  %v1789 = vadd.f32 %v1519, %v1015
  %v1790 = vadd.f32 %v1524, %v1016
  %v1791 = vadd.f32 %v1529, %v1017
  %v1792 = vadd.f32 %v1534, %v1018
  %v1793 = vadd.f32 %v1539, %v1019
  %v1794 = vadd.f32 %v1544, %v1020
  %v1795 = vadd.f32 %v1549, %v1021
  %v1796 = vadd.f32 %v1554, %v1022
  %v1797 = vadd.f32 %v1559, %v1023
  %v1798 = vadd.f32 %v1564, %v1024
  %v1799 = vadd.f32 %v1569, %v1025
  %v1800 = vadd.f32 %v1574, %v1026
  %v1801 = vadd.f32 %v1579, %v1027
  %v1802 = vadd.f32 %v1584, %v1028
  %v1803 = vadd.f32 %v1589, %v1029
  %v1804 = vadd.f32 %v1594, %v1030
  %v1805 = vadd.f32 %v1599, %v1031
  %v1806 = vadd.f32 %v1604, %v1032
  %v1807 = vadd.f32 %v1609, %v1033
  %v1808 = vadd.f32 %v1614, %v1034
  %v1809 = vadd.f32 %v1619, %v1035
  %v1810 = vadd.f32 %v1624, %v1036
  %v1811 = vadd.f32 %v1629, %v1037
  %v1812 = vadd.f32 %v1634, %v1038
  %v1813 = vadd.f32 %v1639, %v1039
  %v1814 = vadd.f32 %v1644, %v1040
  %v1815 = vadd.f32 %v1649, %v1041
  %v1816 = vadd.f32 %v1654, %v1042
  %v1817 = vadd.f32 %v1659, %v1043
  %v1818 = vadd.f32 %v1664, %v1044
  %v1819 = vadd.f32 %v1669, %v1045
  %v1820 = vadd.f32 %v1674, %v1046
  %v1821 = vadd.f32 %v1679, %v1047
  %v1822 = vadd.f32 %v1684, %v1048
  %v1823 = vadd.f32 %v1689, %v1049
  %v1824 = vadd.f32 %v1694, %v1050
  %v1825 = vld [vmem:[%s0 + $0x1] sm:$0x1]
  %1826 = vset.pattern.permute.xlu0 1
  %1827 = vperm.xlu0 %1826, %v143
  %v1828 = vpop.permute.xlu0 %1827
  %1830 = vset.pattern.permute.xlu0 1
  %1831 = vperm.xlu0 %1830, %v144
  %v1832 = vpop.permute.xlu0 %1831
  %1834 = vset.pattern.permute.xlu0 1
  %1835 = vperm.xlu0 %1834, %v145
  %v1836 = vpop.permute.xlu0 %1835
  %1838 = vset.pattern.permute.xlu0 1
  %1839 = vperm.xlu0 %1838, %v146
  %v1840 = vpop.permute.xlu0 %1839
  %1842 = vset.pattern.permute.xlu0 1
  %1843 = vperm.xlu0 %1842, %v147
  %v1844 = vpop.permute.xlu0 %1843
  %1846 = vset.pattern.permute.xlu0 1
  %1847 = vperm.xlu0 %1846, %v148
  %v1848 = vpop.permute.xlu0 %1847
  %1850 = vset.pattern.permute.xlu0 1
  %1851 = vperm.xlu0 %1850, %v149
  %v1852 = vpop.permute.xlu0 %1851
  %1854 = vset.pattern.permute.xlu0 1
  %1855 = vperm.xlu0 %1854, %v150
  %v1856 = vpop.permute.xlu0 %1855
  %1858 = vset.pattern.permute.xlu0 1
  %1859 = vperm.xlu0 %1858, %v151
  %v1860 = vpop.permute.xlu0 %1859
  %1862 = vset.pattern.permute.xlu0 1
  %1863 = vperm.xlu0 %1862, %v152
  %v1864 = vpop.permute.xlu0 %1863
  %1866 = vset.pattern.permute.xlu0 1
  %1867 = vperm.xlu0 %1866, %v153
  %v1868 = vpop.permute.xlu0 %1867
  %1870 = vset.pattern.permute.xlu0 1
  %1871 = vperm.xlu0 %1870, %v154
  %v1872 = vpop.permute.xlu0 %1871
  %1874 = vset.pattern.permute.xlu0 1
  %1875 = vperm.xlu0 %1874, %v155
  %v1876 = vpop.permute.xlu0 %1875
  %1878 = vset.pattern.permute.xlu0 1
  %1879 = vperm.xlu0 %1878, %v156
  %v1880 = vpop.permute.xlu0 %1879
  %1882 = vset.pattern.permute.xlu0 1
  %1883 = vperm.xlu0 %1882, %v157
  %v1884 = vpop.permute.xlu0 %1883
  %1886 = vset.pattern.permute.xlu0 1
  %1887 = vperm.xlu0 %1886, %v158
  %v1888 = vpop.permute.xlu0 %1887
  %1890 = vset.pattern.permute.xlu0 1
  %1891 = vperm.xlu0 %1890, %v159
  %v1892 = vpop.permute.xlu0 %1891
  %1894 = vset.pattern.permute.xlu0 1
  %1895 = vperm.xlu0 %1894, %v160
  %v1896 = vpop.permute.xlu0 %1895
  %1898 = vset.pattern.permute.xlu0 1
  %1899 = vperm.xlu0 %1898, %v161
  %v1900 = vpop.permute.xlu0 %1899
  %1902 = vset.pattern.permute.xlu0 1
  %1903 = vperm.xlu0 %1902, %v162
  %v1904 = vpop.permute.xlu0 %1903
  %1906 = vset.pattern.permute.xlu0 1
  %1907 = vperm.xlu0 %1906, %v163
  %v1908 = vpop.permute.xlu0 %1907
  %1910 = vset.pattern.permute.xlu0 1
  %1911 = vperm.xlu0 %1910, %v164
  %v1912 = vpop.permute.xlu0 %1911
  %1914 = vset.pattern.permute.xlu0 1
  %1915 = vperm.xlu0 %1914, %v165
  %v1916 = vpop.permute.xlu0 %1915
  %1918 = vset.pattern.permute.xlu0 1
  %1919 = vperm.xlu0 %1918, %v166
  %v1920 = vpop.permute.xlu0 %1919
  %1922 = vset.pattern.permute.xlu0 1
  %1923 = vperm.xlu0 %1922, %v167
  %v1924 = vpop.permute.xlu0 %1923
  %1926 = vset.pattern.permute.xlu0 1
  %1927 = vperm.xlu0 %1926, %v168
  %v1928 = vpop.permute.xlu0 %1927
  %1930 = vset.pattern.permute.xlu0 1
  %1931 = vperm.xlu0 %1930, %v169
  %v1932 = vpop.permute.xlu0 %1931
  %1934 = vset.pattern.permute.xlu0 1
  %1935 = vperm.xlu0 %1934, %v170
  %v1936 = vpop.permute.xlu0 %1935
  %1938 = vset.pattern.permute.xlu0 1
  %1939 = vperm.xlu0 %1938, %v171
  %v1940 = vpop.permute.xlu0 %1939
  %1942 = vset.pattern.permute.xlu0 1
  %1943 = vperm.xlu0 %1942, %v172
  %v1944 = vpop.permute.xlu0 %1943
  %1946 = vset.pattern.permute.xlu0 1
  %1947 = vperm.xlu0 %1946, %v173
  %v1948 = vpop.permute.xlu0 %1947
  %1950 = vset.pattern.permute.xlu0 1
  %1951 = vperm.xlu0 %1950, %v174
  %v1952 = vpop.permute.xlu0 %1951
  %1954 = vset.pattern.permute.xlu0 1
  %1955 = vperm.xlu0 %1954, %v175
  %v1956 = vpop.permute.xlu0 %1955
  %1958 = vset.pattern.permute.xlu0 1
  %1959 = vperm.xlu0 %1958, %v176
  %v1960 = vpop.permute.xlu0 %1959
  %1962 = vset.pattern.permute.xlu0 1
  %1963 = vperm.xlu0 %1962, %v177
  %v1964 = vpop.permute.xlu0 %1963
  %1966 = vset.pattern.permute.xlu0 1
  %1967 = vperm.xlu0 %1966, %v178
  %v1968 = vpop.permute.xlu0 %1967
  %1970 = vset.pattern.permute.xlu0 1
  %1971 = vperm.xlu0 %1970, %v179
  %v1972 = vpop.permute.xlu0 %1971
  %1974 = vset.pattern.permute.xlu0 1
  %1975 = vperm.xlu0 %1974, %v180
  %v1976 = vpop.permute.xlu0 %1975
  %1978 = vset.pattern.permute.xlu0 1
  %1979 = vperm.xlu0 %1978, %v181
  %v1980 = vpop.permute.xlu0 %1979
  %1982 = vset.pattern.permute.xlu0 1
  %1983 = vperm.xlu0 %1982, %v182
  %v1984 = vpop.permute.xlu0 %1983
  %1986 = vset.pattern.permute.xlu0 1
  %1987 = vperm.xlu0 %1986, %v183
  %v1988 = vpop.permute.xlu0 %1987
  %1990 = vset.pattern.permute.xlu0 1
  %1991 = vperm.xlu0 %1990, %v184
  %v1992 = vpop.permute.xlu0 %1991
  %1994 = vset.pattern.permute.xlu0 1
  %1995 = vperm.xlu0 %1994, %v185
  %v1996 = vpop.permute.xlu0 %1995
  %1998 = vset.pattern.permute.xlu0 1
  %1999 = vperm.xlu0 %1998, %v186
  %v2000 = vpop.permute.xlu0 %1999
  %2002 = vset.pattern.permute.xlu0 1
  %2003 = vperm.xlu0 %2002, %v187
  %v2004 = vpop.permute.xlu0 %2003
  %2006 = vset.pattern.permute.xlu0 1
  %2007 = vperm.xlu0 %2006, %v188
  %v2008 = vpop.permute.xlu0 %2007
  %2010 = vset.pattern.permute.xlu0 1
  %2011 = vperm.xlu0 %2010, %v189
  %v2012 = vpop.permute.xlu0 %2011
  %2014 = vset.pattern.permute.xlu0 1
  %2015 = vperm.xlu0 %2014, %v190
  %v2016 = vpop.permute.xlu0 %2015
  %2018 = vset.pattern.permute.xlu0 1
  %2019 = vperm.xlu0 %2018, %v191
  %v2020 = vpop.permute.xlu0 %2019
  %2022 = vset.pattern.permute.xlu0 1
  %2023 = vperm.xlu0 %2022, %v192
  %v2024 = vpop.permute.xlu0 %2023
  %2026 = vset.pattern.permute.xlu0 1
  %2027 = vperm.xlu0 %2026, %v193
  %v2028 = vpop.permute.xlu0 %2027
  %2030 = vset.pattern.permute.xlu0 1
  %2031 = vperm.xlu0 %2030, %v194
  %v2032 = vpop.permute.xlu0 %2031
  %2034 = vset.pattern.permute.xlu0 1
  %2035 = vperm.xlu0 %2034, %v195
  %v2036 = vpop.permute.xlu0 %2035
  %2038 = vset.pattern.permute.xlu0 1
  %2039 = vperm.xlu0 %2038, %v196
  %v2040 = vpop.permute.xlu0 %2039
  %2042 = vset.pattern.permute.xlu0 1
  %2043 = vperm.xlu0 %2042, %v197
  %v2044 = vpop.permute.xlu0 %2043
  %2046 = vset.pattern.permute.xlu0 1
  %2047 = vperm.xlu0 %2046, %v198
  %v2048 = vpop.permute.xlu0 %2047
  %2050 = vset.pattern.permute.xlu0 1
  %2051 = vperm.xlu0 %2050, %v199
  %v2052 = vpop.permute.xlu0 %2051
  %2054 = vset.pattern.permute.xlu0 1
  %2055 = vperm.xlu0 %2054, %v200
  %v2056 = vpop.permute.xlu0 %2055
  %2058 = vset.pattern.permute.xlu0 1
  %2059 = vperm.xlu0 %2058, %v201
  %v2060 = vpop.permute.xlu0 %2059
  %2062 = vset.pattern.permute.xlu0 1
  %2063 = vperm.xlu0 %2062, %v202
  %v2064 = vpop.permute.xlu0 %2063
  %2066 = vset.pattern.permute.xlu0 1
  %2067 = vperm.xlu0 %2066, %v203
  %v2068 = vpop.permute.xlu0 %2067
  %2070 = vset.pattern.permute.xlu0 1
  %2071 = vperm.xlu0 %2070, %v204
  %v2072 = vpop.permute.xlu0 %2071
  %2074 = vset.pattern.permute.xlu0 1
  %2075 = vperm.xlu0 %2074, %v205
  %v2076 = vpop.permute.xlu0 %2075
  %2078 = vset.pattern.permute.xlu0 1
  %2079 = vperm.xlu0 %2078, %v206
  %v2080 = vpop.permute.xlu0 %2079
  %2082 = vset.pattern.permute.xlu0 1
  %2083 = vperm.xlu0 %2082, %v207
  %v2084 = vpop.permute.xlu0 %2083
  %2086 = vset.pattern.permute.xlu0 1
  %2087 = vperm.xlu0 %2086, %v208
  %v2088 = vpop.permute.xlu0 %2087
  %2090 = vset.pattern.permute.xlu0 1
  %2091 = vperm.xlu0 %2090, %v209
  %v2092 = vpop.permute.xlu0 %2091
  %2094 = vset.pattern.permute.xlu0 1
  %2095 = vperm.xlu0 %2094, %v210
  %v2096 = vpop.permute.xlu0 %2095
  %2098 = vset.pattern.permute.xlu0 1
  %2099 = vperm.xlu0 %2098, %v211
  %v2100 = vpop.permute.xlu0 %2099
  %2102 = vset.pattern.permute.xlu0 1
  %2103 = vperm.xlu0 %2102, %v212
  %v2104 = vpop.permute.xlu0 %2103
  %2106 = vset.pattern.permute.xlu0 1
  %2107 = vperm.xlu0 %2106, %v213
  %v2108 = vpop.permute.xlu0 %2107
  %2110 = vset.pattern.permute.xlu0 1
  %2111 = vperm.xlu0 %2110, %v214
  %v2112 = vpop.permute.xlu0 %2111
  %2114 = vset.pattern.permute.xlu0 1
  %2115 = vperm.xlu0 %2114, %v215
  %v2116 = vpop.permute.xlu0 %2115
  %2118 = vset.pattern.permute.xlu0 1
  %2119 = vperm.xlu0 %2118, %v216
  %v2120 = vpop.permute.xlu0 %2119
  %2122 = vset.pattern.permute.xlu0 1
  %2123 = vperm.xlu0 %2122, %v217
  %v2124 = vpop.permute.xlu0 %2123
  %2126 = vset.pattern.permute.xlu0 1
  %2127 = vperm.xlu0 %2126, %v218
  %v2128 = vpop.permute.xlu0 %2127
  %2130 = vset.pattern.permute.xlu0 1
  %2131 = vperm.xlu0 %2130, %v219
  %v2132 = vpop.permute.xlu0 %2131
  %2134 = vset.pattern.permute.xlu0 1
  %2135 = vperm.xlu0 %2134, %v220
  %v2136 = vpop.permute.xlu0 %2135
  %2138 = vset.pattern.permute.xlu0 1
  %2139 = vperm.xlu0 %2138, %v221
  %v2140 = vpop.permute.xlu0 %2139
  %2142 = vset.pattern.permute.xlu0 1
  %2143 = vperm.xlu0 %2142, %v222
  %v2144 = vpop.permute.xlu0 %2143
  %2146 = vset.pattern.permute.xlu0 1
  %2147 = vperm.xlu0 %2146, %v223
  %v2148 = vpop.permute.xlu0 %2147
  %2150 = vset.pattern.permute.xlu0 1
  %2151 = vperm.xlu0 %2150, %v224
  %v2152 = vpop.permute.xlu0 %2151
  %2154 = vset.pattern.permute.xlu0 1
  %2155 = vperm.xlu0 %2154, %v225
  %v2156 = vpop.permute.xlu0 %2155
  %2158 = vset.pattern.permute.xlu0 1
  %2159 = vperm.xlu0 %2158, %v226
  %v2160 = vpop.permute.xlu0 %2159
  %2162 = vset.pattern.permute.xlu0 1
  %2163 = vperm.xlu0 %2162, %v227
  %v2164 = vpop.permute.xlu0 %2163
  %2166 = vset.pattern.permute.xlu0 1
  %2167 = vperm.xlu0 %2166, %v228
  %v2168 = vpop.permute.xlu0 %2167
  %2170 = vset.pattern.permute.xlu0 1
  %2171 = vperm.xlu0 %2170, %v229
  %v2172 = vpop.permute.xlu0 %2171
  %2174 = vset.pattern.permute.xlu0 1
  %2175 = vperm.xlu0 %2174, %v230
  %v2176 = vpop.permute.xlu0 %2175
  %2178 = vset.pattern.permute.xlu0 1
  %2179 = vperm.xlu0 %2178, %v231
  %v2180 = vpop.permute.xlu0 %2179
  %2182 = vset.pattern.permute.xlu0 1
  %2183 = vperm.xlu0 %2182, %v232
  %v2184 = vpop.permute.xlu0 %2183
  %2186 = vset.pattern.permute.xlu0 1
  %2187 = vperm.xlu0 %2186, %v233
  %v2188 = vpop.permute.xlu0 %2187
  %2190 = vset.pattern.permute.xlu0 1
  %2191 = vperm.xlu0 %2190, %v234
  %v2192 = vpop.permute.xlu0 %2191
  %2194 = vset.pattern.permute.xlu0 1
  %2195 = vperm.xlu0 %2194, %v235
  %v2196 = vpop.permute.xlu0 %2195
  %2198 = vset.pattern.permute.xlu0 1
  %2199 = vperm.xlu0 %2198, %v236
  %v2200 = vpop.permute.xlu0 %2199
  %2202 = vset.pattern.permute.xlu0 1
  %2203 = vperm.xlu0 %2202, %v237
  %v2204 = vpop.permute.xlu0 %2203
  %2206 = vset.pattern.permute.xlu0 1
  %2207 = vperm.xlu0 %2206, %v238
  %v2208 = vpop.permute.xlu0 %2207
  %2210 = vset.pattern.permute.xlu0 1
  %2211 = vperm.xlu0 %2210, %v239
  %v2212 = vpop.permute.xlu0 %2211
  %2214 = vset.pattern.permute.xlu0 1
  %2215 = vperm.xlu0 %2214, %v240
  %v2216 = vpop.permute.xlu0 %2215
  %2218 = vset.pattern.permute.xlu0 1
  %2219 = vperm.xlu0 %2218, %v241
  %v2220 = vpop.permute.xlu0 %2219
  %2222 = vset.pattern.permute.xlu0 1
  %2223 = vperm.xlu0 %2222, %v242
  %v2224 = vpop.permute.xlu0 %2223
  %2226 = vset.pattern.permute.xlu0 1
  %2227 = vperm.xlu0 %2226, %v243
  %v2228 = vpop.permute.xlu0 %2227
  %2230 = vset.pattern.permute.xlu0 1
  %2231 = vperm.xlu0 %2230, %v244
  %v2232 = vpop.permute.xlu0 %2231
  %2234 = vset.pattern.permute.xlu0 1
  %2235 = vperm.xlu0 %2234, %v245
  %v2236 = vpop.permute.xlu0 %2235
  %2238 = vset.pattern.permute.xlu0 1
  %2239 = vperm.xlu0 %2238, %v246
  %v2240 = vpop.permute.xlu0 %2239
  %2242 = vset.pattern.permute.xlu0 1
  %2243 = vperm.xlu0 %2242, %v247
  %v2244 = vpop.permute.xlu0 %2243
  %2246 = vset.pattern.permute.xlu0 1
  %2247 = vperm.xlu0 %2246, %v248
  %v2248 = vpop.permute.xlu0 %2247
  %2250 = vset.pattern.permute.xlu0 1
  %2251 = vperm.xlu0 %2250, %v249
  %v2252 = vpop.permute.xlu0 %2251
  %2254 = vset.pattern.permute.xlu0 1
  %2255 = vperm.xlu0 %2254, %v250
  %v2256 = vpop.permute.xlu0 %2255
  %2258 = vset.pattern.permute.xlu0 1
  %2259 = vperm.xlu0 %2258, %v251
  %v2260 = vpop.permute.xlu0 %2259
  %2262 = vset.pattern.permute.xlu0 1
  %2263 = vperm.xlu0 %2262, %v252
  %v2264 = vpop.permute.xlu0 %2263
  %2266 = vset.pattern.permute.xlu0 1
  %2267 = vperm.xlu0 %2266, %v253
  %v2268 = vpop.permute.xlu0 %2267
  %2270 = vset.pattern.permute.xlu0 1
  %2271 = vperm.xlu0 %2270, %v254
  %v2272 = vpop.permute.xlu0 %2271
  %2274 = vset.pattern.permute.xlu0 1
  %2275 = vperm.xlu0 %2274, %v255
  %v2276 = vpop.permute.xlu0 %2275
  %2278 = vset.pattern.permute.xlu0 1
  %2279 = vperm.xlu0 %2278, %v256
  %v2280 = vpop.permute.xlu0 %2279
  %2282 = vset.pattern.permute.xlu0 1
  %2283 = vperm.xlu0 %2282, %v257
  %v2284 = vpop.permute.xlu0 %2283
  %2286 = vset.pattern.permute.xlu0 1
  %2287 = vperm.xlu0 %2286, %v258
  %v2288 = vpop.permute.xlu0 %2287
  %2290 = vset.pattern.permute.xlu0 1
  %2291 = vperm.xlu0 %2290, %v259
  %v2292 = vpop.permute.xlu0 %2291
  %2294 = vset.pattern.permute.xlu0 1
  %2295 = vperm.xlu0 %2294, %v260
  %v2296 = vpop.permute.xlu0 %2295
  %2298 = vset.pattern.permute.xlu0 1
  %2299 = vperm.xlu0 %2298, %v261
  %v2300 = vpop.permute.xlu0 %2299
  %2302 = vset.pattern.permute.xlu0 1
  %2303 = vperm.xlu0 %2302, %v262
  %v2304 = vpop.permute.xlu0 %2303
  %2306 = vset.pattern.permute.xlu0 1
  %2307 = vperm.xlu0 %2306, %v263
  %v2308 = vpop.permute.xlu0 %2307
  %2310 = vset.pattern.permute.xlu0 1
  %2311 = vperm.xlu0 %2310, %v264
  %v2312 = vpop.permute.xlu0 %2311
  %2314 = vset.pattern.permute.xlu0 1
  %2315 = vperm.xlu0 %2314, %v265
  %v2316 = vpop.permute.xlu0 %2315
  %2318 = vset.pattern.permute.xlu0 1
  %2319 = vperm.xlu0 %2318, %v266
  %v2320 = vpop.permute.xlu0 %2319
  %2322 = vset.pattern.permute.xlu0 1
  %2323 = vperm.xlu0 %2322, %v267
  %v2324 = vpop.permute.xlu0 %2323
  %2326 = vset.pattern.permute.xlu0 1
  %2327 = vperm.xlu0 %2326, %v268
  %v2328 = vpop.permute.xlu0 %2327
  %2330 = vset.pattern.permute.xlu0 1
  %2331 = vperm.xlu0 %2330, %v269
  %v2332 = vpop.permute.xlu0 %2331
  %2334 = vset.pattern.permute.xlu0 1
  %2335 = vperm.xlu0 %2334, %v270
  %v2336 = vpop.permute.xlu0 %2335
  %2338 = vset.pattern.permute.xlu0 1
  %2339 = vperm.xlu0 %2338, %v271
  %v2340 = vpop.permute.xlu0 %2339
  %v2342 = vlaneseq
  %v2343 = vshrl.u32 %v2342, 7
  %v2344 = vsub.s32 0, %v2343
  %v2345 = vrot.slane %v1825, %v2344
  %v2346 = vmul.f32 %v1828, %v2345
  %v2347 = vmul.f32 %v1832, %v2345
  %v2348 = vmul.f32 %v1836, %v2345
  %v2349 = vmul.f32 %v1840, %v2345
  %v2350 = vmul.f32 %v1844, %v2345
  %v2351 = vmul.f32 %v1848, %v2345
  %v2352 = vmul.f32 %v1852, %v2345
  %v2353 = vmul.f32 %v1856, %v2345
  %v2354 = vmul.f32 %v1860, %v2345
  %v2355 = vmul.f32 %v1864, %v2345
  %v2356 = vmul.f32 %v1868, %v2345
  %v2357 = vmul.f32 %v1872, %v2345
  %v2358 = vmul.f32 %v1876, %v2345
  %v2359 = vmul.f32 %v1880, %v2345
  %v2360 = vmul.f32 %v1884, %v2345
  %v2361 = vmul.f32 %v1888, %v2345
  %v2362 = vmul.f32 %v1892, %v2345
  %v2363 = vmul.f32 %v1896, %v2345
  %v2364 = vmul.f32 %v1900, %v2345
  %v2365 = vmul.f32 %v1904, %v2345
  %v2366 = vmul.f32 %v1908, %v2345
  %v2367 = vmul.f32 %v1912, %v2345
  %v2368 = vmul.f32 %v1916, %v2345
  %v2369 = vmul.f32 %v1920, %v2345
  %v2370 = vmul.f32 %v1924, %v2345
  %v2371 = vmul.f32 %v1928, %v2345
  %v2372 = vmul.f32 %v1932, %v2345
  %v2373 = vmul.f32 %v1936, %v2345
  %v2374 = vmul.f32 %v1940, %v2345
  %v2375 = vmul.f32 %v1944, %v2345
  %v2376 = vmul.f32 %v1948, %v2345
  %v2377 = vmul.f32 %v1952, %v2345
  %v2378 = vmul.f32 %v1956, %v2345
  %v2379 = vmul.f32 %v1960, %v2345
  %v2380 = vmul.f32 %v1964, %v2345
  %v2381 = vmul.f32 %v1968, %v2345
  %v2382 = vmul.f32 %v1972, %v2345
  %v2383 = vmul.f32 %v1976, %v2345
  %v2384 = vmul.f32 %v1980, %v2345
  %v2385 = vmul.f32 %v1984, %v2345
  %v2386 = vmul.f32 %v1988, %v2345
  %v2387 = vmul.f32 %v1992, %v2345
  %v2388 = vmul.f32 %v1996, %v2345
  %v2389 = vmul.f32 %v2000, %v2345
  %v2390 = vmul.f32 %v2004, %v2345
  %v2391 = vmul.f32 %v2008, %v2345
  %v2392 = vmul.f32 %v2012, %v2345
  %v2393 = vmul.f32 %v2016, %v2345
  %v2394 = vmul.f32 %v2020, %v2345
  %v2395 = vmul.f32 %v2024, %v2345
  %v2396 = vmul.f32 %v2028, %v2345
  %v2397 = vmul.f32 %v2032, %v2345
  %v2398 = vmul.f32 %v2036, %v2345
  %v2399 = vmul.f32 %v2040, %v2345
  %v2400 = vmul.f32 %v2044, %v2345
  %v2401 = vmul.f32 %v2048, %v2345
  %v2402 = vmul.f32 %v2052, %v2345
  %v2403 = vmul.f32 %v2056, %v2345
  %v2404 = vmul.f32 %v2060, %v2345
  %v2405 = vmul.f32 %v2064, %v2345
  %v2406 = vmul.f32 %v2068, %v2345
  %v2407 = vmul.f32 %v2072, %v2345
  %v2408 = vmul.f32 %v2076, %v2345
  %v2409 = vmul.f32 %v2080, %v2345
  %v2410 = vmul.f32 %v2084, %v2345
  %v2411 = vmul.f32 %v2088, %v2345
  %v2412 = vmul.f32 %v2092, %v2345
  %v2413 = vmul.f32 %v2096, %v2345
  %v2414 = vmul.f32 %v2100, %v2345
  %v2415 = vmul.f32 %v2104, %v2345
  %v2416 = vmul.f32 %v2108, %v2345
  %v2417 = vmul.f32 %v2112, %v2345
  %v2418 = vmul.f32 %v2116, %v2345
  %v2419 = vmul.f32 %v2120, %v2345
  %v2420 = vmul.f32 %v2124, %v2345
  %v2421 = vmul.f32 %v2128, %v2345
  %v2422 = vmul.f32 %v2132, %v2345
  %v2423 = vmul.f32 %v2136, %v2345
  %v2424 = vmul.f32 %v2140, %v2345
  %v2425 = vmul.f32 %v2144, %v2345
  %v2426 = vmul.f32 %v2148, %v2345
  %v2427 = vmul.f32 %v2152, %v2345
  %v2428 = vmul.f32 %v2156, %v2345
  %v2429 = vmul.f32 %v2160, %v2345
  %v2430 = vmul.f32 %v2164, %v2345
  %v2431 = vmul.f32 %v2168, %v2345
  %v2432 = vmul.f32 %v2172, %v2345
  %v2433 = vmul.f32 %v2176, %v2345
  %v2434 = vmul.f32 %v2180, %v2345
  %v2435 = vmul.f32 %v2184, %v2345
  %v2436 = vmul.f32 %v2188, %v2345
  %v2437 = vmul.f32 %v2192, %v2345
  %v2438 = vmul.f32 %v2196, %v2345
  %v2439 = vmul.f32 %v2200, %v2345
  %v2440 = vmul.f32 %v2204, %v2345
  %v2441 = vmul.f32 %v2208, %v2345
  %v2442 = vmul.f32 %v2212, %v2345
  %v2443 = vmul.f32 %v2216, %v2345
  %v2444 = vmul.f32 %v2220, %v2345
  %v2445 = vmul.f32 %v2224, %v2345
  %v2446 = vmul.f32 %v2228, %v2345
  %v2447 = vmul.f32 %v2232, %v2345
  %v2448 = vmul.f32 %v2236, %v2345
  %v2449 = vmul.f32 %v2240, %v2345
  %v2450 = vmul.f32 %v2244, %v2345
  %v2451 = vmul.f32 %v2248, %v2345
  %v2452 = vmul.f32 %v2252, %v2345
  %v2453 = vmul.f32 %v2256, %v2345
  %v2454 = vmul.f32 %v2260, %v2345
  %v2455 = vmul.f32 %v2264, %v2345
  %v2456 = vmul.f32 %v2268, %v2345
  %v2457 = vmul.f32 %v2272, %v2345
  %v2458 = vmul.f32 %v2276, %v2345
  %v2459 = vmul.f32 %v2280, %v2345
  %v2460 = vmul.f32 %v2284, %v2345
  %v2461 = vmul.f32 %v2288, %v2345
  %v2462 = vmul.f32 %v2292, %v2345
  %v2463 = vmul.f32 %v2296, %v2345
  %v2464 = vmul.f32 %v2300, %v2345
  %v2465 = vmul.f32 %v2304, %v2345
  %v2466 = vmul.f32 %v2308, %v2345
  %v2467 = vmul.f32 %v2312, %v2345
  %v2468 = vmul.f32 %v2316, %v2345
  %v2469 = vmul.f32 %v2320, %v2345
  %v2470 = vmul.f32 %v2324, %v2345
  %v2471 = vmul.f32 %v2328, %v2345
  %v2472 = vmul.f32 %v2332, %v2345
  %v2473 = vmul.f32 %v2336, %v2345
  %v2474 = vmul.f32 %v2340, %v2345
  %v2475 = vadd.f32 %v1696, %v2346
  %v2476 = vadd.f32 %v1697, %v2347
  %v2477 = vadd.f32 %v1698, %v2348
  %v2478 = vadd.f32 %v1699, %v2349
  %v2479 = vadd.f32 %v1700, %v2350
  %v2480 = vadd.f32 %v1701, %v2351
  %v2481 = vadd.f32 %v1702, %v2352
  %v2482 = vadd.f32 %v1703, %v2353
  %v2483 = vadd.f32 %v1704, %v2354
  %v2484 = vadd.f32 %v1705, %v2355
  %v2485 = vadd.f32 %v1706, %v2356
  %v2486 = vadd.f32 %v1707, %v2357
  %v2487 = vadd.f32 %v1708, %v2358
  %v2488 = vadd.f32 %v1709, %v2359
  %v2489 = vadd.f32 %v1710, %v2360
  %v2490 = vadd.f32 %v1711, %v2361
  %v2491 = vadd.f32 %v1712, %v2362
  %v2492 = vadd.f32 %v1713, %v2363
  %v2493 = vadd.f32 %v1714, %v2364
  %v2494 = vadd.f32 %v1715, %v2365
  %v2495 = vadd.f32 %v1716, %v2366
  %v2496 = vadd.f32 %v1717, %v2367
  %v2497 = vadd.f32 %v1718, %v2368
  %v2498 = vadd.f32 %v1719, %v2369
  %v2499 = vadd.f32 %v1720, %v2370
  %v2500 = vadd.f32 %v1721, %v2371
  %v2501 = vadd.f32 %v1722, %v2372
  %v2502 = vadd.f32 %v1723, %v2373
  %v2503 = vadd.f32 %v1724, %v2374
  %v2504 = vadd.f32 %v1725, %v2375
  %v2505 = vadd.f32 %v1726, %v2376
  %v2506 = vadd.f32 %v1727, %v2377
  %v2507 = vadd.f32 %v1728, %v2378
  %v2508 = vadd.f32 %v1729, %v2379
  %v2509 = vadd.f32 %v1730, %v2380
  %v2510 = vadd.f32 %v1731, %v2381
  %v2511 = vadd.f32 %v1732, %v2382
  %v2512 = vadd.f32 %v1733, %v2383
  %v2513 = vadd.f32 %v1734, %v2384
  %v2514 = vadd.f32 %v1735, %v2385
  %v2515 = vadd.f32 %v1736, %v2386
  %v2516 = vadd.f32 %v1737, %v2387
  %v2517 = vadd.f32 %v1738, %v2388
  %v2518 = vadd.f32 %v1739, %v2389
  %v2519 = vadd.f32 %v1740, %v2390
  %v2520 = vadd.f32 %v1741, %v2391
  %v2521 = vadd.f32 %v1742, %v2392
  %v2522 = vadd.f32 %v1743, %v2393
  %v2523 = vadd.f32 %v1744, %v2394
  %v2524 = vadd.f32 %v1745, %v2395
  %v2525 = vadd.f32 %v1746, %v2396
  %v2526 = vadd.f32 %v1747, %v2397
  %v2527 = vadd.f32 %v1748, %v2398
  %v2528 = vadd.f32 %v1749, %v2399
  %v2529 = vadd.f32 %v1750, %v2400
  %v2530 = vadd.f32 %v1751, %v2401
  %v2531 = vadd.f32 %v1752, %v2402
  %v2532 = vadd.f32 %v1753, %v2403
  %v2533 = vadd.f32 %v1754, %v2404
  %v2534 = vadd.f32 %v1755, %v2405
  %v2535 = vadd.f32 %v1756, %v2406
  %v2536 = vadd.f32 %v1757, %v2407
  %v2537 = vadd.f32 %v1758, %v2408
  %v2538 = vadd.f32 %v1759, %v2409
  %v2539 = vadd.f32 %v1760, %v2410
  %v2540 = vadd.f32 %v1761, %v2411
  %v2541 = vadd.f32 %v1762, %v2412
  %v2542 = vadd.f32 %v1763, %v2413
  %v2543 = vadd.f32 %v1764, %v2414
  %v2544 = vadd.f32 %v1765, %v2415
  %v2545 = vadd.f32 %v1766, %v2416
  %v2546 = vadd.f32 %v1767, %v2417
  %v2547 = vadd.f32 %v1768, %v2418
  %v2548 = vadd.f32 %v1769, %v2419
  %v2549 = vadd.f32 %v1770, %v2420
  %v2550 = vadd.f32 %v1771, %v2421
  %v2551 = vadd.f32 %v1772, %v2422
  %v2552 = vadd.f32 %v1773, %v2423
  %v2553 = vadd.f32 %v1774, %v2424
  %v2554 = vadd.f32 %v1775, %v2425
  %v2555 = vadd.f32 %v1776, %v2426
  %v2556 = vadd.f32 %v1777, %v2427
  %v2557 = vadd.f32 %v1778, %v2428
  %v2558 = vadd.f32 %v1779, %v2429
  %v2559 = vadd.f32 %v1780, %v2430
  %v2560 = vadd.f32 %v1781, %v2431
  %v2561 = vadd.f32 %v1782, %v2432
  %v2562 = vadd.f32 %v1783, %v2433
  %v2563 = vadd.f32 %v1784, %v2434
  %v2564 = vadd.f32 %v1785, %v2435
  %v2565 = vadd.f32 %v1786, %v2436
  %v2566 = vadd.f32 %v1787, %v2437
  %v2567 = vadd.f32 %v1788, %v2438
  %v2568 = vadd.f32 %v1789, %v2439
  %v2569 = vadd.f32 %v1790, %v2440
  %v2570 = vadd.f32 %v1791, %v2441
  %v2571 = vadd.f32 %v1792, %v2442
  %v2572 = vadd.f32 %v1793, %v2443
  %v2573 = vadd.f32 %v1794, %v2444
  %v2574 = vadd.f32 %v1795, %v2445
  %v2575 = vadd.f32 %v1796, %v2446
  %v2576 = vadd.f32 %v1797, %v2447
  %v2577 = vadd.f32 %v1798, %v2448
  %v2578 = vadd.f32 %v1799, %v2449
  %v2579 = vadd.f32 %v1800, %v2450
  %v2580 = vadd.f32 %v1801, %v2451
  %v2581 = vadd.f32 %v1802, %v2452
  %v2582 = vadd.f32 %v1803, %v2453
  %v2583 = vadd.f32 %v1804, %v2454
  %v2584 = vadd.f32 %v1805, %v2455
  %v2585 = vadd.f32 %v1806, %v2456
  %v2586 = vadd.f32 %v1807, %v2457
  %v2587 = vadd.f32 %v1808, %v2458
  %v2588 = vadd.f32 %v1809, %v2459
  %v2589 = vadd.f32 %v1810, %v2460
  %v2590 = vadd.f32 %v1811, %v2461
  %v2591 = vadd.f32 %v1812, %v2462
  %v2592 = vadd.f32 %v1813, %v2463
  %v2593 = vadd.f32 %v1814, %v2464
  %v2594 = vadd.f32 %v1815, %v2465
  %v2595 = vadd.f32 %v1816, %v2466
  %v2596 = vadd.f32 %v1817, %v2467
  %v2597 = vadd.f32 %v1818, %v2468
  %v2598 = vadd.f32 %v1819, %v2469
  %v2599 = vadd.f32 %v1820, %v2470
  %v2600 = vadd.f32 %v1821, %v2471
  %v2601 = vadd.f32 %v1822, %v2472
  %v2602 = vadd.f32 %v1823, %v2473
  %v2603 = vadd.f32 %v1824, %v2474
  %v2604 = vld [vmem:[%s0 + $0x2] sm:$0x1]
  %2605 = vset.pattern.permute.xlu0 2
  %2606 = vperm.xlu0 %2605, %v143
  %v2607 = vpop.permute.xlu0 %2606
  %2609 = vset.pattern.permute.xlu0 2
  %2610 = vperm.xlu0 %2609, %v144
  %v2611 = vpop.permute.xlu0 %2610
  %2613 = vset.pattern.permute.xlu0 2
  %2614 = vperm.xlu0 %2613, %v145
  %v2615 = vpop.permute.xlu0 %2614
  %2617 = vset.pattern.permute.xlu0 2
  %2618 = vperm.xlu0 %2617, %v146
  %v2619 = vpop.permute.xlu0 %2618
  %2621 = vset.pattern.permute.xlu0 2
  %2622 = vperm.xlu0 %2621, %v147
  %v2623 = vpop.permute.xlu0 %2622
  %2625 = vset.pattern.permute.xlu0 2
  %2626 = vperm.xlu0 %2625, %v148
  %v2627 = vpop.permute.xlu0 %2626
  %2629 = vset.pattern.permute.xlu0 2
  %2630 = vperm.xlu0 %2629, %v149
  %v2631 = vpop.permute.xlu0 %2630
  %2633 = vset.pattern.permute.xlu0 2
  %2634 = vperm.xlu0 %2633, %v150
  %v2635 = vpop.permute.xlu0 %2634
  %2637 = vset.pattern.permute.xlu0 2
  %2638 = vperm.xlu0 %2637, %v151
  %v2639 = vpop.permute.xlu0 %2638
  %2641 = vset.pattern.permute.xlu0 2
  %2642 = vperm.xlu0 %2641, %v152
  %v2643 = vpop.permute.xlu0 %2642
  %2645 = vset.pattern.permute.xlu0 2
  %2646 = vperm.xlu0 %2645, %v153
  %v2647 = vpop.permute.xlu0 %2646
  %2649 = vset.pattern.permute.xlu0 2
  %2650 = vperm.xlu0 %2649, %v154
  %v2651 = vpop.permute.xlu0 %2650
  %2653 = vset.pattern.permute.xlu0 2
  %2654 = vperm.xlu0 %2653, %v155
  %v2655 = vpop.permute.xlu0 %2654
  %2657 = vset.pattern.permute.xlu0 2
  %2658 = vperm.xlu0 %2657, %v156
  %v2659 = vpop.permute.xlu0 %2658
  %2661 = vset.pattern.permute.xlu0 2
  %2662 = vperm.xlu0 %2661, %v157
  %v2663 = vpop.permute.xlu0 %2662
  %2665 = vset.pattern.permute.xlu0 2
  %2666 = vperm.xlu0 %2665, %v158
  %v2667 = vpop.permute.xlu0 %2666
  %2669 = vset.pattern.permute.xlu0 2
  %2670 = vperm.xlu0 %2669, %v159
  %v2671 = vpop.permute.xlu0 %2670
  %2673 = vset.pattern.permute.xlu0 2
  %2674 = vperm.xlu0 %2673, %v160
  %v2675 = vpop.permute.xlu0 %2674
  %2677 = vset.pattern.permute.xlu0 2
  %2678 = vperm.xlu0 %2677, %v161
  %v2679 = vpop.permute.xlu0 %2678
  %2681 = vset.pattern.permute.xlu0 2
  %2682 = vperm.xlu0 %2681, %v162
  %v2683 = vpop.permute.xlu0 %2682
  %2685 = vset.pattern.permute.xlu0 2
  %2686 = vperm.xlu0 %2685, %v163
  %v2687 = vpop.permute.xlu0 %2686
  %2689 = vset.pattern.permute.xlu0 2
  %2690 = vperm.xlu0 %2689, %v164
  %v2691 = vpop.permute.xlu0 %2690
  %2693 = vset.pattern.permute.xlu0 2
  %2694 = vperm.xlu0 %2693, %v165
  %v2695 = vpop.permute.xlu0 %2694
  %2697 = vset.pattern.permute.xlu0 2
  %2698 = vperm.xlu0 %2697, %v166
  %v2699 = vpop.permute.xlu0 %2698
  %2701 = vset.pattern.permute.xlu0 2
  %2702 = vperm.xlu0 %2701, %v167
  %v2703 = vpop.permute.xlu0 %2702
  %2705 = vset.pattern.permute.xlu0 2
  %2706 = vperm.xlu0 %2705, %v168
  %v2707 = vpop.permute.xlu0 %2706
  %2709 = vset.pattern.permute.xlu0 2
  %2710 = vperm.xlu0 %2709, %v169
  %v2711 = vpop.permute.xlu0 %2710
  %2713 = vset.pattern.permute.xlu0 2
  %2714 = vperm.xlu0 %2713, %v170
  %v2715 = vpop.permute.xlu0 %2714
  %2717 = vset.pattern.permute.xlu0 2
  %2718 = vperm.xlu0 %2717, %v171
  %v2719 = vpop.permute.xlu0 %2718
  %2721 = vset.pattern.permute.xlu0 2
  %2722 = vperm.xlu0 %2721, %v172
  %v2723 = vpop.permute.xlu0 %2722
  %2725 = vset.pattern.permute.xlu0 2
  %2726 = vperm.xlu0 %2725, %v173
  %v2727 = vpop.permute.xlu0 %2726
  %2729 = vset.pattern.permute.xlu0 2
  %2730 = vperm.xlu0 %2729, %v174
  %v2731 = vpop.permute.xlu0 %2730
  %2733 = vset.pattern.permute.xlu0 2
  %2734 = vperm.xlu0 %2733, %v175
  %v2735 = vpop.permute.xlu0 %2734
  %2737 = vset.pattern.permute.xlu0 2
  %2738 = vperm.xlu0 %2737, %v176
  %v2739 = vpop.permute.xlu0 %2738
  %2741 = vset.pattern.permute.xlu0 2
  %2742 = vperm.xlu0 %2741, %v177
  %v2743 = vpop.permute.xlu0 %2742
  %2745 = vset.pattern.permute.xlu0 2
  %2746 = vperm.xlu0 %2745, %v178
  %v2747 = vpop.permute.xlu0 %2746
  %2749 = vset.pattern.permute.xlu0 2
  %2750 = vperm.xlu0 %2749, %v179
  %v2751 = vpop.permute.xlu0 %2750
  %2753 = vset.pattern.permute.xlu0 2
  %2754 = vperm.xlu0 %2753, %v180
  %v2755 = vpop.permute.xlu0 %2754
  %2757 = vset.pattern.permute.xlu0 2
  %2758 = vperm.xlu0 %2757, %v181
  %v2759 = vpop.permute.xlu0 %2758
  %2761 = vset.pattern.permute.xlu0 2
  %2762 = vperm.xlu0 %2761, %v182
  %v2763 = vpop.permute.xlu0 %2762
  %2765 = vset.pattern.permute.xlu0 2
  %2766 = vperm.xlu0 %2765, %v183
  %v2767 = vpop.permute.xlu0 %2766
  %2769 = vset.pattern.permute.xlu0 2
  %2770 = vperm.xlu0 %2769, %v184
  %v2771 = vpop.permute.xlu0 %2770
  %2773 = vset.pattern.permute.xlu0 2
  %2774 = vperm.xlu0 %2773, %v185
  %v2775 = vpop.permute.xlu0 %2774
  %2777 = vset.pattern.permute.xlu0 2
  %2778 = vperm.xlu0 %2777, %v186
  %v2779 = vpop.permute.xlu0 %2778
  %2781 = vset.pattern.permute.xlu0 2
  %2782 = vperm.xlu0 %2781, %v187
  %v2783 = vpop.permute.xlu0 %2782
  %2785 = vset.pattern.permute.xlu0 2
  %2786 = vperm.xlu0 %2785, %v188
  %v2787 = vpop.permute.xlu0 %2786
  %2789 = vset.pattern.permute.xlu0 2
  %2790 = vperm.xlu0 %2789, %v189
  %v2791 = vpop.permute.xlu0 %2790
  %2793 = vset.pattern.permute.xlu0 2
  %2794 = vperm.xlu0 %2793, %v190
  %v2795 = vpop.permute.xlu0 %2794
  %2797 = vset.pattern.permute.xlu0 2
  %2798 = vperm.xlu0 %2797, %v191
  %v2799 = vpop.permute.xlu0 %2798
  %2801 = vset.pattern.permute.xlu0 2
  %2802 = vperm.xlu0 %2801, %v192
  %v2803 = vpop.permute.xlu0 %2802
  %2805 = vset.pattern.permute.xlu0 2
  %2806 = vperm.xlu0 %2805, %v193
  %v2807 = vpop.permute.xlu0 %2806
  %2809 = vset.pattern.permute.xlu0 2
  %2810 = vperm.xlu0 %2809, %v194
  %v2811 = vpop.permute.xlu0 %2810
  %2813 = vset.pattern.permute.xlu0 2
  %2814 = vperm.xlu0 %2813, %v195
  %v2815 = vpop.permute.xlu0 %2814
  %2817 = vset.pattern.permute.xlu0 2
  %2818 = vperm.xlu0 %2817, %v196
  %v2819 = vpop.permute.xlu0 %2818
  %2821 = vset.pattern.permute.xlu0 2
  %2822 = vperm.xlu0 %2821, %v197
  %v2823 = vpop.permute.xlu0 %2822
  %2825 = vset.pattern.permute.xlu0 2
  %2826 = vperm.xlu0 %2825, %v198
  %v2827 = vpop.permute.xlu0 %2826
  %2829 = vset.pattern.permute.xlu0 2
  %2830 = vperm.xlu0 %2829, %v199
  %v2831 = vpop.permute.xlu0 %2830
  %2833 = vset.pattern.permute.xlu0 2
  %2834 = vperm.xlu0 %2833, %v200
  %v2835 = vpop.permute.xlu0 %2834
  %2837 = vset.pattern.permute.xlu0 2
  %2838 = vperm.xlu0 %2837, %v201
  %v2839 = vpop.permute.xlu0 %2838
  %2841 = vset.pattern.permute.xlu0 2
  %2842 = vperm.xlu0 %2841, %v202
  %v2843 = vpop.permute.xlu0 %2842
  %2845 = vset.pattern.permute.xlu0 2
  %2846 = vperm.xlu0 %2845, %v203
  %v2847 = vpop.permute.xlu0 %2846
  %2849 = vset.pattern.permute.xlu0 2
  %2850 = vperm.xlu0 %2849, %v204
  %v2851 = vpop.permute.xlu0 %2850
  %2853 = vset.pattern.permute.xlu0 2
  %2854 = vperm.xlu0 %2853, %v205
  %v2855 = vpop.permute.xlu0 %2854
  %2857 = vset.pattern.permute.xlu0 2
  %2858 = vperm.xlu0 %2857, %v206
  %v2859 = vpop.permute.xlu0 %2858
  %2861 = vset.pattern.permute.xlu0 2
  %2862 = vperm.xlu0 %2861, %v207
  %v2863 = vpop.permute.xlu0 %2862
  %2865 = vset.pattern.permute.xlu0 2
  %2866 = vperm.xlu0 %2865, %v208
  %v2867 = vpop.permute.xlu0 %2866
  %2869 = vset.pattern.permute.xlu0 2
  %2870 = vperm.xlu0 %2869, %v209
  %v2871 = vpop.permute.xlu0 %2870
  %2873 = vset.pattern.permute.xlu0 2
  %2874 = vperm.xlu0 %2873, %v210
  %v2875 = vpop.permute.xlu0 %2874
  %2877 = vset.pattern.permute.xlu0 2
  %2878 = vperm.xlu0 %2877, %v211
  %v2879 = vpop.permute.xlu0 %2878
  %2881 = vset.pattern.permute.xlu0 2
  %2882 = vperm.xlu0 %2881, %v212
  %v2883 = vpop.permute.xlu0 %2882
  %2885 = vset.pattern.permute.xlu0 2
  %2886 = vperm.xlu0 %2885, %v213
  %v2887 = vpop.permute.xlu0 %2886
  %2889 = vset.pattern.permute.xlu0 2
  %2890 = vperm.xlu0 %2889, %v214
  %v2891 = vpop.permute.xlu0 %2890
  %2893 = vset.pattern.permute.xlu0 2
  %2894 = vperm.xlu0 %2893, %v215
  %v2895 = vpop.permute.xlu0 %2894
  %2897 = vset.pattern.permute.xlu0 2
  %2898 = vperm.xlu0 %2897, %v216
  %v2899 = vpop.permute.xlu0 %2898
  %2901 = vset.pattern.permute.xlu0 2
  %2902 = vperm.xlu0 %2901, %v217
  %v2903 = vpop.permute.xlu0 %2902
  %2905 = vset.pattern.permute.xlu0 2
  %2906 = vperm.xlu0 %2905, %v218
  %v2907 = vpop.permute.xlu0 %2906
  %2909 = vset.pattern.permute.xlu0 2
  %2910 = vperm.xlu0 %2909, %v219
  %v2911 = vpop.permute.xlu0 %2910
  %2913 = vset.pattern.permute.xlu0 2
  %2914 = vperm.xlu0 %2913, %v220
  %v2915 = vpop.permute.xlu0 %2914
  %2917 = vset.pattern.permute.xlu0 2
  %2918 = vperm.xlu0 %2917, %v221
  %v2919 = vpop.permute.xlu0 %2918
  %2921 = vset.pattern.permute.xlu0 2
  %2922 = vperm.xlu0 %2921, %v222
  %v2923 = vpop.permute.xlu0 %2922
  %2925 = vset.pattern.permute.xlu0 2
  %2926 = vperm.xlu0 %2925, %v223
  %v2927 = vpop.permute.xlu0 %2926
  %2929 = vset.pattern.permute.xlu0 2
  %2930 = vperm.xlu0 %2929, %v224
  %v2931 = vpop.permute.xlu0 %2930
  %2933 = vset.pattern.permute.xlu0 2
  %2934 = vperm.xlu0 %2933, %v225
  %v2935 = vpop.permute.xlu0 %2934
  %2937 = vset.pattern.permute.xlu0 2
  %2938 = vperm.xlu0 %2937, %v226
  %v2939 = vpop.permute.xlu0 %2938
  %2941 = vset.pattern.permute.xlu0 2
  %2942 = vperm.xlu0 %2941, %v227
  %v2943 = vpop.permute.xlu0 %2942
  %2945 = vset.pattern.permute.xlu0 2
  %2946 = vperm.xlu0 %2945, %v228
  %v2947 = vpop.permute.xlu0 %2946
  %2949 = vset.pattern.permute.xlu0 2
  %2950 = vperm.xlu0 %2949, %v229
  %v2951 = vpop.permute.xlu0 %2950
  %2953 = vset.pattern.permute.xlu0 2
  %2954 = vperm.xlu0 %2953, %v230
  %v2955 = vpop.permute.xlu0 %2954
  %2957 = vset.pattern.permute.xlu0 2
  %2958 = vperm.xlu0 %2957, %v231
  %v2959 = vpop.permute.xlu0 %2958
  %2961 = vset.pattern.permute.xlu0 2
  %2962 = vperm.xlu0 %2961, %v232
  %v2963 = vpop.permute.xlu0 %2962
  %2965 = vset.pattern.permute.xlu0 2
  %2966 = vperm.xlu0 %2965, %v233
  %v2967 = vpop.permute.xlu0 %2966
  %2969 = vset.pattern.permute.xlu0 2
  %2970 = vperm.xlu0 %2969, %v234
  %v2971 = vpop.permute.xlu0 %2970
  %2973 = vset.pattern.permute.xlu0 2
  %2974 = vperm.xlu0 %2973, %v235
  %v2975 = vpop.permute.xlu0 %2974
  %2977 = vset.pattern.permute.xlu0 2
  %2978 = vperm.xlu0 %2977, %v236
  %v2979 = vpop.permute.xlu0 %2978
  %2981 = vset.pattern.permute.xlu0 2
  %2982 = vperm.xlu0 %2981, %v237
  %v2983 = vpop.permute.xlu0 %2982
  %2985 = vset.pattern.permute.xlu0 2
  %2986 = vperm.xlu0 %2985, %v238
  %v2987 = vpop.permute.xlu0 %2986
  %2989 = vset.pattern.permute.xlu0 2
  %2990 = vperm.xlu0 %2989, %v239
  %v2991 = vpop.permute.xlu0 %2990
  %2993 = vset.pattern.permute.xlu0 2
  %2994 = vperm.xlu0 %2993, %v240
  %v2995 = vpop.permute.xlu0 %2994
  %2997 = vset.pattern.permute.xlu0 2
  %2998 = vperm.xlu0 %2997, %v241
  %v2999 = vpop.permute.xlu0 %2998
  %3001 = vset.pattern.permute.xlu0 2
  %3002 = vperm.xlu0 %3001, %v242
  %v3003 = vpop.permute.xlu0 %3002
  %3005 = vset.pattern.permute.xlu0 2
  %3006 = vperm.xlu0 %3005, %v243
  %v3007 = vpop.permute.xlu0 %3006
  %3009 = vset.pattern.permute.xlu0 2
  %3010 = vperm.xlu0 %3009, %v244
  %v3011 = vpop.permute.xlu0 %3010
  %3013 = vset.pattern.permute.xlu0 2
  %3014 = vperm.xlu0 %3013, %v245
  %v3015 = vpop.permute.xlu0 %3014
  %3017 = vset.pattern.permute.xlu0 2
  %3018 = vperm.xlu0 %3017, %v246
  %v3019 = vpop.permute.xlu0 %3018
  %3021 = vset.pattern.permute.xlu0 2
  %3022 = vperm.xlu0 %3021, %v247
  %v3023 = vpop.permute.xlu0 %3022
  %3025 = vset.pattern.permute.xlu0 2
  %3026 = vperm.xlu0 %3025, %v248
  %v3027 = vpop.permute.xlu0 %3026
  %3029 = vset.pattern.permute.xlu0 2
  %3030 = vperm.xlu0 %3029, %v249
  %v3031 = vpop.permute.xlu0 %3030
  %3033 = vset.pattern.permute.xlu0 2
  %3034 = vperm.xlu0 %3033, %v250
  %v3035 = vpop.permute.xlu0 %3034
  %3037 = vset.pattern.permute.xlu0 2
  %3038 = vperm.xlu0 %3037, %v251
  %v3039 = vpop.permute.xlu0 %3038
  %3041 = vset.pattern.permute.xlu0 2
  %3042 = vperm.xlu0 %3041, %v252
  %v3043 = vpop.permute.xlu0 %3042
  %3045 = vset.pattern.permute.xlu0 2
  %3046 = vperm.xlu0 %3045, %v253
  %v3047 = vpop.permute.xlu0 %3046
  %3049 = vset.pattern.permute.xlu0 2
  %3050 = vperm.xlu0 %3049, %v254
  %v3051 = vpop.permute.xlu0 %3050
  %3053 = vset.pattern.permute.xlu0 2
  %3054 = vperm.xlu0 %3053, %v255
  %v3055 = vpop.permute.xlu0 %3054
  %3057 = vset.pattern.permute.xlu0 2
  %3058 = vperm.xlu0 %3057, %v256
  %v3059 = vpop.permute.xlu0 %3058
  %3061 = vset.pattern.permute.xlu0 2
  %3062 = vperm.xlu0 %3061, %v257
  %v3063 = vpop.permute.xlu0 %3062
  %3065 = vset.pattern.permute.xlu0 2
  %3066 = vperm.xlu0 %3065, %v258
  %v3067 = vpop.permute.xlu0 %3066
  %3069 = vset.pattern.permute.xlu0 2
  %3070 = vperm.xlu0 %3069, %v259
  %v3071 = vpop.permute.xlu0 %3070
  %3073 = vset.pattern.permute.xlu0 2
  %3074 = vperm.xlu0 %3073, %v260
  %v3075 = vpop.permute.xlu0 %3074
  %3077 = vset.pattern.permute.xlu0 2
  %3078 = vperm.xlu0 %3077, %v261
  %v3079 = vpop.permute.xlu0 %3078
  %3081 = vset.pattern.permute.xlu0 2
  %3082 = vperm.xlu0 %3081, %v262
  %v3083 = vpop.permute.xlu0 %3082
  %3085 = vset.pattern.permute.xlu0 2
  %3086 = vperm.xlu0 %3085, %v263
  %v3087 = vpop.permute.xlu0 %3086
  %3089 = vset.pattern.permute.xlu0 2
  %3090 = vperm.xlu0 %3089, %v264
  %v3091 = vpop.permute.xlu0 %3090
  %3093 = vset.pattern.permute.xlu0 2
  %3094 = vperm.xlu0 %3093, %v265
  %v3095 = vpop.permute.xlu0 %3094
  %3097 = vset.pattern.permute.xlu0 2
  %3098 = vperm.xlu0 %3097, %v266
  %v3099 = vpop.permute.xlu0 %3098
  %3101 = vset.pattern.permute.xlu0 2
  %3102 = vperm.xlu0 %3101, %v267
  %v3103 = vpop.permute.xlu0 %3102
  %3105 = vset.pattern.permute.xlu0 2
  %3106 = vperm.xlu0 %3105, %v268
  %v3107 = vpop.permute.xlu0 %3106
  %3109 = vset.pattern.permute.xlu0 2
  %3110 = vperm.xlu0 %3109, %v269
  %v3111 = vpop.permute.xlu0 %3110
  %3113 = vset.pattern.permute.xlu0 2
  %3114 = vperm.xlu0 %3113, %v270
  %v3115 = vpop.permute.xlu0 %3114
  %3117 = vset.pattern.permute.xlu0 2
  %3118 = vperm.xlu0 %3117, %v271
  %v3119 = vpop.permute.xlu0 %3118
  %v3121 = vlaneseq
  %v3122 = vshrl.u32 %v3121, 7
  %v3123 = vsub.s32 0, %v3122
  %v3124 = vrot.slane %v2604, %v3123
  %v3125 = vmul.f32 %v2607, %v3124
  %v3126 = vmul.f32 %v2611, %v3124
  %v3127 = vmul.f32 %v2615, %v3124
  %v3128 = vmul.f32 %v2619, %v3124
  %v3129 = vmul.f32 %v2623, %v3124
  %v3130 = vmul.f32 %v2627, %v3124
  %v3131 = vmul.f32 %v2631, %v3124
  %v3132 = vmul.f32 %v2635, %v3124
  %v3133 = vmul.f32 %v2639, %v3124
  %v3134 = vmul.f32 %v2643, %v3124
  %v3135 = vmul.f32 %v2647, %v3124
  %v3136 = vmul.f32 %v2651, %v3124
  %v3137 = vmul.f32 %v2655, %v3124
  %v3138 = vmul.f32 %v2659, %v3124
  %v3139 = vmul.f32 %v2663, %v3124
  %v3140 = vmul.f32 %v2667, %v3124
  %v3141 = vmul.f32 %v2671, %v3124
  %v3142 = vmul.f32 %v2675, %v3124
  %v3143 = vmul.f32 %v2679, %v3124
  %v3144 = vmul.f32 %v2683, %v3124
  %v3145 = vmul.f32 %v2687, %v3124
  %v3146 = vmul.f32 %v2691, %v3124
  %v3147 = vmul.f32 %v2695, %v3124
  %v3148 = vmul.f32 %v2699, %v3124
  %v3149 = vmul.f32 %v2703, %v3124
  %v3150 = vmul.f32 %v2707, %v3124
  %v3151 = vmul.f32 %v2711, %v3124
  %v3152 = vmul.f32 %v2715, %v3124
  %v3153 = vmul.f32 %v2719, %v3124
  %v3154 = vmul.f32 %v2723, %v3124
  %v3155 = vmul.f32 %v2727, %v3124
  %v3156 = vmul.f32 %v2731, %v3124
  %v3157 = vmul.f32 %v2735, %v3124
  %v3158 = vmul.f32 %v2739, %v3124
  %v3159 = vmul.f32 %v2743, %v3124
  %v3160 = vmul.f32 %v2747, %v3124
  %v3161 = vmul.f32 %v2751, %v3124
  %v3162 = vmul.f32 %v2755, %v3124
  %v3163 = vmul.f32 %v2759, %v3124
  %v3164 = vmul.f32 %v2763, %v3124
  %v3165 = vmul.f32 %v2767, %v3124
  %v3166 = vmul.f32 %v2771, %v3124
  %v3167 = vmul.f32 %v2775, %v3124
  %v3168 = vmul.f32 %v2779, %v3124
  %v3169 = vmul.f32 %v2783, %v3124
  %v3170 = vmul.f32 %v2787, %v3124
  %v3171 = vmul.f32 %v2791, %v3124
  %v3172 = vmul.f32 %v2795, %v3124
  %v3173 = vmul.f32 %v2799, %v3124
  %v3174 = vmul.f32 %v2803, %v3124
  %v3175 = vmul.f32 %v2807, %v3124
  %v3176 = vmul.f32 %v2811, %v3124
  %v3177 = vmul.f32 %v2815, %v3124
  %v3178 = vmul.f32 %v2819, %v3124
  %v3179 = vmul.f32 %v2823, %v3124
  %v3180 = vmul.f32 %v2827, %v3124
  %v3181 = vmul.f32 %v2831, %v3124
  %v3182 = vmul.f32 %v2835, %v3124
  %v3183 = vmul.f32 %v2839, %v3124
  %v3184 = vmul.f32 %v2843, %v3124
  %v3185 = vmul.f32 %v2847, %v3124
  %v3186 = vmul.f32 %v2851, %v3124
  %v3187 = vmul.f32 %v2855, %v3124
  %v3188 = vmul.f32 %v2859, %v3124
  %v3189 = vmul.f32 %v2863, %v3124
  %v3190 = vmul.f32 %v2867, %v3124
  %v3191 = vmul.f32 %v2871, %v3124
  %v3192 = vmul.f32 %v2875, %v3124
  %v3193 = vmul.f32 %v2879, %v3124
  %v3194 = vmul.f32 %v2883, %v3124
  %v3195 = vmul.f32 %v2887, %v3124
  %v3196 = vmul.f32 %v2891, %v3124
  %v3197 = vmul.f32 %v2895, %v3124
  %v3198 = vmul.f32 %v2899, %v3124
  %v3199 = vmul.f32 %v2903, %v3124
  %v3200 = vmul.f32 %v2907, %v3124
  %v3201 = vmul.f32 %v2911, %v3124
  %v3202 = vmul.f32 %v2915, %v3124
  %v3203 = vmul.f32 %v2919, %v3124
  %v3204 = vmul.f32 %v2923, %v3124
  %v3205 = vmul.f32 %v2927, %v3124
  %v3206 = vmul.f32 %v2931, %v3124
  %v3207 = vmul.f32 %v2935, %v3124
  %v3208 = vmul.f32 %v2939, %v3124
  %v3209 = vmul.f32 %v2943, %v3124
  %v3210 = vmul.f32 %v2947, %v3124
  %v3211 = vmul.f32 %v2951, %v3124
  %v3212 = vmul.f32 %v2955, %v3124
  %v3213 = vmul.f32 %v2959, %v3124
  %v3214 = vmul.f32 %v2963, %v3124
  %v3215 = vmul.f32 %v2967, %v3124
  %v3216 = vmul.f32 %v2971, %v3124
  %v3217 = vmul.f32 %v2975, %v3124
  %v3218 = vmul.f32 %v2979, %v3124
  %v3219 = vmul.f32 %v2983, %v3124
  %v3220 = vmul.f32 %v2987, %v3124
  %v3221 = vmul.f32 %v2991, %v3124
  %v3222 = vmul.f32 %v2995, %v3124
  %v3223 = vmul.f32 %v2999, %v3124
  %v3224 = vmul.f32 %v3003, %v3124
  %v3225 = vmul.f32 %v3007, %v3124
  %v3226 = vmul.f32 %v3011, %v3124
  %v3227 = vmul.f32 %v3015, %v3124
  %v3228 = vmul.f32 %v3019, %v3124
  %v3229 = vmul.f32 %v3023, %v3124
  %v3230 = vmul.f32 %v3027, %v3124
  %v3231 = vmul.f32 %v3031, %v3124
  %v3232 = vmul.f32 %v3035, %v3124
  %v3233 = vmul.f32 %v3039, %v3124
  %v3234 = vmul.f32 %v3043, %v3124
  %v3235 = vmul.f32 %v3047, %v3124
  %v3236 = vmul.f32 %v3051, %v3124
  %v3237 = vmul.f32 %v3055, %v3124
  %v3238 = vmul.f32 %v3059, %v3124
  %v3239 = vmul.f32 %v3063, %v3124
  %v3240 = vmul.f32 %v3067, %v3124
  %v3241 = vmul.f32 %v3071, %v3124
  %v3242 = vmul.f32 %v3075, %v3124
  %v3243 = vmul.f32 %v3079, %v3124
  %v3244 = vmul.f32 %v3083, %v3124
  %v3245 = vmul.f32 %v3087, %v3124
  %v3246 = vmul.f32 %v3091, %v3124
  %v3247 = vmul.f32 %v3095, %v3124
  %v3248 = vmul.f32 %v3099, %v3124
  %v3249 = vmul.f32 %v3103, %v3124
  %v3250 = vmul.f32 %v3107, %v3124
  %v3251 = vmul.f32 %v3111, %v3124
  %v3252 = vmul.f32 %v3115, %v3124
  %v3253 = vmul.f32 %v3119, %v3124
  %v3254 = vadd.f32 %v2475, %v3125
  %v3255 = vadd.f32 %v2476, %v3126
  %v3256 = vadd.f32 %v2477, %v3127
  %v3257 = vadd.f32 %v2478, %v3128
  %v3258 = vadd.f32 %v2479, %v3129
  %v3259 = vadd.f32 %v2480, %v3130
  %v3260 = vadd.f32 %v2481, %v3131
  %v3261 = vadd.f32 %v2482, %v3132
  %v3262 = vadd.f32 %v2483, %v3133
  %v3263 = vadd.f32 %v2484, %v3134
  %v3264 = vadd.f32 %v2485, %v3135
  %v3265 = vadd.f32 %v2486, %v3136
  %v3266 = vadd.f32 %v2487, %v3137
  %v3267 = vadd.f32 %v2488, %v3138
  %v3268 = vadd.f32 %v2489, %v3139
  %v3269 = vadd.f32 %v2490, %v3140
  %v3270 = vadd.f32 %v2491, %v3141
  %v3271 = vadd.f32 %v2492, %v3142
  %v3272 = vadd.f32 %v2493, %v3143
  %v3273 = vadd.f32 %v2494, %v3144
  %v3274 = vadd.f32 %v2495, %v3145
  %v3275 = vadd.f32 %v2496, %v3146
  %v3276 = vadd.f32 %v2497, %v3147
  %v3277 = vadd.f32 %v2498, %v3148
  %v3278 = vadd.f32 %v2499, %v3149
  %v3279 = vadd.f32 %v2500, %v3150
  %v3280 = vadd.f32 %v2501, %v3151
  %v3281 = vadd.f32 %v2502, %v3152
  %v3282 = vadd.f32 %v2503, %v3153
  %v3283 = vadd.f32 %v2504, %v3154
  %v3284 = vadd.f32 %v2505, %v3155
  %v3285 = vadd.f32 %v2506, %v3156
  %v3286 = vadd.f32 %v2507, %v3157
  %v3287 = vadd.f32 %v2508, %v3158
  %v3288 = vadd.f32 %v2509, %v3159
  %v3289 = vadd.f32 %v2510, %v3160
  %v3290 = vadd.f32 %v2511, %v3161
  %v3291 = vadd.f32 %v2512, %v3162
  %v3292 = vadd.f32 %v2513, %v3163
  %v3293 = vadd.f32 %v2514, %v3164
  %v3294 = vadd.f32 %v2515, %v3165
  %v3295 = vadd.f32 %v2516, %v3166
  %v3296 = vadd.f32 %v2517, %v3167
  %v3297 = vadd.f32 %v2518, %v3168
  %v3298 = vadd.f32 %v2519, %v3169
  %v3299 = vadd.f32 %v2520, %v3170
  %v3300 = vadd.f32 %v2521, %v3171
  %v3301 = vadd.f32 %v2522, %v3172
  %v3302 = vadd.f32 %v2523, %v3173
  %v3303 = vadd.f32 %v2524, %v3174
  %v3304 = vadd.f32 %v2525, %v3175
  %v3305 = vadd.f32 %v2526, %v3176
  %v3306 = vadd.f32 %v2527, %v3177
  %v3307 = vadd.f32 %v2528, %v3178
  %v3308 = vadd.f32 %v2529, %v3179
  %v3309 = vadd.f32 %v2530, %v3180
  %v3310 = vadd.f32 %v2531, %v3181
  %v3311 = vadd.f32 %v2532, %v3182
  %v3312 = vadd.f32 %v2533, %v3183
  %v3313 = vadd.f32 %v2534, %v3184
  %v3314 = vadd.f32 %v2535, %v3185
  %v3315 = vadd.f32 %v2536, %v3186
  %v3316 = vadd.f32 %v2537, %v3187
  %v3317 = vadd.f32 %v2538, %v3188
  %v3318 = vadd.f32 %v2539, %v3189
  %v3319 = vadd.f32 %v2540, %v3190
  %v3320 = vadd.f32 %v2541, %v3191
  %v3321 = vadd.f32 %v2542, %v3192
  %v3322 = vadd.f32 %v2543, %v3193
  %v3323 = vadd.f32 %v2544, %v3194
  %v3324 = vadd.f32 %v2545, %v3195
  %v3325 = vadd.f32 %v2546, %v3196
  %v3326 = vadd.f32 %v2547, %v3197
  %v3327 = vadd.f32 %v2548, %v3198
  %v3328 = vadd.f32 %v2549, %v3199
  %v3329 = vadd.f32 %v2550, %v3200
  %v3330 = vadd.f32 %v2551, %v3201
  %v3331 = vadd.f32 %v2552, %v3202
  %v3332 = vadd.f32 %v2553, %v3203
  %v3333 = vadd.f32 %v2554, %v3204
  %v3334 = vadd.f32 %v2555, %v3205
  %v3335 = vadd.f32 %v2556, %v3206
  %v3336 = vadd.f32 %v2557, %v3207
  %v3337 = vadd.f32 %v2558, %v3208
  %v3338 = vadd.f32 %v2559, %v3209
  %v3339 = vadd.f32 %v2560, %v3210
  %v3340 = vadd.f32 %v2561, %v3211
  %v3341 = vadd.f32 %v2562, %v3212
  %v3342 = vadd.f32 %v2563, %v3213
  %v3343 = vadd.f32 %v2564, %v3214
  %v3344 = vadd.f32 %v2565, %v3215
  %v3345 = vadd.f32 %v2566, %v3216
  %v3346 = vadd.f32 %v2567, %v3217
  %v3347 = vadd.f32 %v2568, %v3218
  %v3348 = vadd.f32 %v2569, %v3219
  %v3349 = vadd.f32 %v2570, %v3220
  %v3350 = vadd.f32 %v2571, %v3221
  %v3351 = vadd.f32 %v2572, %v3222
  %v3352 = vadd.f32 %v2573, %v3223
  %v3353 = vadd.f32 %v2574, %v3224
  %v3354 = vadd.f32 %v2575, %v3225
  %v3355 = vadd.f32 %v2576, %v3226
  %v3356 = vadd.f32 %v2577, %v3227
  %v3357 = vadd.f32 %v2578, %v3228
  %v3358 = vadd.f32 %v2579, %v3229
  %v3359 = vadd.f32 %v2580, %v3230
  %v3360 = vadd.f32 %v2581, %v3231
  %v3361 = vadd.f32 %v2582, %v3232
  %v3362 = vadd.f32 %v2583, %v3233
  %v3363 = vadd.f32 %v2584, %v3234
  %v3364 = vadd.f32 %v2585, %v3235
  %v3365 = vadd.f32 %v2586, %v3236
  %v3366 = vadd.f32 %v2587, %v3237
  %v3367 = vadd.f32 %v2588, %v3238
  %v3368 = vadd.f32 %v2589, %v3239
  %v3369 = vadd.f32 %v2590, %v3240
  %v3370 = vadd.f32 %v2591, %v3241
  %v3371 = vadd.f32 %v2592, %v3242
  %v3372 = vadd.f32 %v2593, %v3243
  %v3373 = vadd.f32 %v2594, %v3244
  %v3374 = vadd.f32 %v2595, %v3245
  %v3375 = vadd.f32 %v2596, %v3246
  %v3376 = vadd.f32 %v2597, %v3247
  %v3377 = vadd.f32 %v2598, %v3248
  %v3378 = vadd.f32 %v2599, %v3249
  %v3379 = vadd.f32 %v2600, %v3250
  %v3380 = vadd.f32 %v2601, %v3251
  %v3381 = vadd.f32 %v2602, %v3252
  %v3382 = vadd.f32 %v2603, %v3253
  %v3383 = vld [vmem:[%s0 + $0x3] sm:$0x1]
  %3384 = vset.pattern.permute.xlu0 3
  %3385 = vperm.xlu0 %3384, %v143
  %v3386 = vpop.permute.xlu0 %3385
  %3388 = vset.pattern.permute.xlu0 3
  %3389 = vperm.xlu0 %3388, %v144
  %v3390 = vpop.permute.xlu0 %3389
  %3392 = vset.pattern.permute.xlu0 3
  %3393 = vperm.xlu0 %3392, %v145
  %v3394 = vpop.permute.xlu0 %3393
  %3396 = vset.pattern.permute.xlu0 3
  %3397 = vperm.xlu0 %3396, %v146
  %v3398 = vpop.permute.xlu0 %3397
  %3400 = vset.pattern.permute.xlu0 3
  %3401 = vperm.xlu0 %3400, %v147
  %v3402 = vpop.permute.xlu0 %3401
  %3404 = vset.pattern.permute.xlu0 3
  %3405 = vperm.xlu0 %3404, %v148
  %v3406 = vpop.permute.xlu0 %3405
  %3408 = vset.pattern.permute.xlu0 3
  %3409 = vperm.xlu0 %3408, %v149
  %v3410 = vpop.permute.xlu0 %3409
  %3412 = vset.pattern.permute.xlu0 3
  %3413 = vperm.xlu0 %3412, %v150
  %v3414 = vpop.permute.xlu0 %3413
  %3416 = vset.pattern.permute.xlu0 3
  %3417 = vperm.xlu0 %3416, %v151
  %v3418 = vpop.permute.xlu0 %3417
  %3420 = vset.pattern.permute.xlu0 3
  %3421 = vperm.xlu0 %3420, %v152
  %v3422 = vpop.permute.xlu0 %3421
  %3424 = vset.pattern.permute.xlu0 3
  %3425 = vperm.xlu0 %3424, %v153
  %v3426 = vpop.permute.xlu0 %3425
  %3428 = vset.pattern.permute.xlu0 3
  %3429 = vperm.xlu0 %3428, %v154
  %v3430 = vpop.permute.xlu0 %3429
  %3432 = vset.pattern.permute.xlu0 3
  %3433 = vperm.xlu0 %3432, %v155
  %v3434 = vpop.permute.xlu0 %3433
  %3436 = vset.pattern.permute.xlu0 3
  %3437 = vperm.xlu0 %3436, %v156
  %v3438 = vpop.permute.xlu0 %3437
  %3440 = vset.pattern.permute.xlu0 3
  %3441 = vperm.xlu0 %3440, %v157
  %v3442 = vpop.permute.xlu0 %3441
  %3444 = vset.pattern.permute.xlu0 3
  %3445 = vperm.xlu0 %3444, %v158
  %v3446 = vpop.permute.xlu0 %3445
  %3448 = vset.pattern.permute.xlu0 3
  %3449 = vperm.xlu0 %3448, %v159
  %v3450 = vpop.permute.xlu0 %3449
  %3452 = vset.pattern.permute.xlu0 3
  %3453 = vperm.xlu0 %3452, %v160
  %v3454 = vpop.permute.xlu0 %3453
  %3456 = vset.pattern.permute.xlu0 3
  %3457 = vperm.xlu0 %3456, %v161
  %v3458 = vpop.permute.xlu0 %3457
  %3460 = vset.pattern.permute.xlu0 3
  %3461 = vperm.xlu0 %3460, %v162
  %v3462 = vpop.permute.xlu0 %3461
  %3464 = vset.pattern.permute.xlu0 3
  %3465 = vperm.xlu0 %3464, %v163
  %v3466 = vpop.permute.xlu0 %3465
  %3468 = vset.pattern.permute.xlu0 3
  %3469 = vperm.xlu0 %3468, %v164
  %v3470 = vpop.permute.xlu0 %3469
  %3472 = vset.pattern.permute.xlu0 3
  %3473 = vperm.xlu0 %3472, %v165
  %v3474 = vpop.permute.xlu0 %3473
  %3476 = vset.pattern.permute.xlu0 3
  %3477 = vperm.xlu0 %3476, %v166
  %v3478 = vpop.permute.xlu0 %3477
  %3480 = vset.pattern.permute.xlu0 3
  %3481 = vperm.xlu0 %3480, %v167
  %v3482 = vpop.permute.xlu0 %3481
  %3484 = vset.pattern.permute.xlu0 3
  %3485 = vperm.xlu0 %3484, %v168
  %v3486 = vpop.permute.xlu0 %3485
  %3488 = vset.pattern.permute.xlu0 3
  %3489 = vperm.xlu0 %3488, %v169
  %v3490 = vpop.permute.xlu0 %3489
  %3492 = vset.pattern.permute.xlu0 3
  %3493 = vperm.xlu0 %3492, %v170
  %v3494 = vpop.permute.xlu0 %3493
  %3496 = vset.pattern.permute.xlu0 3
  %3497 = vperm.xlu0 %3496, %v171
  %v3498 = vpop.permute.xlu0 %3497
  %3500 = vset.pattern.permute.xlu0 3
  %3501 = vperm.xlu0 %3500, %v172
  %v3502 = vpop.permute.xlu0 %3501
  %3504 = vset.pattern.permute.xlu0 3
  %3505 = vperm.xlu0 %3504, %v173
  %v3506 = vpop.permute.xlu0 %3505
  %3508 = vset.pattern.permute.xlu0 3
  %3509 = vperm.xlu0 %3508, %v174
  %v3510 = vpop.permute.xlu0 %3509
  %3512 = vset.pattern.permute.xlu0 3
  %3513 = vperm.xlu0 %3512, %v175
  %v3514 = vpop.permute.xlu0 %3513
  %3516 = vset.pattern.permute.xlu0 3
  %3517 = vperm.xlu0 %3516, %v176
  %v3518 = vpop.permute.xlu0 %3517
  %3520 = vset.pattern.permute.xlu0 3
  %3521 = vperm.xlu0 %3520, %v177
  %v3522 = vpop.permute.xlu0 %3521
  %3524 = vset.pattern.permute.xlu0 3
  %3525 = vperm.xlu0 %3524, %v178
  %v3526 = vpop.permute.xlu0 %3525
  %3528 = vset.pattern.permute.xlu0 3
  %3529 = vperm.xlu0 %3528, %v179
  %v3530 = vpop.permute.xlu0 %3529
  %3532 = vset.pattern.permute.xlu0 3
  %3533 = vperm.xlu0 %3532, %v180
  %v3534 = vpop.permute.xlu0 %3533
  %3536 = vset.pattern.permute.xlu0 3
  %3537 = vperm.xlu0 %3536, %v181
  %v3538 = vpop.permute.xlu0 %3537
  %3540 = vset.pattern.permute.xlu0 3
  %3541 = vperm.xlu0 %3540, %v182
  %v3542 = vpop.permute.xlu0 %3541
  %3544 = vset.pattern.permute.xlu0 3
  %3545 = vperm.xlu0 %3544, %v183
  %v3546 = vpop.permute.xlu0 %3545
  %3548 = vset.pattern.permute.xlu0 3
  %3549 = vperm.xlu0 %3548, %v184
  %v3550 = vpop.permute.xlu0 %3549
  %3552 = vset.pattern.permute.xlu0 3
  %3553 = vperm.xlu0 %3552, %v185
  %v3554 = vpop.permute.xlu0 %3553
  %3556 = vset.pattern.permute.xlu0 3
  %3557 = vperm.xlu0 %3556, %v186
  %v3558 = vpop.permute.xlu0 %3557
  %3560 = vset.pattern.permute.xlu0 3
  %3561 = vperm.xlu0 %3560, %v187
  %v3562 = vpop.permute.xlu0 %3561
  %3564 = vset.pattern.permute.xlu0 3
  %3565 = vperm.xlu0 %3564, %v188
  %v3566 = vpop.permute.xlu0 %3565
  %3568 = vset.pattern.permute.xlu0 3
  %3569 = vperm.xlu0 %3568, %v189
  %v3570 = vpop.permute.xlu0 %3569
  %3572 = vset.pattern.permute.xlu0 3
  %3573 = vperm.xlu0 %3572, %v190
  %v3574 = vpop.permute.xlu0 %3573
  %3576 = vset.pattern.permute.xlu0 3
  %3577 = vperm.xlu0 %3576, %v191
  %v3578 = vpop.permute.xlu0 %3577
  %3580 = vset.pattern.permute.xlu0 3
  %3581 = vperm.xlu0 %3580, %v192
  %v3582 = vpop.permute.xlu0 %3581
  %3584 = vset.pattern.permute.xlu0 3
  %3585 = vperm.xlu0 %3584, %v193
  %v3586 = vpop.permute.xlu0 %3585
  %3588 = vset.pattern.permute.xlu0 3
  %3589 = vperm.xlu0 %3588, %v194
  %v3590 = vpop.permute.xlu0 %3589
  %3592 = vset.pattern.permute.xlu0 3
  %3593 = vperm.xlu0 %3592, %v195
  %v3594 = vpop.permute.xlu0 %3593
  %3596 = vset.pattern.permute.xlu0 3
  %3597 = vperm.xlu0 %3596, %v196
  %v3598 = vpop.permute.xlu0 %3597
  %3600 = vset.pattern.permute.xlu0 3
  %3601 = vperm.xlu0 %3600, %v197
  %v3602 = vpop.permute.xlu0 %3601
  %3604 = vset.pattern.permute.xlu0 3
  %3605 = vperm.xlu0 %3604, %v198
  %v3606 = vpop.permute.xlu0 %3605
  %3608 = vset.pattern.permute.xlu0 3
  %3609 = vperm.xlu0 %3608, %v199
  %v3610 = vpop.permute.xlu0 %3609
  %3612 = vset.pattern.permute.xlu0 3
  %3613 = vperm.xlu0 %3612, %v200
  %v3614 = vpop.permute.xlu0 %3613
  %3616 = vset.pattern.permute.xlu0 3
  %3617 = vperm.xlu0 %3616, %v201
  %v3618 = vpop.permute.xlu0 %3617
  %3620 = vset.pattern.permute.xlu0 3
  %3621 = vperm.xlu0 %3620, %v202
  %v3622 = vpop.permute.xlu0 %3621
  %3624 = vset.pattern.permute.xlu0 3
  %3625 = vperm.xlu0 %3624, %v203
  %v3626 = vpop.permute.xlu0 %3625
  %3628 = vset.pattern.permute.xlu0 3
  %3629 = vperm.xlu0 %3628, %v204
  %v3630 = vpop.permute.xlu0 %3629
  %3632 = vset.pattern.permute.xlu0 3
  %3633 = vperm.xlu0 %3632, %v205
  %v3634 = vpop.permute.xlu0 %3633
  %3636 = vset.pattern.permute.xlu0 3
  %3637 = vperm.xlu0 %3636, %v206
  %v3638 = vpop.permute.xlu0 %3637
  %3640 = vset.pattern.permute.xlu0 3
  %3641 = vperm.xlu0 %3640, %v207
  %v3642 = vpop.permute.xlu0 %3641
  %3644 = vset.pattern.permute.xlu0 3
  %3645 = vperm.xlu0 %3644, %v208
  %v3646 = vpop.permute.xlu0 %3645
  %3648 = vset.pattern.permute.xlu0 3
  %3649 = vperm.xlu0 %3648, %v209
  %v3650 = vpop.permute.xlu0 %3649
  %3652 = vset.pattern.permute.xlu0 3
  %3653 = vperm.xlu0 %3652, %v210
  %v3654 = vpop.permute.xlu0 %3653
  %3656 = vset.pattern.permute.xlu0 3
  %3657 = vperm.xlu0 %3656, %v211
  %v3658 = vpop.permute.xlu0 %3657
  %3660 = vset.pattern.permute.xlu0 3
  %3661 = vperm.xlu0 %3660, %v212
  %v3662 = vpop.permute.xlu0 %3661
  %3664 = vset.pattern.permute.xlu0 3
  %3665 = vperm.xlu0 %3664, %v213
  %v3666 = vpop.permute.xlu0 %3665
  %3668 = vset.pattern.permute.xlu0 3
  %3669 = vperm.xlu0 %3668, %v214
  %v3670 = vpop.permute.xlu0 %3669
  %3672 = vset.pattern.permute.xlu0 3
  %3673 = vperm.xlu0 %3672, %v215
  %v3674 = vpop.permute.xlu0 %3673
  %3676 = vset.pattern.permute.xlu0 3
  %3677 = vperm.xlu0 %3676, %v216
  %v3678 = vpop.permute.xlu0 %3677
  %3680 = vset.pattern.permute.xlu0 3
  %3681 = vperm.xlu0 %3680, %v217
  %v3682 = vpop.permute.xlu0 %3681
  %3684 = vset.pattern.permute.xlu0 3
  %3685 = vperm.xlu0 %3684, %v218
  %v3686 = vpop.permute.xlu0 %3685
  %3688 = vset.pattern.permute.xlu0 3
  %3689 = vperm.xlu0 %3688, %v219
  %v3690 = vpop.permute.xlu0 %3689
  %3692 = vset.pattern.permute.xlu0 3
  %3693 = vperm.xlu0 %3692, %v220
  %v3694 = vpop.permute.xlu0 %3693
  %3696 = vset.pattern.permute.xlu0 3
  %3697 = vperm.xlu0 %3696, %v221
  %v3698 = vpop.permute.xlu0 %3697
  %3700 = vset.pattern.permute.xlu0 3
  %3701 = vperm.xlu0 %3700, %v222
  %v3702 = vpop.permute.xlu0 %3701
  %3704 = vset.pattern.permute.xlu0 3
  %3705 = vperm.xlu0 %3704, %v223
  %v3706 = vpop.permute.xlu0 %3705
  %3708 = vset.pattern.permute.xlu0 3
  %3709 = vperm.xlu0 %3708, %v224
  %v3710 = vpop.permute.xlu0 %3709
  %3712 = vset.pattern.permute.xlu0 3
  %3713 = vperm.xlu0 %3712, %v225
  %v3714 = vpop.permute.xlu0 %3713
  %3716 = vset.pattern.permute.xlu0 3
  %3717 = vperm.xlu0 %3716, %v226
  %v3718 = vpop.permute.xlu0 %3717
  %3720 = vset.pattern.permute.xlu0 3
  %3721 = vperm.xlu0 %3720, %v227
  %v3722 = vpop.permute.xlu0 %3721
  %3724 = vset.pattern.permute.xlu0 3
  %3725 = vperm.xlu0 %3724, %v228
  %v3726 = vpop.permute.xlu0 %3725
  %3728 = vset.pattern.permute.xlu0 3
  %3729 = vperm.xlu0 %3728, %v229
  %v3730 = vpop.permute.xlu0 %3729
  %3732 = vset.pattern.permute.xlu0 3
  %3733 = vperm.xlu0 %3732, %v230
  %v3734 = vpop.permute.xlu0 %3733
  %3736 = vset.pattern.permute.xlu0 3
  %3737 = vperm.xlu0 %3736, %v231
  %v3738 = vpop.permute.xlu0 %3737
  %3740 = vset.pattern.permute.xlu0 3
  %3741 = vperm.xlu0 %3740, %v232
  %v3742 = vpop.permute.xlu0 %3741
  %3744 = vset.pattern.permute.xlu0 3
  %3745 = vperm.xlu0 %3744, %v233
  %v3746 = vpop.permute.xlu0 %3745
  %3748 = vset.pattern.permute.xlu0 3
  %3749 = vperm.xlu0 %3748, %v234
  %v3750 = vpop.permute.xlu0 %3749
  %3752 = vset.pattern.permute.xlu0 3
  %3753 = vperm.xlu0 %3752, %v235
  %v3754 = vpop.permute.xlu0 %3753
  %3756 = vset.pattern.permute.xlu0 3
  %3757 = vperm.xlu0 %3756, %v236
  %v3758 = vpop.permute.xlu0 %3757
  %3760 = vset.pattern.permute.xlu0 3
  %3761 = vperm.xlu0 %3760, %v237
  %v3762 = vpop.permute.xlu0 %3761
  %3764 = vset.pattern.permute.xlu0 3
  %3765 = vperm.xlu0 %3764, %v238
  %v3766 = vpop.permute.xlu0 %3765
  %3768 = vset.pattern.permute.xlu0 3
  %3769 = vperm.xlu0 %3768, %v239
  %v3770 = vpop.permute.xlu0 %3769
  %3772 = vset.pattern.permute.xlu0 3
  %3773 = vperm.xlu0 %3772, %v240
  %v3774 = vpop.permute.xlu0 %3773
  %3776 = vset.pattern.permute.xlu0 3
  %3777 = vperm.xlu0 %3776, %v241
  %v3778 = vpop.permute.xlu0 %3777
  %3780 = vset.pattern.permute.xlu0 3
  %3781 = vperm.xlu0 %3780, %v242
  %v3782 = vpop.permute.xlu0 %3781
  %3784 = vset.pattern.permute.xlu0 3
  %3785 = vperm.xlu0 %3784, %v243
  %v3786 = vpop.permute.xlu0 %3785
  %3788 = vset.pattern.permute.xlu0 3
  %3789 = vperm.xlu0 %3788, %v244
  %v3790 = vpop.permute.xlu0 %3789
  %3792 = vset.pattern.permute.xlu0 3
  %3793 = vperm.xlu0 %3792, %v245
  %v3794 = vpop.permute.xlu0 %3793
  %3796 = vset.pattern.permute.xlu0 3
  %3797 = vperm.xlu0 %3796, %v246
  %v3798 = vpop.permute.xlu0 %3797
  %3800 = vset.pattern.permute.xlu0 3
  %3801 = vperm.xlu0 %3800, %v247
  %v3802 = vpop.permute.xlu0 %3801
  %3804 = vset.pattern.permute.xlu0 3
  %3805 = vperm.xlu0 %3804, %v248
  %v3806 = vpop.permute.xlu0 %3805
  %3808 = vset.pattern.permute.xlu0 3
  %3809 = vperm.xlu0 %3808, %v249
  %v3810 = vpop.permute.xlu0 %3809
  %3812 = vset.pattern.permute.xlu0 3
  %3813 = vperm.xlu0 %3812, %v250
  %v3814 = vpop.permute.xlu0 %3813
  %3816 = vset.pattern.permute.xlu0 3
  %3817 = vperm.xlu0 %3816, %v251
  %v3818 = vpop.permute.xlu0 %3817
  %3820 = vset.pattern.permute.xlu0 3
  %3821 = vperm.xlu0 %3820, %v252
  %v3822 = vpop.permute.xlu0 %3821
  %3824 = vset.pattern.permute.xlu0 3
  %3825 = vperm.xlu0 %3824, %v253
  %v3826 = vpop.permute.xlu0 %3825
  %3828 = vset.pattern.permute.xlu0 3
  %3829 = vperm.xlu0 %3828, %v254
  %v3830 = vpop.permute.xlu0 %3829
  %3832 = vset.pattern.permute.xlu0 3
  %3833 = vperm.xlu0 %3832, %v255
  %v3834 = vpop.permute.xlu0 %3833
  %3836 = vset.pattern.permute.xlu0 3
  %3837 = vperm.xlu0 %3836, %v256
  %v3838 = vpop.permute.xlu0 %3837
  %3840 = vset.pattern.permute.xlu0 3
  %3841 = vperm.xlu0 %3840, %v257
  %v3842 = vpop.permute.xlu0 %3841
  %3844 = vset.pattern.permute.xlu0 3
  %3845 = vperm.xlu0 %3844, %v258
  %v3846 = vpop.permute.xlu0 %3845
  %3848 = vset.pattern.permute.xlu0 3
  %3849 = vperm.xlu0 %3848, %v259
  %v3850 = vpop.permute.xlu0 %3849
  %3852 = vset.pattern.permute.xlu0 3
  %3853 = vperm.xlu0 %3852, %v260
  %v3854 = vpop.permute.xlu0 %3853
  %3856 = vset.pattern.permute.xlu0 3
  %3857 = vperm.xlu0 %3856, %v261
  %v3858 = vpop.permute.xlu0 %3857
  %3860 = vset.pattern.permute.xlu0 3
  %3861 = vperm.xlu0 %3860, %v262
  %v3862 = vpop.permute.xlu0 %3861
  %3864 = vset.pattern.permute.xlu0 3
  %3865 = vperm.xlu0 %3864, %v263
  %v3866 = vpop.permute.xlu0 %3865
  %3868 = vset.pattern.permute.xlu0 3
  %3869 = vperm.xlu0 %3868, %v264
  %v3870 = vpop.permute.xlu0 %3869
  %3872 = vset.pattern.permute.xlu0 3
  %3873 = vperm.xlu0 %3872, %v265
  %v3874 = vpop.permute.xlu0 %3873
  %3876 = vset.pattern.permute.xlu0 3
  %3877 = vperm.xlu0 %3876, %v266
  %v3878 = vpop.permute.xlu0 %3877
  %3880 = vset.pattern.permute.xlu0 3
  %3881 = vperm.xlu0 %3880, %v267
  %v3882 = vpop.permute.xlu0 %3881
  %3884 = vset.pattern.permute.xlu0 3
  %3885 = vperm.xlu0 %3884, %v268
  %v3886 = vpop.permute.xlu0 %3885
  %3888 = vset.pattern.permute.xlu0 3
  %3889 = vperm.xlu0 %3888, %v269
  %v3890 = vpop.permute.xlu0 %3889
  %3892 = vset.pattern.permute.xlu0 3
  %3893 = vperm.xlu0 %3892, %v270
  %v3894 = vpop.permute.xlu0 %3893
  %3896 = vset.pattern.permute.xlu0 3
  %3897 = vperm.xlu0 %3896, %v271
  %v3898 = vpop.permute.xlu0 %3897
  %v3900 = vlaneseq
  %v3901 = vshrl.u32 %v3900, 7
  %v3902 = vsub.s32 0, %v3901
  %v3903 = vrot.slane %v3383, %v3902
  %v3904 = vmul.f32 %v3386, %v3903
  %v3905 = vmul.f32 %v3390, %v3903
  %v3906 = vmul.f32 %v3394, %v3903
  %v3907 = vmul.f32 %v3398, %v3903
  %v3908 = vmul.f32 %v3402, %v3903
  %v3909 = vmul.f32 %v3406, %v3903
  %v3910 = vmul.f32 %v3410, %v3903
  %v3911 = vmul.f32 %v3414, %v3903
  %v3912 = vmul.f32 %v3418, %v3903
  %v3913 = vmul.f32 %v3422, %v3903
  %v3914 = vmul.f32 %v3426, %v3903
  %v3915 = vmul.f32 %v3430, %v3903
  %v3916 = vmul.f32 %v3434, %v3903
  %v3917 = vmul.f32 %v3438, %v3903
  %v3918 = vmul.f32 %v3442, %v3903
  %v3919 = vmul.f32 %v3446, %v3903
  %v3920 = vmul.f32 %v3450, %v3903
  %v3921 = vmul.f32 %v3454, %v3903
  %v3922 = vmul.f32 %v3458, %v3903
  %v3923 = vmul.f32 %v3462, %v3903
  %v3924 = vmul.f32 %v3466, %v3903
  %v3925 = vmul.f32 %v3470, %v3903
  %v3926 = vmul.f32 %v3474, %v3903
  %v3927 = vmul.f32 %v3478, %v3903
  %v3928 = vmul.f32 %v3482, %v3903
  %v3929 = vmul.f32 %v3486, %v3903
  %v3930 = vmul.f32 %v3490, %v3903
  %v3931 = vmul.f32 %v3494, %v3903
  %v3932 = vmul.f32 %v3498, %v3903
  %v3933 = vmul.f32 %v3502, %v3903
  %v3934 = vmul.f32 %v3506, %v3903
  %v3935 = vmul.f32 %v3510, %v3903
  %v3936 = vmul.f32 %v3514, %v3903
  %v3937 = vmul.f32 %v3518, %v3903
  %v3938 = vmul.f32 %v3522, %v3903
  %v3939 = vmul.f32 %v3526, %v3903
  %v3940 = vmul.f32 %v3530, %v3903
  %v3941 = vmul.f32 %v3534, %v3903
  %v3942 = vmul.f32 %v3538, %v3903
  %v3943 = vmul.f32 %v3542, %v3903
  %v3944 = vmul.f32 %v3546, %v3903
  %v3945 = vmul.f32 %v3550, %v3903
  %v3946 = vmul.f32 %v3554, %v3903
  %v3947 = vmul.f32 %v3558, %v3903
  %v3948 = vmul.f32 %v3562, %v3903
  %v3949 = vmul.f32 %v3566, %v3903
  %v3950 = vmul.f32 %v3570, %v3903
  %v3951 = vmul.f32 %v3574, %v3903
  %v3952 = vmul.f32 %v3578, %v3903
  %v3953 = vmul.f32 %v3582, %v3903
  %v3954 = vmul.f32 %v3586, %v3903
  %v3955 = vmul.f32 %v3590, %v3903
  %v3956 = vmul.f32 %v3594, %v3903
  %v3957 = vmul.f32 %v3598, %v3903
  %v3958 = vmul.f32 %v3602, %v3903
  %v3959 = vmul.f32 %v3606, %v3903
  %v3960 = vmul.f32 %v3610, %v3903
  %v3961 = vmul.f32 %v3614, %v3903
  %v3962 = vmul.f32 %v3618, %v3903
  %v3963 = vmul.f32 %v3622, %v3903
  %v3964 = vmul.f32 %v3626, %v3903
  %v3965 = vmul.f32 %v3630, %v3903
  %v3966 = vmul.f32 %v3634, %v3903
  %v3967 = vmul.f32 %v3638, %v3903
  %v3968 = vmul.f32 %v3642, %v3903
  %v3969 = vmul.f32 %v3646, %v3903
  %v3970 = vmul.f32 %v3650, %v3903
  %v3971 = vmul.f32 %v3654, %v3903
  %v3972 = vmul.f32 %v3658, %v3903
  %v3973 = vmul.f32 %v3662, %v3903
  %v3974 = vmul.f32 %v3666, %v3903
  %v3975 = vmul.f32 %v3670, %v3903
  %v3976 = vmul.f32 %v3674, %v3903
  %v3977 = vmul.f32 %v3678, %v3903
  %v3978 = vmul.f32 %v3682, %v3903
  %v3979 = vmul.f32 %v3686, %v3903
  %v3980 = vmul.f32 %v3690, %v3903
  %v3981 = vmul.f32 %v3694, %v3903
  %v3982 = vmul.f32 %v3698, %v3903
  %v3983 = vmul.f32 %v3702, %v3903
  %v3984 = vmul.f32 %v3706, %v3903
  %v3985 = vmul.f32 %v3710, %v3903
  %v3986 = vmul.f32 %v3714, %v3903
  %v3987 = vmul.f32 %v3718, %v3903
  %v3988 = vmul.f32 %v3722, %v3903
  %v3989 = vmul.f32 %v3726, %v3903
  %v3990 = vmul.f32 %v3730, %v3903
  %v3991 = vmul.f32 %v3734, %v3903
  %v3992 = vmul.f32 %v3738, %v3903
  %v3993 = vmul.f32 %v3742, %v3903
  %v3994 = vmul.f32 %v3746, %v3903
  %v3995 = vmul.f32 %v3750, %v3903
  %v3996 = vmul.f32 %v3754, %v3903
  %v3997 = vmul.f32 %v3758, %v3903
  %v3998 = vmul.f32 %v3762, %v3903
  %v3999 = vmul.f32 %v3766, %v3903
  %v4000 = vmul.f32 %v3770, %v3903
  %v4001 = vmul.f32 %v3774, %v3903
  %v4002 = vmul.f32 %v3778, %v3903
  %v4003 = vmul.f32 %v3782, %v3903
  %v4004 = vmul.f32 %v3786, %v3903
  %v4005 = vmul.f32 %v3790, %v3903
  %v4006 = vmul.f32 %v3794, %v3903
  %v4007 = vmul.f32 %v3798, %v3903
  %v4008 = vmul.f32 %v3802, %v3903
  %v4009 = vmul.f32 %v3806, %v3903
  %v4010 = vmul.f32 %v3810, %v3903
  %v4011 = vmul.f32 %v3814, %v3903
  %v4012 = vmul.f32 %v3818, %v3903
  %v4013 = vmul.f32 %v3822, %v3903
  %v4014 = vmul.f32 %v3826, %v3903
  %v4015 = vmul.f32 %v3830, %v3903
  %v4016 = vmul.f32 %v3834, %v3903
  %v4017 = vmul.f32 %v3838, %v3903
  %v4018 = vmul.f32 %v3842, %v3903
  %v4019 = vmul.f32 %v3846, %v3903
  %v4020 = vmul.f32 %v3850, %v3903
  %v4021 = vmul.f32 %v3854, %v3903
  %v4022 = vmul.f32 %v3858, %v3903
  %v4023 = vmul.f32 %v3862, %v3903
  %v4024 = vmul.f32 %v3866, %v3903
  %v4025 = vmul.f32 %v3870, %v3903
  %v4026 = vmul.f32 %v3874, %v3903
  %v4027 = vmul.f32 %v3878, %v3903
  %v4028 = vmul.f32 %v3882, %v3903
  %v4029 = vmul.f32 %v3886, %v3903
  %v4030 = vmul.f32 %v3890, %v3903
  %v4031 = vmul.f32 %v3894, %v3903
  %v4032 = vmul.f32 %v3898, %v3903
  %v4033 = vadd.f32 %v3254, %v3904
  %v4034 = vadd.f32 %v3255, %v3905
  %v4035 = vadd.f32 %v3256, %v3906
  %v4036 = vadd.f32 %v3257, %v3907
  %v4037 = vadd.f32 %v3258, %v3908
  %v4038 = vadd.f32 %v3259, %v3909
  %v4039 = vadd.f32 %v3260, %v3910
  %v4040 = vadd.f32 %v3261, %v3911
  %v4041 = vadd.f32 %v3262, %v3912
  %v4042 = vadd.f32 %v3263, %v3913
  %v4043 = vadd.f32 %v3264, %v3914
  %v4044 = vadd.f32 %v3265, %v3915
  %v4045 = vadd.f32 %v3266, %v3916
  %v4046 = vadd.f32 %v3267, %v3917
  %v4047 = vadd.f32 %v3268, %v3918
  %v4048 = vadd.f32 %v3269, %v3919
  %v4049 = vadd.f32 %v3270, %v3920
  %v4050 = vadd.f32 %v3271, %v3921
  %v4051 = vadd.f32 %v3272, %v3922
  %v4052 = vadd.f32 %v3273, %v3923
  %v4053 = vadd.f32 %v3274, %v3924
  %v4054 = vadd.f32 %v3275, %v3925
  %v4055 = vadd.f32 %v3276, %v3926
  %v4056 = vadd.f32 %v3277, %v3927
  %v4057 = vadd.f32 %v3278, %v3928
  %v4058 = vadd.f32 %v3279, %v3929
  %v4059 = vadd.f32 %v3280, %v3930
  %v4060 = vadd.f32 %v3281, %v3931
  %v4061 = vadd.f32 %v3282, %v3932
  %v4062 = vadd.f32 %v3283, %v3933
  %v4063 = vadd.f32 %v3284, %v3934
  %v4064 = vadd.f32 %v3285, %v3935
  %v4065 = vadd.f32 %v3286, %v3936
  %v4066 = vadd.f32 %v3287, %v3937
  %v4067 = vadd.f32 %v3288, %v3938
  %v4068 = vadd.f32 %v3289, %v3939
  %v4069 = vadd.f32 %v3290, %v3940
  %v4070 = vadd.f32 %v3291, %v3941
  %v4071 = vadd.f32 %v3292, %v3942
  %v4072 = vadd.f32 %v3293, %v3943
  %v4073 = vadd.f32 %v3294, %v3944
  %v4074 = vadd.f32 %v3295, %v3945
  %v4075 = vadd.f32 %v3296, %v3946
  %v4076 = vadd.f32 %v3297, %v3947
  %v4077 = vadd.f32 %v3298, %v3948
  %v4078 = vadd.f32 %v3299, %v3949
  %v4079 = vadd.f32 %v3300, %v3950
  %v4080 = vadd.f32 %v3301, %v3951
  %v4081 = vadd.f32 %v3302, %v3952
  %v4082 = vadd.f32 %v3303, %v3953
  %v4083 = vadd.f32 %v3304, %v3954
  %v4084 = vadd.f32 %v3305, %v3955
  %v4085 = vadd.f32 %v3306, %v3956
  %v4086 = vadd.f32 %v3307, %v3957
  %v4087 = vadd.f32 %v3308, %v3958
  %v4088 = vadd.f32 %v3309, %v3959
  %v4089 = vadd.f32 %v3310, %v3960
  %v4090 = vadd.f32 %v3311, %v3961
  %v4091 = vadd.f32 %v3312, %v3962
  %v4092 = vadd.f32 %v3313, %v3963
  %v4093 = vadd.f32 %v3314, %v3964
  %v4094 = vadd.f32 %v3315, %v3965
  %v4095 = vadd.f32 %v3316, %v3966
  %v4096 = vadd.f32 %v3317, %v3967
  %v4097 = vadd.f32 %v3318, %v3968
  %v4098 = vadd.f32 %v3319, %v3969
  %v4099 = vadd.f32 %v3320, %v3970
  %v4100 = vadd.f32 %v3321, %v3971
  %v4101 = vadd.f32 %v3322, %v3972
  %v4102 = vadd.f32 %v3323, %v3973
  %v4103 = vadd.f32 %v3324, %v3974
  %v4104 = vadd.f32 %v3325, %v3975
  %v4105 = vadd.f32 %v3326, %v3976
  %v4106 = vadd.f32 %v3327, %v3977
  %v4107 = vadd.f32 %v3328, %v3978
  %v4108 = vadd.f32 %v3329, %v3979
  %v4109 = vadd.f32 %v3330, %v3980
  %v4110 = vadd.f32 %v3331, %v3981
  %v4111 = vadd.f32 %v3332, %v3982
  %v4112 = vadd.f32 %v3333, %v3983
  %v4113 = vadd.f32 %v3334, %v3984
  %v4114 = vadd.f32 %v3335, %v3985
  %v4115 = vadd.f32 %v3336, %v3986
  %v4116 = vadd.f32 %v3337, %v3987
  %v4117 = vadd.f32 %v3338, %v3988
  %v4118 = vadd.f32 %v3339, %v3989
  %v4119 = vadd.f32 %v3340, %v3990
  %v4120 = vadd.f32 %v3341, %v3991
  %v4121 = vadd.f32 %v3342, %v3992
  %v4122 = vadd.f32 %v3343, %v3993
  %v4123 = vadd.f32 %v3344, %v3994
  %v4124 = vadd.f32 %v3345, %v3995
  %v4125 = vadd.f32 %v3346, %v3996
  %v4126 = vadd.f32 %v3347, %v3997
  %v4127 = vadd.f32 %v3348, %v3998
  %v4128 = vadd.f32 %v3349, %v3999
  %v4129 = vadd.f32 %v3350, %v4000
  %v4130 = vadd.f32 %v3351, %v4001
  %v4131 = vadd.f32 %v3352, %v4002
  %v4132 = vadd.f32 %v3353, %v4003
  %v4133 = vadd.f32 %v3354, %v4004
  %v4134 = vadd.f32 %v3355, %v4005
  %v4135 = vadd.f32 %v3356, %v4006
  %v4136 = vadd.f32 %v3357, %v4007
  %v4137 = vadd.f32 %v3358, %v4008
  %v4138 = vadd.f32 %v3359, %v4009
  %v4139 = vadd.f32 %v3360, %v4010
  %v4140 = vadd.f32 %v3361, %v4011
  %v4141 = vadd.f32 %v3362, %v4012
  %v4142 = vadd.f32 %v3363, %v4013
  %v4143 = vadd.f32 %v3364, %v4014
  %v4144 = vadd.f32 %v3365, %v4015
  %v4145 = vadd.f32 %v3366, %v4016
  %v4146 = vadd.f32 %v3367, %v4017
  %v4147 = vadd.f32 %v3368, %v4018
  %v4148 = vadd.f32 %v3369, %v4019
  %v4149 = vadd.f32 %v3370, %v4020
  %v4150 = vadd.f32 %v3371, %v4021
  %v4151 = vadd.f32 %v3372, %v4022
  %v4152 = vadd.f32 %v3373, %v4023
  %v4153 = vadd.f32 %v3374, %v4024
  %v4154 = vadd.f32 %v3375, %v4025
  %v4155 = vadd.f32 %v3376, %v4026
  %v4156 = vadd.f32 %v3377, %v4027
  %v4157 = vadd.f32 %v3378, %v4028
  %v4158 = vadd.f32 %v3379, %v4029
  %v4159 = vadd.f32 %v3380, %v4030
  %v4160 = vadd.f32 %v3381, %v4031
  %v4161 = vadd.f32 %v3382, %v4032
  %vm4162 = vcmask 15360
  %4163 = vst.msk [vmem:[%s3] sm:$0xff] %vm4162, %v4033
  %4164 = vst.msk [vmem:[%s3 + $0x8] sm:$0xff] %vm4162, %v4034
  %4165 = vst.msk [vmem:[%s3 + $0x10] sm:$0xff] %vm4162, %v4035
  %4166 = vst.msk [vmem:[%s3 + $0x18] sm:$0xff] %vm4162, %v4036
  %4167 = vst.msk [vmem:[%s3 + $0x20] sm:$0xff] %vm4162, %v4037
  %4168 = vst.msk [vmem:[%s3 + $0x28] sm:$0xff] %vm4162, %v4038
  %4169 = vst.msk [vmem:[%s3 + $0x30] sm:$0xff] %vm4162, %v4039
  %4170 = vst.msk [vmem:[%s3 + $0x38] sm:$0xff] %vm4162, %v4040
  %4171 = vst.msk [vmem:[%s3 + $0x40] sm:$0xff] %vm4162, %v4041
  %4172 = vst.msk [vmem:[%s3 + $0x48] sm:$0xff] %vm4162, %v4042
  %4173 = vst.msk [vmem:[%s3 + $0x50] sm:$0xff] %vm4162, %v4043
  %4174 = vst.msk [vmem:[%s3 + $0x58] sm:$0xff] %vm4162, %v4044
  %4175 = vst.msk [vmem:[%s3 + $0x60] sm:$0xff] %vm4162, %v4045
  %4176 = vst.msk [vmem:[%s3 + $0x68] sm:$0xff] %vm4162, %v4046
  %4177 = vst.msk [vmem:[%s3 + $0x70] sm:$0xff] %vm4162, %v4047
  %4178 = vst.msk [vmem:[%s3 + $0x78] sm:$0xff] %vm4162, %v4048
  %4179 = vst.msk [vmem:[%s3 + $0x80] sm:$0xff] %vm4162, %v4049
  %4180 = vst.msk [vmem:[%s3 + $0x88] sm:$0xff] %vm4162, %v4050
  %4181 = vst.msk [vmem:[%s3 + $0x90] sm:$0xff] %vm4162, %v4051
  %4182 = vst.msk [vmem:[%s3 + $0x98] sm:$0xff] %vm4162, %v4052
  %4183 = vst.msk [vmem:[%s3 + $0xa0] sm:$0xff] %vm4162, %v4053
  %4184 = vst.msk [vmem:[%s3 + $0xa8] sm:$0xff] %vm4162, %v4054
  %4185 = vst.msk [vmem:[%s3 + $0xb0] sm:$0xff] %vm4162, %v4055
  %4186 = vst.msk [vmem:[%s3 + $0xb8] sm:$0xff] %vm4162, %v4056
  %4187 = vst.msk [vmem:[%s3 + $0xc0] sm:$0xff] %vm4162, %v4057
  %4188 = vst.msk [vmem:[%s3 + $0xc8] sm:$0xff] %vm4162, %v4058
  %4189 = vst.msk [vmem:[%s3 + $0xd0] sm:$0xff] %vm4162, %v4059
  %4190 = vst.msk [vmem:[%s3 + $0xd8] sm:$0xff] %vm4162, %v4060
  %4191 = vst.msk [vmem:[%s3 + $0xe0] sm:$0xff] %vm4162, %v4061
  %4192 = vst.msk [vmem:[%s3 + $0xe8] sm:$0xff] %vm4162, %v4062
  %4193 = vst.msk [vmem:[%s3 + $0xf0] sm:$0xff] %vm4162, %v4063
  %4194 = vst.msk [vmem:[%s3 + $0xf8] sm:$0xff] %vm4162, %v4064
  %4195 = vst.msk [vmem:[%s3 + $0x100] sm:$0xff] %vm4162, %v4065
  %4196 = vst.msk [vmem:[%s3 + $0x108] sm:$0xff] %vm4162, %v4066
  %4197 = vst.msk [vmem:[%s3 + $0x110] sm:$0xff] %vm4162, %v4067
  %4198 = vst.msk [vmem:[%s3 + $0x118] sm:$0xff] %vm4162, %v4068
  %4199 = vst.msk [vmem:[%s3 + $0x120] sm:$0xff] %vm4162, %v4069
  %4200 = vst.msk [vmem:[%s3 + $0x128] sm:$0xff] %vm4162, %v4070
  %4201 = vst.msk [vmem:[%s3 + $0x130] sm:$0xff] %vm4162, %v4071
  %4202 = vst.msk [vmem:[%s3 + $0x138] sm:$0xff] %vm4162, %v4072
  %4203 = vst.msk [vmem:[%s3 + $0x140] sm:$0xff] %vm4162, %v4073
  %4204 = vst.msk [vmem:[%s3 + $0x148] sm:$0xff] %vm4162, %v4074
  %4205 = vst.msk [vmem:[%s3 + $0x150] sm:$0xff] %vm4162, %v4075
  %4206 = vst.msk [vmem:[%s3 + $0x158] sm:$0xff] %vm4162, %v4076
  %4207 = vst.msk [vmem:[%s3 + $0x160] sm:$0xff] %vm4162, %v4077
  %4208 = vst.msk [vmem:[%s3 + $0x168] sm:$0xff] %vm4162, %v4078
  %4209 = vst.msk [vmem:[%s3 + $0x170] sm:$0xff] %vm4162, %v4079
  %4210 = vst.msk [vmem:[%s3 + $0x178] sm:$0xff] %vm4162, %v4080
  %4211 = vst.msk [vmem:[%s3 + $0x180] sm:$0xff] %vm4162, %v4081
  %4212 = vst.msk [vmem:[%s3 + $0x188] sm:$0xff] %vm4162, %v4082
  %4213 = vst.msk [vmem:[%s3 + $0x190] sm:$0xff] %vm4162, %v4083
  %4214 = vst.msk [vmem:[%s3 + $0x198] sm:$0xff] %vm4162, %v4084
  %4215 = vst.msk [vmem:[%s3 + $0x1a0] sm:$0xff] %vm4162, %v4085
  %4216 = vst.msk [vmem:[%s3 + $0x1a8] sm:$0xff] %vm4162, %v4086
  %4217 = vst.msk [vmem:[%s3 + $0x1b0] sm:$0xff] %vm4162, %v4087
  %4218 = vst.msk [vmem:[%s3 + $0x1b8] sm:$0xff] %vm4162, %v4088
  %4219 = vst.msk [vmem:[%s3 + $0x1c0] sm:$0xff] %vm4162, %v4089
  %4220 = vst.msk [vmem:[%s3 + $0x1c8] sm:$0xff] %vm4162, %v4090
  %4221 = vst.msk [vmem:[%s3 + $0x1d0] sm:$0xff] %vm4162, %v4091
  %4222 = vst.msk [vmem:[%s3 + $0x1d8] sm:$0xff] %vm4162, %v4092
  %4223 = vst.msk [vmem:[%s3 + $0x1e0] sm:$0xff] %vm4162, %v4093
  %4224 = vst.msk [vmem:[%s3 + $0x1e8] sm:$0xff] %vm4162, %v4094
  %4225 = vst.msk [vmem:[%s3 + $0x1f0] sm:$0xff] %vm4162, %v4095
  %4226 = vst.msk [vmem:[%s3 + $0x1f8] sm:$0xff] %vm4162, %v4096
  %4227 = vst.msk [vmem:[%s3 + $0x200] sm:$0xff] %vm4162, %v4097
  %4228 = vst.msk [vmem:[%s3 + $0x208] sm:$0xff] %vm4162, %v4098
  %4229 = vst.msk [vmem:[%s3 + $0x210] sm:$0xff] %vm4162, %v4099
  %4230 = vst.msk [vmem:[%s3 + $0x218] sm:$0xff] %vm4162, %v4100
  %4231 = vst.msk [vmem:[%s3 + $0x220] sm:$0xff] %vm4162, %v4101
  %4232 = vst.msk [vmem:[%s3 + $0x228] sm:$0xff] %vm4162, %v4102
  %4233 = vst.msk [vmem:[%s3 + $0x230] sm:$0xff] %vm4162, %v4103
  %4234 = vst.msk [vmem:[%s3 + $0x238] sm:$0xff] %vm4162, %v4104
  %4235 = vst.msk [vmem:[%s3 + $0x240] sm:$0xff] %vm4162, %v4105
  %4236 = vst.msk [vmem:[%s3 + $0x248] sm:$0xff] %vm4162, %v4106
  %4237 = vst.msk [vmem:[%s3 + $0x250] sm:$0xff] %vm4162, %v4107
  %4238 = vst.msk [vmem:[%s3 + $0x258] sm:$0xff] %vm4162, %v4108
  %4239 = vst.msk [vmem:[%s3 + $0x260] sm:$0xff] %vm4162, %v4109
  %4240 = vst.msk [vmem:[%s3 + $0x268] sm:$0xff] %vm4162, %v4110
  %4241 = vst.msk [vmem:[%s3 + $0x270] sm:$0xff] %vm4162, %v4111
  %4242 = vst.msk [vmem:[%s3 + $0x278] sm:$0xff] %vm4162, %v4112
  %4243 = vst.msk [vmem:[%s3 + $0x280] sm:$0xff] %vm4162, %v4113
  %4244 = vst.msk [vmem:[%s3 + $0x288] sm:$0xff] %vm4162, %v4114
  %4245 = vst.msk [vmem:[%s3 + $0x290] sm:$0xff] %vm4162, %v4115
  %4246 = vst.msk [vmem:[%s3 + $0x298] sm:$0xff] %vm4162, %v4116
  %4247 = vst.msk [vmem:[%s3 + $0x2a0] sm:$0xff] %vm4162, %v4117
  %4248 = vst.msk [vmem:[%s3 + $0x2a8] sm:$0xff] %vm4162, %v4118
  %4249 = vst.msk [vmem:[%s3 + $0x2b0] sm:$0xff] %vm4162, %v4119
  %4250 = vst.msk [vmem:[%s3 + $0x2b8] sm:$0xff] %vm4162, %v4120
  %4251 = vst.msk [vmem:[%s3 + $0x2c0] sm:$0xff] %vm4162, %v4121
  %4252 = vst.msk [vmem:[%s3 + $0x2c8] sm:$0xff] %vm4162, %v4122
  %4253 = vst.msk [vmem:[%s3 + $0x2d0] sm:$0xff] %vm4162, %v4123
  %4254 = vst.msk [vmem:[%s3 + $0x2d8] sm:$0xff] %vm4162, %v4124
  %4255 = vst.msk [vmem:[%s3 + $0x2e0] sm:$0xff] %vm4162, %v4125
  %4256 = vst.msk [vmem:[%s3 + $0x2e8] sm:$0xff] %vm4162, %v4126
  %4257 = vst.msk [vmem:[%s3 + $0x2f0] sm:$0xff] %vm4162, %v4127
  %4258 = vst.msk [vmem:[%s3 + $0x2f8] sm:$0xff] %vm4162, %v4128
  %4259 = vst.msk [vmem:[%s3 + $0x300] sm:$0xff] %vm4162, %v4129
  %4260 = vst.msk [vmem:[%s3 + $0x308] sm:$0xff] %vm4162, %v4130
  %4261 = vst.msk [vmem:[%s3 + $0x310] sm:$0xff] %vm4162, %v4131
  %4262 = vst.msk [vmem:[%s3 + $0x318] sm:$0xff] %vm4162, %v4132
  %4263 = vst.msk [vmem:[%s3 + $0x320] sm:$0xff] %vm4162, %v4133
  %4264 = vst.msk [vmem:[%s3 + $0x328] sm:$0xff] %vm4162, %v4134
  %4265 = vst.msk [vmem:[%s3 + $0x330] sm:$0xff] %vm4162, %v4135
  %4266 = vst.msk [vmem:[%s3 + $0x338] sm:$0xff] %vm4162, %v4136
  %4267 = vst.msk [vmem:[%s3 + $0x340] sm:$0xff] %vm4162, %v4137
  %4268 = vst.msk [vmem:[%s3 + $0x348] sm:$0xff] %vm4162, %v4138
  %4269 = vst.msk [vmem:[%s3 + $0x350] sm:$0xff] %vm4162, %v4139
  %4270 = vst.msk [vmem:[%s3 + $0x358] sm:$0xff] %vm4162, %v4140
  %4271 = vst.msk [vmem:[%s3 + $0x360] sm:$0xff] %vm4162, %v4141
  %4272 = vst.msk [vmem:[%s3 + $0x368] sm:$0xff] %vm4162, %v4142
  %4273 = vst.msk [vmem:[%s3 + $0x370] sm:$0xff] %vm4162, %v4143
  %4274 = vst.msk [vmem:[%s3 + $0x378] sm:$0xff] %vm4162, %v4144
  %4275 = vst.msk [vmem:[%s3 + $0x380] sm:$0xff] %vm4162, %v4145
  %4276 = vst.msk [vmem:[%s3 + $0x388] sm:$0xff] %vm4162, %v4146
  %4277 = vst.msk [vmem:[%s3 + $0x390] sm:$0xff] %vm4162, %v4147
  %4278 = vst.msk [vmem:[%s3 + $0x398] sm:$0xff] %vm4162, %v4148
  %4279 = vst.msk [vmem:[%s3 + $0x3a0] sm:$0xff] %vm4162, %v4149
  %4280 = vst.msk [vmem:[%s3 + $0x3a8] sm:$0xff] %vm4162, %v4150
  %4281 = vst.msk [vmem:[%s3 + $0x3b0] sm:$0xff] %vm4162, %v4151
  %4282 = vst.msk [vmem:[%s3 + $0x3b8] sm:$0xff] %vm4162, %v4152
  %4283 = vst.msk [vmem:[%s3 + $0x3c0] sm:$0xff] %vm4162, %v4153
  %4284 = vst.msk [vmem:[%s3 + $0x3c8] sm:$0xff] %vm4162, %v4154
  %4285 = vst.msk [vmem:[%s3 + $0x3d0] sm:$0xff] %vm4162, %v4155
  %4286 = vst.msk [vmem:[%s3 + $0x3d8] sm:$0xff] %vm4162, %v4156
  %4287 = vst.msk [vmem:[%s3 + $0x3e0] sm:$0xff] %vm4162, %v4157
  %4288 = vst.msk [vmem:[%s3 + $0x3e8] sm:$0xff] %vm4162, %v4158
  %4289 = vst.msk [vmem:[%s3 + $0x3f0] sm:$0xff] %vm4162, %v4159
  %4290 = vst.msk [vmem:[%s3 + $0x3f8] sm:$0xff] %vm4162, %v4160
  %vm4291 = vcmask 8192
  %4292 = vst.msk [vmem:[%s3 + $0x400] sm:$0x1] %vm4291, %v4161
  // Predicated region
  $region14: #{model_forward.1} parent=0 // pred_check
    _
  $region15: #{model_forward.1} parent=0 // pred_check_branch
    %4294 = sbr.rel (0) target = $region17
  $region16: #{model_forward.1} parent=0 // pred_region
    _
  $region17: #{model_forward.1} parent=0 // pred_fallthru
    _
  // Predicated region
  $region18: #{model_forward.1} parent=0 // pred_check
    _
  $region19: #{model_forward.1} parent=0 // pred_check_branch
    %4296 = sbr.rel (0) target = $region21
  $region20: #{model_forward.1} parent=0 // pred_region
    _
  $region21: #{model_forward.1} parent=0 // pred_fallthru
    _

</llo_original>
